<compile_context>
chip_gen: v5e
topology: v5e:2x2
jax: 0.10.0
libtpu: 0.0.40
codegen_flags: <defaults>
</compile_context>

<pallas_src>
import jax
import jax.numpy as jnp
from jax.experimental import pallas as pl
from jax.experimental.pallas import tpu as pltpu

# Fixed layer sizes from the PyTorch module.
H1, H2, H3 = 1024, 512, 128
OUT_DIM = 25
OUT_PAD = 128          # lane-dense padded logits width (sliced back to 25 outside)


def _round_up(x, m):
    return (x + m - 1) // m * m


def _pick_tk(k):
    """Largest contraction tile that (a) divides K so x never needs a padding
    copy and (b) keeps the W1 + x double buffers inside v7x's 64 MiB VMEM."""
    if k <= 4096:
        return k if k % 256 == 0 else 1024          # tiny K: one tile if lane-aligned
    for tk in (4096, 3072, 2048, 1536, 1024):        # real model: 150528 = 49 * 3072
        if k % tk == 0:
            return tk
    return 1024                                      # fallback: K zero-padded to 1024s


def _pick_tm(b):
    """Batch tile: big enough to amortize W1 streaming (W1 is re-read once per
    batch tile), small enough to keep >= 2 'parallel' tiles when B > 128 so
    both v7x TensorCores pull HBM."""
    if b <= 128:
        return _round_up(max(b, 1), 16)              # 16: bf16 sublane packing
    if b <= 384:
        return 128
    if b <= 768:
        return 256
    return 512


def fcnn_kernel(x_ref, w1_ref, s1_ref, b1_ref, w2_ref, b2_ref,
                w3_ref, b3_ref, w4_ref, b4_ref, o_ref, acc_ref):
    """K-tiled layer-1 matmul into an f32 VMEM accumulator; layers 2-4 epilogue."""
    k = pl.program_id(1)

    @pl.when(k == 0)
    def _():
        acc_ref[...] = jnp.zeros_like(acc_ref)

    # Cast both streamed operands to bf16 in VMEM (hidden under the HBM DMA):
    #   x arrives f32 (no wrapper-side cast round trip through HBM),
    #   W1 arrives bf16 or int8 (int8 is dequantized here; its per-channel
    #   scale is applied once on the f32 accumulator in the epilogue).
    x = x_ref[...].astype(jnp.bfloat16)
    w1 = w1_ref[...]
    if w1.dtype != jnp.bfloat16:                     # static on dtype (trace time)
        w1 = w1.astype(jnp.float32)                  # int8 -> f32 (exact for |q|<=127)
    w1 = w1.astype(jnp.bfloat16)
    acc_ref[...] += jnp.dot(x, w1, preferred_element_type=jnp.float32)

    @pl.when(k == pl.num_programs(1) - 1)
    def _():
        h = jnp.maximum(acc_ref[...] * s1_ref[...] + b1_ref[...], 0.0)
        h = jnp.dot(h.astype(jnp.bfloat16), w2_ref[...],
                    preferred_element_type=jnp.float32)
        h = jnp.maximum(h + b2_ref[...], 0.0)
        h = jnp.dot(h.astype(jnp.bfloat16), w3_ref[...],
                    preferred_element_type=jnp.float32)
        h = jnp.maximum(h + b3_ref[...], 0.0)
        h = jnp.dot(h.astype(jnp.bfloat16), w4_ref[...],
                    preferred_element_type=jnp.float32)
        o_ref[...] = (h + b4_ref[...]).astype(o_ref.dtype)


def prepare_params(params, w1_format="bf16"):
    """One-time prep from the torch layout:
      * transpose (out,in) -> (in,out),
      * pad K to a multiple of the chosen K tile (zero rows: no-op in matmul),
      * streamed W1 stored bf16 or per-output-channel symmetric int8
        ("int8" halves the dominant HBM stream; dequantized in-kernel),
      * resident W2/W3/W4 stored bf16 (epilogue runs on the bf16 MXU path
        with f32 accumulation),
      * output layer padded 25 -> 128 lanes for lane-dense stores."""
    k_in = params["w1"].shape[1]
    k_pad = _round_up(k_in, _pick_tk(k_in))

    w1_t = params["w1"].T.astype(jnp.float32)                      # (K, 1024)
    if w1_format == "int8":
        absmax = jnp.max(jnp.abs(w1_t), axis=0, keepdims=True)     # (1, 1024)
        s1 = jnp.where(absmax > 0, absmax / 127.0, 1.0).astype(jnp.float32)
        w1 = jnp.clip(jnp.round(w1_t / s1), -127.0, 127.0).astype(jnp.int8)
    elif w1_format == "bf16":
        s1 = jnp.ones((1, H1), jnp.float32)
        w1 = w1_t.astype(jnp.bfloat16)
    else:
        raise ValueError(f"unsupported w1_format: {w1_format}")
    if k_pad != k_in:
        w1 = jnp.pad(w1, ((0, k_pad - k_in), (0, 0)))              # zero rows: no-op

    w2 = params["w2"].T.astype(jnp.bfloat16)                       # (1024, 512) resident
    w3 = params["w3"].T.astype(jnp.bfloat16)                       # (512, 128)  resident
    w4 = jnp.pad(params["w4"].T,
                 ((0, 0), (0, OUT_PAD - OUT_DIM))).astype(jnp.bfloat16)  # (128, 128)

    b1 = params["b1"].astype(jnp.float32)[None, :]
    b2 = params["b2"].astype(jnp.float32)[None, :]
    b3 = params["b3"].astype(jnp.float32)[None, :]
    b4 = jnp.pad(params["b4"].astype(jnp.float32),
                 (0, OUT_PAD - OUT_DIM))[None, :]

    return dict(w1=w1, s1=s1, b1=b1, w2=w2, b2=b2, w3=w3, b3=b3, w4=w4, b4=b4)


@jax.jit
def fcnn_forward(x, prep):
    """x: (B, C, H, W) float32.  prep: output of prepare_params()."""
    B = x.shape[0]
    x2d = x.reshape(B, -1)                 # nn.Flatten (row-major == torch); stays f32
    K = x2d.shape[1]

    TK = _pick_tk(K)
    K_pad = _round_up(K, TK)
    assert prep["w1"].shape[0] == K_pad, "prepare_params() was built for a different K"

    TM = _pick_tm(B)
    B_pad = _round_up(B, TM)

    if B_pad != B or K_pad != K:
        # Only copies when the shapes do not tile exactly (never for the real
        # 224*224*3 model with a batch that is a multiple of TM).
        x2d = jnp.pad(x2d, ((0, B_pad - B), (0, K_pad - K)))

    m_tiles, k_tiles = B_pad // TM, K_pad // TK
    const = lambda shape: pl.BlockSpec(shape, lambda i, k: (0, 0))

    # Advisory cost: W1 is re-streamed once per batch tile.
    w1_bytes = prep["w1"].size * prep["w1"].dtype.itemsize
    resident_bytes = sum(prep[n].size * prep[n].dtype.itemsize
                         for n in ("s1", "b1", "w2", "b2", "w3", "b3", "w4", "b4"))
    bytes_accessed = (x2d.size * x2d.dtype.itemsize
                      + w1_bytes * m_tiles
                      + resident_bytes
                      + B_pad * OUT_PAD * 4)
    flops = 2 * B_pad * (K_pad * H1 + H1 * H2 + H2 * H3 + H3 * OUT_PAD)

    out = pl.pallas_call(
        fcnn_kernel,
        out_shape=jax.ShapeDtypeStruct((B_pad, OUT_PAD), jnp.float32),
        grid_spec=pltpu.PrefetchScalarGridSpec(
            num_scalar_prefetch=0,
            grid=(m_tiles, k_tiles),
            in_specs=[
                pl.BlockSpec((TM, TK), lambda i, k: (i, k)),   # x  (f32, streamed)
                pl.BlockSpec((TK, H1), lambda i, k: (k, 0)),   # W1 (bf16/int8, streamed)
                const((1, H1)),                                # W1 per-channel scale
                const((1, H1)),                                # b1       (resident)
                const((H1, H2)), const((1, H2)),               # W2 / b2  (resident)
                const((H2, H3)), const((1, H3)),               # W3 / b3  (resident)
                const((H3, OUT_PAD)), const((1, OUT_PAD)),     # W4 / b4  (lane-padded)
            ],
            out_specs=pl.BlockSpec((TM, OUT_PAD), lambda i, k: (i, 0)),
            scratch_shapes=[pltpu.VMEM((TM, H1), jnp.float32)],
        ),
        compiler_params=pltpu.CompilerParams(
            dimension_semantics=("parallel", "arbitrary"),
            vmem_limit_bytes=48 * 1024 * 1024,   # <= 64 MiB (v7x) and 128 MiB (v5e/v6e)
        ),
        cost_estimate=pl.CostEstimate(
            flops=flops, transcendentals=0, bytes_accessed=bytes_accessed),
    )(x2d, prep["w1"], prep["s1"], prep["b1"], prep["w2"], prep["b2"],
      prep["w3"], prep["b3"], prep["w4"], prep["b4"])

    return out[:B, :OUT_DIM]


def init_params(key, in_dim, dims=(H1, H2, H3, OUT_DIM)):
    """Deterministic nn.Linear-style init (uniform +/- 1/sqrt(fan_in)), torch layout."""
    params = {}
    fan_in = in_dim
    for idx, out_dim in enumerate(dims, start=1):
        key, kw, kb = jax.random.split(key, 3)
        bound = 1.0 / jnp.sqrt(fan_in)
        params[f"w{idx}"] = jax.random.uniform(
            kw, (out_dim, fan_in), jnp.float32, -bound, bound)
        params[f"b{idx}"] = jax.random.uniform(
            kb, (out_dim,), jnp.float32, -bound, bound)
        fan_in = out_dim
    return params


def fcnn_reference(x, prep):
    """Pure-JAX reference using the same dtypes / quantization as the kernel."""
    b = x.shape[0]
    xb = x.reshape(b, -1).astype(jnp.bfloat16)
    k = xb.shape[1]
    w1 = prep["w1"][:k].astype(jnp.bfloat16)        # int8 -> bf16 is exact (|q| <= 127)
    h = jnp.dot(xb, w1, preferred_element_type=jnp.float32) * prep["s1"] + prep["b1"]
    h = jnp.maximum(h, 0.0)
    h = jnp.dot(h.astype(jnp.bfloat16), prep["w2"], preferred_element_type=jnp.float32)
    h = jnp.maximum(h + prep["b2"], 0.0)
    h = jnp.dot(h.astype(jnp.bfloat16), prep["w3"], preferred_element_type=jnp.float32)
    h = jnp.maximum(h + prep["b3"], 0.0)
    h = jnp.dot(h.astype(jnp.bfloat16), prep["w4"], preferred_element_type=jnp.float32)
    return (h + prep["b4"])[:, :OUT_DIM]


def fcnn_reference_f32(x, params):
    """Torch-semantics full-f32 reference straight from torch-layout params."""
    h = x.reshape(x.shape[0], -1)
    h = jnp.maximum(h @ params["w1"].T + params["b1"], 0.0)
    h = jnp.maximum(h @ params["w2"].T + params["b2"], 0.0)
    h = jnp.maximum(h @ params["w3"].T + params["b3"], 0.0)
    return h @ params["w4"].T + params["b4"]


if __name__ == "__main__":
    # Small test shapes: the real module uses 224x224x3 (K = 150528 = 49*3072);
    # here 16x16x3 (K = 768) keeps the self-test light. Hidden sizes 1024/512/128/25 match.
    B, C, H, W = 2, 3, 16, 16
    key = jax.random.PRNGKey(0)
    key, kx = jax.random.split(key)
    x = jax.random.normal(kx, (B, C, H, W), jnp.float32)

    params = init_params(key, C * H * W)
    ref32 = fcnn_reference_f32(x, params)           # exact torch-semantics f32 logits

    # Exercise both streamed-W1 formats: bf16 (default) and per-channel int8.
    for fmt in ("bf16", "int8"):
        prep = prepare_params(params, w1_format=fmt)   # one-time prep
        out = jax.block_until_ready(fcnn_forward(x, prep))
        assert out.shape == (B, OUT_DIM), out.shape

        ref = fcnn_reference(x, prep)                  # same-dtype reference
        err = float(jnp.max(jnp.abs(out - ref)))
        assert jnp.allclose(out, ref, atol=2e-2, rtol=2e-2), (fmt, err)

        err32 = float(jnp.max(jnp.abs(out - ref32)))   # loose check vs f32 semantics
        assert jnp.allclose(out, ref32, atol=1e-1, rtol=1e-1), (fmt, err32)

    print("KERNEL_OK")
</pallas_src>

<mosaic_0001>
module attributes {stable_mosaic.version = 11 : i64} {
  func.func @fcnn_kernel(%arg0: i32, %arg1: i32, %arg2: memref<16x768xf32, #tpu.memory_space<vmem>>, %arg3: memref<768x1024xbf16, #tpu.memory_space<vmem>>, %arg4: memref<1x1024xf32, #tpu.memory_space<vmem>>, %arg5: memref<1x1024xf32, #tpu.memory_space<vmem>>, %arg6: memref<1024x512xbf16, #tpu.memory_space<vmem>>, %arg7: memref<1x512xf32, #tpu.memory_space<vmem>>, %arg8: memref<512x128xbf16, #tpu.memory_space<vmem>>, %arg9: memref<1x128xf32, #tpu.memory_space<vmem>>, %arg10: memref<128x128xbf16, #tpu.memory_space<vmem>>, %arg11: memref<1x128xf32, #tpu.memory_space<vmem>>, %arg12: memref<16x128xf32, #tpu.memory_space<vmem>>, %arg13: memref<16x1024xf32, #tpu.memory_space<vmem>>) attributes {dimension_semantics = [#tpu.dimension_semantics<parallel>, #tpu.dimension_semantics<arbitrary>], iteration_bounds = array<i64: 1, 1>, scalar_prefetch = 0 : i64, scratch_operands = 1 : i64, tpu.core_type = #tpu.core_type<tc>, window_params = [{transform_indices = @transform_0, window_bounds = array<i64: 16, 768>}, {transform_indices = @transform_1, window_bounds = array<i64: 768, 1024>}, {pipeline_mode = #tpu.pipeline_mode<synchronous>, transform_indices = @transform_2, window_bounds = array<i64: 1, 1024>}, {pipeline_mode = #tpu.pipeline_mode<synchronous>, transform_indices = @transform_3, window_bounds = array<i64: 1, 1024>}, {pipeline_mode = #tpu.pipeline_mode<synchronous>, transform_indices = @transform_4, window_bounds = array<i64: 1024, 512>}, {pipeline_mode = #tpu.pipeline_mode<synchronous>, transform_indices = @transform_5, window_bounds = array<i64: 1, 512>}, {pipeline_mode = #tpu.pipeline_mode<synchronous>, transform_indices = @transform_6, window_bounds = array<i64: 512, 128>}, {pipeline_mode = #tpu.pipeline_mode<synchronous>, transform_indices = @transform_7, window_bounds = array<i64: 1, 128>}, {pipeline_mode = #tpu.pipeline_mode<synchronous>, transform_indices = @transform_8, window_bounds = array<i64: 128, 128>}, {pipeline_mode = #tpu.pipeline_mode<synchronous>, transform_indices = @transform_9, window_bounds = array<i64: 1, 128>}, {transform_indices = @transform_10, window_bounds = array<i64: 16, 128>}]} {
    %c0_i32 = arith.constant 0 : i32
    %0 = arith.cmpi eq, %arg1, %c0_i32 : i32
    %1 = arith.extui %0 : i1 to i32
    %c0_i32_0 = arith.constant 0 : i32
    %2 = arith.cmpi ne, %1, %c0_i32_0 : i32
    scf.if %2 {
      %cst_10 = arith.constant 0.000000e+00 : f32
      %13 = vector.broadcast %cst_10 : f32 to vector<16x1024xf32>
      %c0_11 = arith.constant 0 : index
      %c0_12 = arith.constant 0 : index
      %14 = vector.load %arg13[%c0_11, %c0_12] : memref<16x1024xf32, #tpu.memory_space<vmem>>, vector<16x1024xf32>
      tpu.vector_store %arg13[%c0_11, %c0_12], %13 {strides = array<i32>} : memref<16x1024xf32, #tpu.memory_space<vmem>>, vector<16x1024xf32>,
    } else {
    }
    %c0 = arith.constant 0 : index
    %c0_1 = arith.constant 0 : index
    %3 = vector.load %arg2[%c0, %c0_1] : memref<16x768xf32, #tpu.memory_space<vmem>>, vector<16x768xf32>
    %4 = arith.truncf %3 : vector<16x768xf32> to vector<16x768xbf16>
    %c0_2 = arith.constant 0 : index
    %c0_3 = arith.constant 0 : index
    %5 = vector.load %arg3[%c0_2, %c0_3] : memref<768x1024xbf16, #tpu.memory_space<vmem>>, vector<768x1024xbf16>
    %c0_4 = arith.constant 0 : index
    %c0_5 = arith.constant 0 : index
    %6 = vector.load %arg13[%c0_4, %c0_5] : memref<16x1024xf32, #tpu.memory_space<vmem>>, vector<16x1024xf32>
    %cst = arith.constant dense<0.000000e+00> : vector<16x1024xf32>
    %7 = tpu.matmul %4, %5, %cst {dimension_numbers = #tpu.dot_dimension_numbers<[1], [0], [0], [1], [0, 0, 1, 1], [], []>} : vector<16x768xbf16>, vector<768x1024xbf16>, vector<16x1024xf32> -> vector<16x1024xf32>
    %8 = arith.addf %6, %7 : vector<16x1024xf32>
    %c0_6 = arith.constant 0 : index
    %c0_7 = arith.constant 0 : index
    %9 = vector.load %arg13[%c0_6, %c0_7] : memref<16x1024xf32, #tpu.memory_space<vmem>>, vector<16x1024xf32>
    tpu.vector_store %arg13[%c0_6, %c0_7], %8 {strides = array<i32>} : memref<16x1024xf32, #tpu.memory_space<vmem>>, vector<16x1024xf32>,
    %c0_i32_8 = arith.constant 0 : i32
    %10 = arith.cmpi eq, %arg1, %c0_i32_8 : i32
    %11 = arith.extui %10 : i1 to i32
    %c0_i32_9 = arith.constant 0 : i32
    %12 = arith.cmpi ne, %11, %c0_i32_9 : i32
    scf.if %12 {
      %c0_10 = arith.constant 0 : index
      %c0_11 = arith.constant 0 : index
      %13 = vector.load %arg13[%c0_10, %c0_11] : memref<16x1024xf32, #tpu.memory_space<vmem>>, vector<16x1024xf32>
      %c0_12 = arith.constant 0 : index
      %c0_13 = arith.constant 0 : index
      %14 = vector.load %arg4[%c0_12, %c0_13] : memref<1x1024xf32, #tpu.memory_space<vmem>>, vector<1x1024xf32>
      %15 = vector.broadcast %14 : vector<1x1024xf32> to vector<16x1024xf32>
      %16 = arith.mulf %13, %15 : vector<16x1024xf32>
      %c0_14 = arith.constant 0 : index
      %c0_15 = arith.constant 0 : index
      %17 = vector.load %arg5[%c0_14, %c0_15] : memref<1x1024xf32, #tpu.memory_space<vmem>>, vector<1x1024xf32>
      %18 = vector.broadcast %17 : vector<1x1024xf32> to vector<16x1024xf32>
      %19 = arith.addf %16, %18 : vector<16x1024xf32>
      %cst_16 = arith.constant 0.000000e+00 : f32
      %20 = vector.broadcast %cst_16 : f32 to vector<16x1024xf32>
      %21 = arith.maximumf %19, %20 : vector<16x1024xf32>
      %22 = arith.truncf %21 : vector<16x1024xf32> to vector<16x1024xbf16>
      %c0_17 = arith.constant 0 : index
      %c0_18 = arith.constant 0 : index
      %23 = vector.load %arg6[%c0_17, %c0_18] : memref<1024x512xbf16, #tpu.memory_space<vmem>>, vector<1024x512xbf16>
      %cst_19 = arith.constant dense<0.000000e+00> : vector<16x512xf32>
      %24 = tpu.matmul %22, %23, %cst_19 {dimension_numbers = #tpu.dot_dimension_numbers<[1], [0], [0], [1], [0, 0, 1, 1], [], []>} : vector<16x1024xbf16>, vector<1024x512xbf16>, vector<16x512xf32> -> vector<16x512xf32>
      %c0_20 = arith.constant 0 : index
      %c0_21 = arith.constant 0 : index
      %25 = vector.load %arg7[%c0_20, %c0_21] : memref<1x512xf32, #tpu.memory_space<vmem>>, vector<1x512xf32>
      %26 = vector.broadcast %25 : vector<1x512xf32> to vector<16x512xf32>
      %27 = arith.addf %24, %26 : vector<16x512xf32>
      %cst_22 = arith.constant 0.000000e+00 : f32
      %28 = vector.broadcast %cst_22 : f32 to vector<16x512xf32>
      %29 = arith.maximumf %27, %28 : vector<16x512xf32>
      %30 = arith.truncf %29 : vector<16x512xf32> to vector<16x512xbf16>
      %c0_23 = arith.constant 0 : index
      %c0_24 = arith.constant 0 : index
      %31 = vector.load %arg8[%c0_23, %c0_24] : memref<512x128xbf16, #tpu.memory_space<vmem>>, vector<512x128xbf16>
      %cst_25 = arith.constant dense<0.000000e+00> : vector<16x128xf32>
      %32 = tpu.matmul %30, %31, %cst_25 {dimension_numbers = #tpu.dot_dimension_numbers<[1], [0], [0], [1], [0, 0, 1, 1], [], []>} : vector<16x512xbf16>, vector<512x128xbf16>, vector<16x128xf32> -> vector<16x128xf32>
      %c0_26 = arith.constant 0 : index
      %c0_27 = arith.constant 0 : index
      %33 = vector.load %arg9[%c0_26, %c0_27] : memref<1x128xf32, #tpu.memory_space<vmem>>, vector<1x128xf32>
      %34 = vector.broadcast %33 : vector<1x128xf32> to vector<16x128xf32>
      %35 = arith.addf %32, %34 : vector<16x128xf32>
      %cst_28 = arith.constant 0.000000e+00 : f32
      %36 = vector.broadcast %cst_28 : f32 to vector<16x128xf32>
      %37 = arith.maximumf %35, %36 : vector<16x128xf32>
      %38 = arith.truncf %37 : vector<16x128xf32> to vector<16x128xbf16>
      %c0_29 = arith.constant 0 : index
      %c0_30 = arith.constant 0 : index
      %39 = vector.load %arg10[%c0_29, %c0_30] : memref<128x128xbf16, #tpu.memory_space<vmem>>, vector<128x128xbf16>
      %cst_31 = arith.constant dense<0.000000e+00> : vector<16x128xf32>
      %40 = tpu.matmul %38, %39, %cst_31 {dimension_numbers = #tpu.dot_dimension_numbers<[1], [0], [0], [1], [0, 0, 1, 1], [], []>} : vector<16x128xbf16>, vector<128x128xbf16>, vector<16x128xf32> -> vector<16x128xf32>
      %c0_32 = arith.constant 0 : index
      %c0_33 = arith.constant 0 : index
      %41 = vector.load %arg11[%c0_32, %c0_33] : memref<1x128xf32, #tpu.memory_space<vmem>>, vector<1x128xf32>
      %42 = vector.broadcast %41 : vector<1x128xf32> to vector<16x128xf32>
      %43 = arith.addf %40, %42 : vector<16x128xf32>
      %c0_34 = arith.constant 0 : index
      %c0_35 = arith.constant 0 : index
      %44 = vector.load %arg12[%c0_34, %c0_35] : memref<16x128xf32, #tpu.memory_space<vmem>>, vector<16x128xf32>
      tpu.vector_store %arg12[%c0_34, %c0_35], %43 {strides = array<i32>} : memref<16x128xf32, #tpu.memory_space<vmem>>, vector<16x128xf32>,
    } else {
    }
    return
  }
  func.func @transform_0(%arg0: i32, %arg1: i32) -> (i32, i32) {
    %c0_i32 = arith.constant 0 : i32
    return %arg0, %arg1 : i32, i32
  }
  func.func @transform_1(%arg0: i32, %arg1: i32) -> (i32, i32) {
    %c0_i32 = arith.constant 0 : i32
    %c0_i32_0 = arith.constant 0 : i32
    return %arg1, %c0_i32 : i32, i32
  }
  func.func @transform_2(%arg0: i32, %arg1: i32) -> (i32, i32) {
    %c0_i32 = arith.constant 0 : i32
    %c0_i32_0 = arith.constant 0 : i32
    %c0_i32_1 = arith.constant 0 : i32
    return %c0_i32, %c0_i32_0 : i32, i32
  }
  func.func @transform_3(%arg0: i32, %arg1: i32) -> (i32, i32) {
    %c0_i32 = arith.constant 0 : i32
    %c0_i32_0 = arith.constant 0 : i32
    %c0_i32_1 = arith.constant 0 : i32
    return %c0_i32, %c0_i32_0 : i32, i32
  }
  func.func @transform_4(%arg0: i32, %arg1: i32) -> (i32, i32) {
    %c0_i32 = arith.constant 0 : i32
    %c0_i32_0 = arith.constant 0 : i32
    %c0_i32_1 = arith.constant 0 : i32
    return %c0_i32, %c0_i32_0 : i32, i32
  }
  func.func @transform_5(%arg0: i32, %arg1: i32) -> (i32, i32) {
    %c0_i32 = arith.constant 0 : i32
    %c0_i32_0 = arith.constant 0 : i32
    %c0_i32_1 = arith.constant 0 : i32
    return %c0_i32, %c0_i32_0 : i32, i32
  }
  func.func @transform_6(%arg0: i32, %arg1: i32) -> (i32, i32) {
    %c0_i32 = arith.constant 0 : i32
    %c0_i32_0 = arith.constant 0 : i32
    %c0_i32_1 = arith.constant 0 : i32
    return %c0_i32, %c0_i32_0 : i32, i32
  }
  func.func @transform_7(%arg0: i32, %arg1: i32) -> (i32, i32) {
    %c0_i32 = arith.constant 0 : i32
    %c0_i32_0 = arith.constant 0 : i32
    %c0_i32_1 = arith.constant 0 : i32
    return %c0_i32, %c0_i32_0 : i32, i32
  }
  func.func @transform_8(%arg0: i32, %arg1: i32) -> (i32, i32) {
    %c0_i32 = arith.constant 0 : i32
    %c0_i32_0 = arith.constant 0 : i32
    %c0_i32_1 = arith.constant 0 : i32
    return %c0_i32, %c0_i32_0 : i32, i32
  }
  func.func @transform_9(%arg0: i32, %arg1: i32) -> (i32, i32) {
    %c0_i32 = arith.constant 0 : i32
    %c0_i32_0 = arith.constant 0 : i32
    %c0_i32_1 = arith.constant 0 : i32
    return %c0_i32, %c0_i32_0 : i32, i32
  }
  func.func @transform_10(%arg0: i32, %arg1: i32) -> (i32, i32) {
    %c0_i32 = arith.constant 0 : i32
    %c0_i32_0 = arith.constant 0 : i32
    return %arg0, %c0_i32 : i32, i32
  }
}

</mosaic_0001>

<llo_original>
// kernel: fcnn_forward.1
$region0: #{fcnn_forward.1}
  #allocation0 [shape = 'u32[]', space=smem, size = 0x4, offset = 0x4, fixed_abs, tag = 'smem constant byte address 0x4 - core index']
  #allocation1 [shape = 'u32[72,128]{1,0:T(1,128)}', space=vmem, size = 0x9000, scoped, tag = 'internal scratch']
  #allocation2 [shape = 'f32[16,1024]{1,0:T(8,128)}', space=vmem, size = 0x10000, scoped, tag = 'scratch operand']
  %s0 = inlined_call_operand.vmem [shape: f32[16,768], index: 0, kind: input, shape index: {}]
  %s1 = inlined_call_operand.hbm [shape: bf16[768,1024], index: 1, kind: input, shape index: {}]
  %s2 = inlined_call_operand.hbm [shape: f32[1,1024], index: 2, kind: input, shape index: {}]
  %s3 = inlined_call_operand.hbm [shape: f32[1,1024], index: 3, kind: input, shape index: {}]
  %s4 = inlined_call_operand.hbm [shape: bf16[1024,512], index: 4, kind: input, shape index: {}]
  %s5 = inlined_call_operand.hbm [shape: f32[1,512], index: 5, kind: input, shape index: {}]
  %s6 = inlined_call_operand.hbm [shape: bf16[512,128], index: 6, kind: input, shape index: {}]
  %s7 = inlined_call_operand.hbm [shape: f32[1,128], index: 7, kind: input, shape index: {}]
  %s8 = inlined_call_operand.hbm [shape: bf16[128,128], index: 8, kind: input, shape index: {}]
  %s9 = inlined_call_operand.hbm [shape: f32[1,128], index: 9, kind: input, shape index: {}]
  %s10 = inlined_call_operand.vmem [shape: f32[16,128], index: 10, kind: output, shape index: {}]
  %s11 = sld [smem:[#allocation0]]
  $region94: #{fcnn_forward.1} parent=0
    _
  %s13 = ssub.s32 1, %s11
  %s14 = scalar_select 0, %s13, %s11
  $region1: #{fcnn_forward.1} parent=0
    #allocation3 [shape = 'u8[1572864]{0}', space=vmem, size = 0x180000, scoped, tag = 'input window, operand 1, single buffered']
    #allocation4 [shape = 's32[1]{0}', space=sflag, size = 0x4, scoped, tag = 'scoped memory for fcnn_forward.1']
    #allocation5 [shape = 'u8[4096]{0}', space=vmem, size = 0x1000, scoped, tag = 'input window, operand 2, single buffered']
    #allocation6 [shape = 's32[1]{0}', space=sflag, size = 0x4, scoped, tag = 'scoped memory for fcnn_forward.1']
    #allocation7 [shape = 'u8[4096]{0}', space=vmem, size = 0x1000, scoped, tag = 'input window, operand 3, single buffered']
    #allocation8 [shape = 'u8[1048576]{0}', space=vmem, size = 0x100000, scoped, tag = 'input window, operand 4, single buffered']
    #allocation9 [shape = 's32[1]{0}', space=sflag, size = 0x4, scoped, tag = 'scoped memory for fcnn_forward.1']
    #allocation10 [shape = 'u8[2048]{0}', space=vmem, size = 0x800, scoped, tag = 'input window, operand 5, single buffered']
    #allocation11 [shape = 'u8[131072]{0}', space=vmem, size = 0x20000, scoped, tag = 'input window, operand 6, single buffered']
    #allocation12 [shape = 's32[1]{0}', space=sflag, size = 0x4, scoped, tag = 'scoped memory for fcnn_forward.1']
    #allocation13 [shape = 'u8[512]{0}', space=vmem, size = 0x400, scoped, tag = 'input window, operand 7, single buffered']
    #allocation14 [shape = 'u8[32768]{0}', space=vmem, size = 0x8000, scoped, tag = 'input window, operand 8, single buffered']
    #allocation15 [shape = 's32[1]{0}', space=sflag, size = 0x4, scoped, tag = 'scoped memory for fcnn_forward.1']
    #allocation16 [shape = 'u8[512]{0}', space=vmem, size = 0x400, scoped, tag = 'input window, operand 9, single buffered']
    %15 = vsyncpa [#allocation4], 0
    %16 = vsyncpa [#allocation6], 0
    %17 = vsyncpa [#allocation9], 0
    %18 = vsyncpa [#allocation12], 0
    %19 = vsyncpa [#allocation15], 0
    // Predicated region
    $region2: #{fcnn_forward.1} parent=1 // pred_check
      _
    $region3: #{fcnn_forward.1} parent=1 // pred_check_branch
      %21 = sbr.rel (0) target = $region5
    $region4: #{fcnn_forward.1} parent=1 // pred_region
      _
    $region5: #{fcnn_forward.1} parent=1 // pred_fallthru
      _
    // Predicated region
    $region6: #{fcnn_forward.1} parent=1 // pred_check
      _
    $region7: #{fcnn_forward.1} parent=1 // pred_check_branch
      %23 = sbr.rel (0) target = $region9
    $region8: #{fcnn_forward.1} parent=1 // pred_region
      %25 = vsyncadd [#allocation4], 0
      %s26 = sshll.u32 %s1, 4
      %s27 = int_to_ptr.hbm [resolvable:$true] %s26
      %s28 = sshll.u32 [#allocation3], 4
      %s29 = int_to_ptr.vmem [resolvable:$true] %s28
      %34 = dma.hbm_to_vmem [thread:$0]  %s27, 49152, %s29, [#allocation4], 512, 512, 32
    $region9: #{fcnn_forward.1} parent=1 // pred_fallthru
      _
    // Predicated region
    $region10: #{fcnn_forward.1} parent=1 // pred_check
      _
    $region11: #{fcnn_forward.1} parent=1 // pred_check_branch
      %36 = sbr.rel (0) target = $region13
    $region12: #{fcnn_forward.1} parent=1 // pred_region
      %38 = vsyncadd [#allocation6], 0
      %s40 = sshll.u32 %s2, 4
      %s41 = int_to_ptr.hbm [resolvable:$true] %s40
      %s42 = sshll.u32 [#allocation5], 4
      %s43 = int_to_ptr.vmem [resolvable:$true] %s42
      %45 = dma.hbm_to_vmem [thread:$0]  %s41, 128, %s43, [#allocation6]
    $region13: #{fcnn_forward.1} parent=1 // pred_fallthru
      _
    // Predicated region
    $region14: #{fcnn_forward.1} parent=1 // pred_check
      _
    $region15: #{fcnn_forward.1} parent=1 // pred_check_branch
      %47 = sbr.rel (0) target = $region17
    $region16: #{fcnn_forward.1} parent=1 // pred_region
      %49 = vsyncadd [#allocation6], 0
      %s51 = sshll.u32 %s3, 4
      %s52 = int_to_ptr.hbm [resolvable:$true] %s51
      %s53 = sshll.u32 [#allocation7], 4
      %s54 = int_to_ptr.vmem [resolvable:$true] %s53
      %56 = dma.hbm_to_vmem [thread:$0]  %s52, 128, %s54, [#allocation6]
    $region17: #{fcnn_forward.1} parent=1 // pred_fallthru
      _
    // Predicated region
    $region18: #{fcnn_forward.1} parent=1 // pred_check
      _
    $region19: #{fcnn_forward.1} parent=1 // pred_check_branch
      %58 = sbr.rel (0) target = $region21
    $region20: #{fcnn_forward.1} parent=1 // pred_region
      %60 = vsyncadd [#allocation9], 0
      %s61 = sshll.u32 %s4, 4
      %s62 = int_to_ptr.hbm [resolvable:$true] %s61
      %s63 = sshll.u32 [#allocation8], 4
      %s64 = int_to_ptr.vmem [resolvable:$true] %s63
      %69 = dma.hbm_to_vmem [thread:$0]  %s62, 32768, %s64, [#allocation9], 256, 256, 16
    $region21: #{fcnn_forward.1} parent=1 // pred_fallthru
      _
    // Predicated region
    $region22: #{fcnn_forward.1} parent=1 // pred_check
      _
    $region23: #{fcnn_forward.1} parent=1 // pred_check_branch
      %71 = sbr.rel (0) target = $region25
    $region24: #{fcnn_forward.1} parent=1 // pred_region
      %73 = vsyncadd [#allocation9], 0
      %s75 = sshll.u32 %s5, 4
      %s76 = int_to_ptr.hbm [resolvable:$true] %s75
      %s77 = sshll.u32 [#allocation10], 4
      %s78 = int_to_ptr.vmem [resolvable:$true] %s77
      %80 = dma.hbm_to_vmem [thread:$0]  %s76, 64, %s78, [#allocation9]
    $region25: #{fcnn_forward.1} parent=1 // pred_fallthru
      _
    // Predicated region
    $region26: #{fcnn_forward.1} parent=1 // pred_check
      _
    $region27: #{fcnn_forward.1} parent=1 // pred_check_branch
      %82 = sbr.rel (0) target = $region29
    $region28: #{fcnn_forward.1} parent=1 // pred_region
      %84 = vsyncadd [#allocation12], 0
      %s85 = sshll.u32 %s6, 4
      %s86 = int_to_ptr.hbm [resolvable:$true] %s85
      %s87 = sshll.u32 [#allocation11], 4
      %s88 = int_to_ptr.vmem [resolvable:$true] %s87
      %93 = dma.hbm_to_vmem [thread:$0]  %s86, 4096, %s88, [#allocation12], 64, 64, 4
    $region29: #{fcnn_forward.1} parent=1 // pred_fallthru
      _
    // Predicated region
    $region30: #{fcnn_forward.1} parent=1 // pred_check
      _
    $region31: #{fcnn_forward.1} parent=1 // pred_check_branch
      %95 = sbr.rel (0) target = $region33
    $region32: #{fcnn_forward.1} parent=1 // pred_region
      %97 = vsyncadd [#allocation12], 0
      %s99 = sshll.u32 %s7, 4
      %s100 = int_to_ptr.hbm [resolvable:$true] %s99
      %s101 = sshll.u32 [#allocation13], 4
      %s102 = int_to_ptr.vmem [resolvable:$true] %s101
      %104 = dma.hbm_to_vmem [thread:$0]  %s100, 16, %s102, [#allocation12]
    $region33: #{fcnn_forward.1} parent=1 // pred_fallthru
      _
    // Predicated region
    $region34: #{fcnn_forward.1} parent=1 // pred_check
      _
    $region35: #{fcnn_forward.1} parent=1 // pred_check_branch
      %106 = sbr.rel (0) target = $region37
    $region36: #{fcnn_forward.1} parent=1 // pred_region
      %108 = vsyncadd [#allocation15], 0
      %s109 = sshll.u32 %s8, 4
      %s110 = int_to_ptr.hbm [resolvable:$true] %s109
      %s111 = sshll.u32 [#allocation14], 4
      %s112 = int_to_ptr.vmem [resolvable:$true] %s111
      %117 = dma.hbm_to_vmem [thread:$0]  %s110, 1024, %s112, [#allocation15], 64, 64, 4
    $region37: #{fcnn_forward.1} parent=1 // pred_fallthru
      _
    // Predicated region
    $region38: #{fcnn_forward.1} parent=1 // pred_check
      _
    $region39: #{fcnn_forward.1} parent=1 // pred_check_branch
      %119 = sbr.rel (0) target = $region41
    $region40: #{fcnn_forward.1} parent=1 // pred_region
      %121 = vsyncadd [#allocation15], 0
      %s123 = sshll.u32 %s9, 4
      %s124 = int_to_ptr.hbm [resolvable:$true] %s123
      %s125 = sshll.u32 [#allocation16], 4
      %s126 = int_to_ptr.vmem [resolvable:$true] %s125
      %128 = dma.hbm_to_vmem [thread:$0]  %s124, 16, %s126, [#allocation15]
    $region41: #{fcnn_forward.1} parent=1 // pred_fallthru
      _
    // Predicated region
    $region42: #{fcnn_forward.1} parent=1 // pred_check
      _
    $region43: #{fcnn_forward.1} parent=1 // pred_check_branch
      %130 = sbr.rel (0) target = $region45
    $region44: #{fcnn_forward.1} parent=1 // pred_region
      %132 = dma.done [#allocation4], 49152
    $region45: #{fcnn_forward.1} parent=1 // pred_fallthru
      _
    // Predicated region
    $region46: #{fcnn_forward.1} parent=1 // pred_check
      _
    $region47: #{fcnn_forward.1} parent=1 // pred_check_branch
      %134 = sbr.rel (0) target = $region49
    $region48: #{fcnn_forward.1} parent=1 // pred_region
      %136 = dma.done [#allocation6], 128
    $region49: #{fcnn_forward.1} parent=1 // pred_fallthru
      _
    // Predicated region
    $region50: #{fcnn_forward.1} parent=1 // pred_check
      _
    $region51: #{fcnn_forward.1} parent=1 // pred_check_branch
      %138 = sbr.rel (0) target = $region53
    $region52: #{fcnn_forward.1} parent=1 // pred_region
      %140 = dma.done [#allocation6], 128
    $region53: #{fcnn_forward.1} parent=1 // pred_fallthru
      _
    // Predicated region
    $region54: #{fcnn_forward.1} parent=1 // pred_check
      _
    $region55: #{fcnn_forward.1} parent=1 // pred_check_branch
      %142 = sbr.rel (0) target = $region57
    $region56: #{fcnn_forward.1} parent=1 // pred_region
      %144 = dma.done [#allocation9], 32768
    $region57: #{fcnn_forward.1} parent=1 // pred_fallthru
      _
    // Predicated region
    $region58: #{fcnn_forward.1} parent=1 // pred_check
      _
    $region59: #{fcnn_forward.1} parent=1 // pred_check_branch
      %146 = sbr.rel (0) target = $region61
    $region60: #{fcnn_forward.1} parent=1 // pred_region
      %148 = dma.done [#allocation9], 64
    $region61: #{fcnn_forward.1} parent=1 // pred_fallthru
      _
    // Predicated region
    $region62: #{fcnn_forward.1} parent=1 // pred_check
      _
    $region63: #{fcnn_forward.1} parent=1 // pred_check_branch
      %150 = sbr.rel (0) target = $region65
    $region64: #{fcnn_forward.1} parent=1 // pred_region
      %152 = dma.done [#allocation12], 4096
    $region65: #{fcnn_forward.1} parent=1 // pred_fallthru
      _
    // Predicated region
    $region66: #{fcnn_forward.1} parent=1 // pred_check
      _
    $region67: #{fcnn_forward.1} parent=1 // pred_check_branch
      %154 = sbr.rel (0) target = $region69
    $region68: #{fcnn_forward.1} parent=1 // pred_region
      %156 = dma.done [#allocation12], 16
    $region69: #{fcnn_forward.1} parent=1 // pred_fallthru
      _
    // Predicated region
    $region70: #{fcnn_forward.1} parent=1 // pred_check
      _
    $region71: #{fcnn_forward.1} parent=1 // pred_check_branch
      %158 = sbr.rel (0) target = $region73
    $region72: #{fcnn_forward.1} parent=1 // pred_region
      %160 = dma.done [#allocation15], 1024
    $region73: #{fcnn_forward.1} parent=1 // pred_fallthru
      _
    // Predicated region
    $region74: #{fcnn_forward.1} parent=1 // pred_check
      _
    $region75: #{fcnn_forward.1} parent=1 // pred_check_branch
      %162 = sbr.rel (0) target = $region77
    $region76: #{fcnn_forward.1} parent=1 // pred_region
      %164 = dma.done [#allocation15], 16
    $region77: #{fcnn_forward.1} parent=1 // pred_fallthru
      _
    %p165 = scmp.eq.s32.totalorder 0, 0
    // Predicated region
    $region78: #{fcnn_forward.1} parent=1 // pred_check
      %p166 = pneg %p165
    $region79: #{fcnn_forward.1} parent=1 // pred_check_branch
      %168 = sbr.rel (%p166) target = $region81
    $region80: #{fcnn_forward.1} parent=1 // pred_region
      %169 = vst [vmem:[#allocation2] sm:$0xff] 0.0
      %170 = vst [vmem:[#allocation2 + $0x8] sm:$0xff] 0.0
      %171 = vst [vmem:[#allocation2 + $0x10] sm:$0xff] 0.0
      %172 = vst [vmem:[#allocation2 + $0x18] sm:$0xff] 0.0
      %173 = vst [vmem:[#allocation2 + $0x20] sm:$0xff] 0.0
      %174 = vst [vmem:[#allocation2 + $0x28] sm:$0xff] 0.0
      %175 = vst [vmem:[#allocation2 + $0x30] sm:$0xff] 0.0
      %176 = vst [vmem:[#allocation2 + $0x38] sm:$0xff] 0.0
      %177 = vst [vmem:[#allocation2 + $0x40] sm:$0xff] 0.0
      %178 = vst [vmem:[#allocation2 + $0x48] sm:$0xff] 0.0
      %179 = vst [vmem:[#allocation2 + $0x50] sm:$0xff] 0.0
      %180 = vst [vmem:[#allocation2 + $0x58] sm:$0xff] 0.0
      %181 = vst [vmem:[#allocation2 + $0x60] sm:$0xff] 0.0
      %182 = vst [vmem:[#allocation2 + $0x68] sm:$0xff] 0.0
      %183 = vst [vmem:[#allocation2 + $0x70] sm:$0xff] 0.0
      %184 = vst [vmem:[#allocation2 + $0x78] sm:$0xff] 0.0
    $region81: #{fcnn_forward.1} parent=1 // pred_fallthru
      _
    %v185 = vld [vmem:[%s0] sm:$0xff]
    %v186 = vld [vmem:[%s0 + $0x8] sm:$0xff]
    %v187 = vld [vmem:[%s0 + $0x10] sm:$0xff]
    %v188 = vld [vmem:[%s0 + $0x18] sm:$0xff]
    %v189 = vld [vmem:[%s0 + $0x20] sm:$0xff]
    %v190 = vld [vmem:[%s0 + $0x28] sm:$0xff]
    %v191 = vld [vmem:[%s0 + $0x30] sm:$0xff]
    %v192 = vld [vmem:[%s0 + $0x38] sm:$0xff]
    %v193 = vld [vmem:[%s0 + $0x40] sm:$0xff]
    %v194 = vld [vmem:[%s0 + $0x48] sm:$0xff]
    %v195 = vld [vmem:[%s0 + $0x50] sm:$0xff]
    %v196 = vld [vmem:[%s0 + $0x58] sm:$0xff]
    %v197 = vpack.c.bf16 %v191, %v185
    %v198 = vpack.c.bf16 %v192, %v186
    %v199 = vpack.c.bf16 %v193, %v187
    %v200 = vpack.c.bf16 %v194, %v188
    %v201 = vpack.c.bf16 %v195, %v189
    %v202 = vpack.c.bf16 %v196, %v190
    %v203 = vld [vmem:[#allocation3] sm:$0xff]
    %v204 = vld [vmem:[#allocation3 + $0x8] sm:$0xff]
    %v205 = vld [vmem:[#allocation3 + $0x10] sm:$0xff]
    %v206 = vld [vmem:[#allocation3 + $0x18] sm:$0xff]
    %v207 = vld [vmem:[#allocation3 + $0x20] sm:$0xff]
    %v208 = vld [vmem:[#allocation3 + $0x28] sm:$0xff]
    %v209 = vld [vmem:[#allocation3 + $0x30] sm:$0xff]
    %v210 = vld [vmem:[#allocation3 + $0x38] sm:$0xff]
    %v211 = vld [vmem:[#allocation3 + $0x40] sm:$0xff]
    %v212 = vld [vmem:[#allocation3 + $0x48] sm:$0xff]
    %v213 = vld [vmem:[#allocation3 + $0x50] sm:$0xff]
    %v214 = vld [vmem:[#allocation3 + $0x58] sm:$0xff]
    %v215 = vld [vmem:[#allocation3 + $0x60] sm:$0xff]
    %v216 = vld [vmem:[#allocation3 + $0x68] sm:$0xff]
    %v217 = vld [vmem:[#allocation3 + $0x70] sm:$0xff]
    %v218 = vld [vmem:[#allocation3 + $0x78] sm:$0xff]
    %v219 = vld [vmem:[#allocation3 + $0x80] sm:$0xff]
    %v220 = vld [vmem:[#allocation3 + $0x88] sm:$0xff]
    %v221 = vld [vmem:[#allocation3 + $0x90] sm:$0xff]
    %v222 = vld [vmem:[#allocation3 + $0x98] sm:$0xff]
    %v223 = vld [vmem:[#allocation3 + $0xa0] sm:$0xff]
    %v224 = vld [vmem:[#allocation3 + $0xa8] sm:$0xff]
    %v225 = vld [vmem:[#allocation3 + $0xb0] sm:$0xff]
    %v226 = vld [vmem:[#allocation3 + $0xb8] sm:$0xff]
    %v227 = vld [vmem:[#allocation3 + $0xc0] sm:$0xff]
    %v228 = vld [vmem:[#allocation3 + $0xc8] sm:$0xff]
    %v229 = vld [vmem:[#allocation3 + $0xd0] sm:$0xff]
    %v230 = vld [vmem:[#allocation3 + $0xd8] sm:$0xff]
    %v231 = vld [vmem:[#allocation3 + $0xe0] sm:$0xff]
    %v232 = vld [vmem:[#allocation3 + $0xe8] sm:$0xff]
    %v233 = vld [vmem:[#allocation3 + $0xf0] sm:$0xff]
    %v234 = vld [vmem:[#allocation3 + $0xf8] sm:$0xff]
    %v235 = vld [vmem:[#allocation3 + $0x100] sm:$0xff]
    %v236 = vld [vmem:[#allocation3 + $0x108] sm:$0xff]
    %v237 = vld [vmem:[#allocation3 + $0x110] sm:$0xff]
    %v238 = vld [vmem:[#allocation3 + $0x118] sm:$0xff]
    %v239 = vld [vmem:[#allocation3 + $0x120] sm:$0xff]
    %v240 = vld [vmem:[#allocation3 + $0x128] sm:$0xff]
    %v241 = vld [vmem:[#allocation3 + $0x130] sm:$0xff]
    %v242 = vld [vmem:[#allocation3 + $0x138] sm:$0xff]
    %v243 = vld [vmem:[#allocation3 + $0x140] sm:$0xff]
    %v244 = vld [vmem:[#allocation3 + $0x148] sm:$0xff]
    %v245 = vld [vmem:[#allocation3 + $0x150] sm:$0xff]
    %v246 = vld [vmem:[#allocation3 + $0x158] sm:$0xff]
    %v247 = vld [vmem:[#allocation3 + $0x160] sm:$0xff]
    %v248 = vld [vmem:[#allocation3 + $0x168] sm:$0xff]
    %v249 = vld [vmem:[#allocation3 + $0x170] sm:$0xff]
    %v250 = vld [vmem:[#allocation3 + $0x178] sm:$0xff]
    %v251 = vld [vmem:[#allocation3 + $0x180] sm:$0xff]
    %v252 = vld [vmem:[#allocation3 + $0x188] sm:$0xff]
    %v253 = vld [vmem:[#allocation3 + $0x190] sm:$0xff]
    %v254 = vld [vmem:[#allocation3 + $0x198] sm:$0xff]
    %v255 = vld [vmem:[#allocation3 + $0x1a0] sm:$0xff]
    %v256 = vld [vmem:[#allocation3 + $0x1a8] sm:$0xff]
    %v257 = vld [vmem:[#allocation3 + $0x1b0] sm:$0xff]
    %v258 = vld [vmem:[#allocation3 + $0x1b8] sm:$0xff]
    %v259 = vld [vmem:[#allocation3 + $0x1c0] sm:$0xff]
    %v260 = vld [vmem:[#allocation3 + $0x1c8] sm:$0xff]
    %v261 = vld [vmem:[#allocation3 + $0x1d0] sm:$0xff]
    %v262 = vld [vmem:[#allocation3 + $0x1d8] sm:$0xff]
    %v263 = vld [vmem:[#allocation3 + $0x1e0] sm:$0xff]
    %v264 = vld [vmem:[#allocation3 + $0x1e8] sm:$0xff]
    %v265 = vld [vmem:[#allocation3 + $0x1f0] sm:$0xff]
    %v266 = vld [vmem:[#allocation3 + $0x1f8] sm:$0xff]
    %v267 = vld [vmem:[#allocation3 + $0x200] sm:$0xff]
    %v268 = vld [vmem:[#allocation3 + $0x208] sm:$0xff]
    %v269 = vld [vmem:[#allocation3 + $0x210] sm:$0xff]
    %v270 = vld [vmem:[#allocation3 + $0x218] sm:$0xff]
    %v271 = vld [vmem:[#allocation3 + $0x220] sm:$0xff]
    %v272 = vld [vmem:[#allocation3 + $0x228] sm:$0xff]
    %v273 = vld [vmem:[#allocation3 + $0x230] sm:$0xff]
    %v274 = vld [vmem:[#allocation3 + $0x238] sm:$0xff]
    %v275 = vld [vmem:[#allocation3 + $0x240] sm:$0xff]
    %v276 = vld [vmem:[#allocation3 + $0x248] sm:$0xff]
    %v277 = vld [vmem:[#allocation3 + $0x250] sm:$0xff]
    %v278 = vld [vmem:[#allocation3 + $0x258] sm:$0xff]
    %v279 = vld [vmem:[#allocation3 + $0x260] sm:$0xff]
    %v280 = vld [vmem:[#allocation3 + $0x268] sm:$0xff]
    %v281 = vld [vmem:[#allocation3 + $0x270] sm:$0xff]
    %v282 = vld [vmem:[#allocation3 + $0x278] sm:$0xff]
    %v283 = vld [vmem:[#allocation3 + $0x280] sm:$0xff]
    %v284 = vld [vmem:[#allocation3 + $0x288] sm:$0xff]
    %v285 = vld [vmem:[#allocation3 + $0x290] sm:$0xff]
    %v286 = vld [vmem:[#allocation3 + $0x298] sm:$0xff]
    %v287 = vld [vmem:[#allocation3 + $0x2a0] sm:$0xff]
    %v288 = vld [vmem:[#allocation3 + $0x2a8] sm:$0xff]
    %v289 = vld [vmem:[#allocation3 + $0x2b0] sm:$0xff]
    %v290 = vld [vmem:[#allocation3 + $0x2b8] sm:$0xff]
    %v291 = vld [vmem:[#allocation3 + $0x2c0] sm:$0xff]
    %v292 = vld [vmem:[#allocation3 + $0x2c8] sm:$0xff]
    %v293 = vld [vmem:[#allocation3 + $0x2d0] sm:$0xff]
    %v294 = vld [vmem:[#allocation3 + $0x2d8] sm:$0xff]
    %v295 = vld [vmem:[#allocation3 + $0x2e0] sm:$0xff]
    %v296 = vld [vmem:[#allocation3 + $0x2e8] sm:$0xff]
    %v297 = vld [vmem:[#allocation3 + $0x2f0] sm:$0xff]
    %v298 = vld [vmem:[#allocation3 + $0x2f8] sm:$0xff]
    %v299 = vld [vmem:[#allocation3 + $0x300] sm:$0xff]
    %v300 = vld [vmem:[#allocation3 + $0x308] sm:$0xff]
    %v301 = vld [vmem:[#allocation3 + $0x310] sm:$0xff]
    %v302 = vld [vmem:[#allocation3 + $0x318] sm:$0xff]
    %v303 = vld [vmem:[#allocation3 + $0x320] sm:$0xff]
    %v304 = vld [vmem:[#allocation3 + $0x328] sm:$0xff]
    %v305 = vld [vmem:[#allocation3 + $0x330] sm:$0xff]
    %v306 = vld [vmem:[#allocation3 + $0x338] sm:$0xff]
    %v307 = vld [vmem:[#allocation3 + $0x340] sm:$0xff]
    %v308 = vld [vmem:[#allocation3 + $0x348] sm:$0xff]
    %v309 = vld [vmem:[#allocation3 + $0x350] sm:$0xff]
    %v310 = vld [vmem:[#allocation3 + $0x358] sm:$0xff]
    %v311 = vld [vmem:[#allocation3 + $0x360] sm:$0xff]
    %v312 = vld [vmem:[#allocation3 + $0x368] sm:$0xff]
    %v313 = vld [vmem:[#allocation3 + $0x370] sm:$0xff]
    %v314 = vld [vmem:[#allocation3 + $0x378] sm:$0xff]
    %v315 = vld [vmem:[#allocation3 + $0x380] sm:$0xff]
    %v316 = vld [vmem:[#allocation3 + $0x388] sm:$0xff]
    %v317 = vld [vmem:[#allocation3 + $0x390] sm:$0xff]
    %v318 = vld [vmem:[#allocation3 + $0x398] sm:$0xff]
    %v319 = vld [vmem:[#allocation3 + $0x3a0] sm:$0xff]
    %v320 = vld [vmem:[#allocation3 + $0x3a8] sm:$0xff]
    %v321 = vld [vmem:[#allocation3 + $0x3b0] sm:$0xff]
    %v322 = vld [vmem:[#allocation3 + $0x3b8] sm:$0xff]
    %v323 = vld [vmem:[#allocation3 + $0x3c0] sm:$0xff]
    %v324 = vld [vmem:[#allocation3 + $0x3c8] sm:$0xff]
    %v325 = vld [vmem:[#allocation3 + $0x3d0] sm:$0xff]
    %v326 = vld [vmem:[#allocation3 + $0x3d8] sm:$0xff]
    %v327 = vld [vmem:[#allocation3 + $0x3e0] sm:$0xff]
    %v328 = vld [vmem:[#allocation3 + $0x3e8] sm:$0xff]
    %v329 = vld [vmem:[#allocation3 + $0x3f0] sm:$0xff]
    %v330 = vld [vmem:[#allocation3 + $0x3f8] sm:$0xff]
    %v331 = vld [vmem:[#allocation3 + $0x400] sm:$0xff]
    %v332 = vld [vmem:[#allocation3 + $0x408] sm:$0xff]
    %v333 = vld [vmem:[#allocation3 + $0x410] sm:$0xff]
    %v334 = vld [vmem:[#allocation3 + $0x418] sm:$0xff]
    %v335 = vld [vmem:[#allocation3 + $0x420] sm:$0xff]
    %v336 = vld [vmem:[#allocation3 + $0x428] sm:$0xff]
    %v337 = vld [vmem:[#allocation3 + $0x430] sm:$0xff]
    %v338 = vld [vmem:[#allocation3 + $0x438] sm:$0xff]
    %v339 = vld [vmem:[#allocation3 + $0x440] sm:$0xff]
    %v340 = vld [vmem:[#allocation3 + $0x448] sm:$0xff]
    %v341 = vld [vmem:[#allocation3 + $0x450] sm:$0xff]
    %v342 = vld [vmem:[#allocation3 + $0x458] sm:$0xff]
    %v343 = vld [vmem:[#allocation3 + $0x460] sm:$0xff]
    %v344 = vld [vmem:[#allocation3 + $0x468] sm:$0xff]
    %v345 = vld [vmem:[#allocation3 + $0x470] sm:$0xff]
    %v346 = vld [vmem:[#allocation3 + $0x478] sm:$0xff]
    %v347 = vld [vmem:[#allocation3 + $0x480] sm:$0xff]
    %v348 = vld [vmem:[#allocation3 + $0x488] sm:$0xff]
    %v349 = vld [vmem:[#allocation3 + $0x490] sm:$0xff]
    %v350 = vld [vmem:[#allocation3 + $0x498] sm:$0xff]
    %v351 = vld [vmem:[#allocation3 + $0x4a0] sm:$0xff]
    %v352 = vld [vmem:[#allocation3 + $0x4a8] sm:$0xff]
    %v353 = vld [vmem:[#allocation3 + $0x4b0] sm:$0xff]
    %v354 = vld [vmem:[#allocation3 + $0x4b8] sm:$0xff]
    %v355 = vld [vmem:[#allocation3 + $0x4c0] sm:$0xff]
    %v356 = vld [vmem:[#allocation3 + $0x4c8] sm:$0xff]
    %v357 = vld [vmem:[#allocation3 + $0x4d0] sm:$0xff]
    %v358 = vld [vmem:[#allocation3 + $0x4d8] sm:$0xff]
    %v359 = vld [vmem:[#allocation3 + $0x4e0] sm:$0xff]
    %v360 = vld [vmem:[#allocation3 + $0x4e8] sm:$0xff]
    %v361 = vld [vmem:[#allocation3 + $0x4f0] sm:$0xff]
    %v362 = vld [vmem:[#allocation3 + $0x4f8] sm:$0xff]
    %v363 = vld [vmem:[#allocation3 + $0x500] sm:$0xff]
    %v364 = vld [vmem:[#allocation3 + $0x508] sm:$0xff]
    %v365 = vld [vmem:[#allocation3 + $0x510] sm:$0xff]
    %v366 = vld [vmem:[#allocation3 + $0x518] sm:$0xff]
    %v367 = vld [vmem:[#allocation3 + $0x520] sm:$0xff]
    %v368 = vld [vmem:[#allocation3 + $0x528] sm:$0xff]
    %v369 = vld [vmem:[#allocation3 + $0x530] sm:$0xff]
    %v370 = vld [vmem:[#allocation3 + $0x538] sm:$0xff]
    %v371 = vld [vmem:[#allocation3 + $0x540] sm:$0xff]
    %v372 = vld [vmem:[#allocation3 + $0x548] sm:$0xff]
    %v373 = vld [vmem:[#allocation3 + $0x550] sm:$0xff]
    %v374 = vld [vmem:[#allocation3 + $0x558] sm:$0xff]
    %v375 = vld [vmem:[#allocation3 + $0x560] sm:$0xff]
    %v376 = vld [vmem:[#allocation3 + $0x568] sm:$0xff]
    %v377 = vld [vmem:[#allocation3 + $0x570] sm:$0xff]
    %v378 = vld [vmem:[#allocation3 + $0x578] sm:$0xff]
    %v379 = vld [vmem:[#allocation3 + $0x580] sm:$0xff]
    %v380 = vld [vmem:[#allocation3 + $0x588] sm:$0xff]
    %v381 = vld [vmem:[#allocation3 + $0x590] sm:$0xff]
    %v382 = vld [vmem:[#allocation3 + $0x598] sm:$0xff]
    %v383 = vld [vmem:[#allocation3 + $0x5a0] sm:$0xff]
    %v384 = vld [vmem:[#allocation3 + $0x5a8] sm:$0xff]
    %v385 = vld [vmem:[#allocation3 + $0x5b0] sm:$0xff]
    %v386 = vld [vmem:[#allocation3 + $0x5b8] sm:$0xff]
    %v387 = vld [vmem:[#allocation3 + $0x5c0] sm:$0xff]
    %v388 = vld [vmem:[#allocation3 + $0x5c8] sm:$0xff]
    %v389 = vld [vmem:[#allocation3 + $0x5d0] sm:$0xff]
    %v390 = vld [vmem:[#allocation3 + $0x5d8] sm:$0xff]
    %v391 = vld [vmem:[#allocation3 + $0x5e0] sm:$0xff]
    %v392 = vld [vmem:[#allocation3 + $0x5e8] sm:$0xff]
    %v393 = vld [vmem:[#allocation3 + $0x5f0] sm:$0xff]
    %v394 = vld [vmem:[#allocation3 + $0x5f8] sm:$0xff]
    %v395 = vld [vmem:[#allocation3 + $0x600] sm:$0xff]
    %v396 = vld [vmem:[#allocation3 + $0x608] sm:$0xff]
    %v397 = vld [vmem:[#allocation3 + $0x610] sm:$0xff]
    %v398 = vld [vmem:[#allocation3 + $0x618] sm:$0xff]
    %v399 = vld [vmem:[#allocation3 + $0x620] sm:$0xff]
    %v400 = vld [vmem:[#allocation3 + $0x628] sm:$0xff]
    %v401 = vld [vmem:[#allocation3 + $0x630] sm:$0xff]
    %v402 = vld [vmem:[#allocation3 + $0x638] sm:$0xff]
    %v403 = vld [vmem:[#allocation3 + $0x640] sm:$0xff]
    %v404 = vld [vmem:[#allocation3 + $0x648] sm:$0xff]
    %v405 = vld [vmem:[#allocation3 + $0x650] sm:$0xff]
    %v406 = vld [vmem:[#allocation3 + $0x658] sm:$0xff]
    %v407 = vld [vmem:[#allocation3 + $0x660] sm:$0xff]
    %v408 = vld [vmem:[#allocation3 + $0x668] sm:$0xff]
    %v409 = vld [vmem:[#allocation3 + $0x670] sm:$0xff]
    %v410 = vld [vmem:[#allocation3 + $0x678] sm:$0xff]
    %v411 = vld [vmem:[#allocation3 + $0x680] sm:$0xff]
    %v412 = vld [vmem:[#allocation3 + $0x688] sm:$0xff]
    %v413 = vld [vmem:[#allocation3 + $0x690] sm:$0xff]
    %v414 = vld [vmem:[#allocation3 + $0x698] sm:$0xff]
    %v415 = vld [vmem:[#allocation3 + $0x6a0] sm:$0xff]
    %v416 = vld [vmem:[#allocation3 + $0x6a8] sm:$0xff]
    %v417 = vld [vmem:[#allocation3 + $0x6b0] sm:$0xff]
    %v418 = vld [vmem:[#allocation3 + $0x6b8] sm:$0xff]
    %v419 = vld [vmem:[#allocation3 + $0x6c0] sm:$0xff]
    %v420 = vld [vmem:[#allocation3 + $0x6c8] sm:$0xff]
    %v421 = vld [vmem:[#allocation3 + $0x6d0] sm:$0xff]
    %v422 = vld [vmem:[#allocation3 + $0x6d8] sm:$0xff]
    %v423 = vld [vmem:[#allocation3 + $0x6e0] sm:$0xff]
    %v424 = vld [vmem:[#allocation3 + $0x6e8] sm:$0xff]
    %v425 = vld [vmem:[#allocation3 + $0x6f0] sm:$0xff]
    %v426 = vld [vmem:[#allocation3 + $0x6f8] sm:$0xff]
    %v427 = vld [vmem:[#allocation3 + $0x700] sm:$0xff]
    %v428 = vld [vmem:[#allocation3 + $0x708] sm:$0xff]
    %v429 = vld [vmem:[#allocation3 + $0x710] sm:$0xff]
    %v430 = vld [vmem:[#allocation3 + $0x718] sm:$0xff]
    %v431 = vld [vmem:[#allocation3 + $0x720] sm:$0xff]
    %v432 = vld [vmem:[#allocation3 + $0x728] sm:$0xff]
    %v433 = vld [vmem:[#allocation3 + $0x730] sm:$0xff]
    %v434 = vld [vmem:[#allocation3 + $0x738] sm:$0xff]
    %v435 = vld [vmem:[#allocation3 + $0x740] sm:$0xff]
    %v436 = vld [vmem:[#allocation3 + $0x748] sm:$0xff]
    %v437 = vld [vmem:[#allocation3 + $0x750] sm:$0xff]
    %v438 = vld [vmem:[#allocation3 + $0x758] sm:$0xff]
    %v439 = vld [vmem:[#allocation3 + $0x760] sm:$0xff]
    %v440 = vld [vmem:[#allocation3 + $0x768] sm:$0xff]
    %v441 = vld [vmem:[#allocation3 + $0x770] sm:$0xff]
    %v442 = vld [vmem:[#allocation3 + $0x778] sm:$0xff]
    %v443 = vld [vmem:[#allocation3 + $0x780] sm:$0xff]
    %v444 = vld [vmem:[#allocation3 + $0x788] sm:$0xff]
    %v445 = vld [vmem:[#allocation3 + $0x790] sm:$0xff]
    %v446 = vld [vmem:[#allocation3 + $0x798] sm:$0xff]
    %v447 = vld [vmem:[#allocation3 + $0x7a0] sm:$0xff]
    %v448 = vld [vmem:[#allocation3 + $0x7a8] sm:$0xff]
    %v449 = vld [vmem:[#allocation3 + $0x7b0] sm:$0xff]
    %v450 = vld [vmem:[#allocation3 + $0x7b8] sm:$0xff]
    %v451 = vld [vmem:[#allocation3 + $0x7c0] sm:$0xff]
    %v452 = vld [vmem:[#allocation3 + $0x7c8] sm:$0xff]
    %v453 = vld [vmem:[#allocation3 + $0x7d0] sm:$0xff]
    %v454 = vld [vmem:[#allocation3 + $0x7d8] sm:$0xff]
    %v455 = vld [vmem:[#allocation3 + $0x7e0] sm:$0xff]
    %v456 = vld [vmem:[#allocation3 + $0x7e8] sm:$0xff]
    %v457 = vld [vmem:[#allocation3 + $0x7f0] sm:$0xff]
    %v458 = vld [vmem:[#allocation3 + $0x7f8] sm:$0xff]
    %v459 = vld [vmem:[#allocation3 + $0x800] sm:$0xff]
    %v460 = vld [vmem:[#allocation3 + $0x808] sm:$0xff]
    %v461 = vld [vmem:[#allocation3 + $0x810] sm:$0xff]
    %v462 = vld [vmem:[#allocation3 + $0x818] sm:$0xff]
    %v463 = vld [vmem:[#allocation3 + $0x820] sm:$0xff]
    %v464 = vld [vmem:[#allocation3 + $0x828] sm:$0xff]
    %v465 = vld [vmem:[#allocation3 + $0x830] sm:$0xff]
    %v466 = vld [vmem:[#allocation3 + $0x838] sm:$0xff]
    %v467 = vld [vmem:[#allocation3 + $0x840] sm:$0xff]
    %v468 = vld [vmem:[#allocation3 + $0x848] sm:$0xff]
    %v469 = vld [vmem:[#allocation3 + $0x850] sm:$0xff]
    %v470 = vld [vmem:[#allocation3 + $0x858] sm:$0xff]
    %v471 = vld [vmem:[#allocation3 + $0x860] sm:$0xff]
    %v472 = vld [vmem:[#allocation3 + $0x868] sm:$0xff]
    %v473 = vld [vmem:[#allocation3 + $0x870] sm:$0xff]
    %v474 = vld [vmem:[#allocation3 + $0x878] sm:$0xff]
    %v475 = vld [vmem:[#allocation3 + $0x880] sm:$0xff]
    %v476 = vld [vmem:[#allocation3 + $0x888] sm:$0xff]
    %v477 = vld [vmem:[#allocation3 + $0x890] sm:$0xff]
    %v478 = vld [vmem:[#allocation3 + $0x898] sm:$0xff]
    %v479 = vld [vmem:[#allocation3 + $0x8a0] sm:$0xff]
    %v480 = vld [vmem:[#allocation3 + $0x8a8] sm:$0xff]
    %v481 = vld [vmem:[#allocation3 + $0x8b0] sm:$0xff]
    %v482 = vld [vmem:[#allocation3 + $0x8b8] sm:$0xff]
    %v483 = vld [vmem:[#allocation3 + $0x8c0] sm:$0xff]
    %v484 = vld [vmem:[#allocation3 + $0x8c8] sm:$0xff]
    %v485 = vld [vmem:[#allocation3 + $0x8d0] sm:$0xff]
    %v486 = vld [vmem:[#allocation3 + $0x8d8] sm:$0xff]
    %v487 = vld [vmem:[#allocation3 + $0x8e0] sm:$0xff]
    %v488 = vld [vmem:[#allocation3 + $0x8e8] sm:$0xff]
    %v489 = vld [vmem:[#allocation3 + $0x8f0] sm:$0xff]
    %v490 = vld [vmem:[#allocation3 + $0x8f8] sm:$0xff]
    %v491 = vld [vmem:[#allocation3 + $0x900] sm:$0xff]
    %v492 = vld [vmem:[#allocation3 + $0x908] sm:$0xff]
    %v493 = vld [vmem:[#allocation3 + $0x910] sm:$0xff]
    %v494 = vld [vmem:[#allocation3 + $0x918] sm:$0xff]
    %v495 = vld [vmem:[#allocation3 + $0x920] sm:$0xff]
    %v496 = vld [vmem:[#allocation3 + $0x928] sm:$0xff]
    %v497 = vld [vmem:[#allocation3 + $0x930] sm:$0xff]
    %v498 = vld [vmem:[#allocation3 + $0x938] sm:$0xff]
    %v499 = vld [vmem:[#allocation3 + $0x940] sm:$0xff]
    %v500 = vld [vmem:[#allocation3 + $0x948] sm:$0xff]
    %v501 = vld [vmem:[#allocation3 + $0x950] sm:$0xff]
    %v502 = vld [vmem:[#allocation3 + $0x958] sm:$0xff]
    %v503 = vld [vmem:[#allocation3 + $0x960] sm:$0xff]
    %v504 = vld [vmem:[#allocation3 + $0x968] sm:$0xff]
    %v505 = vld [vmem:[#allocation3 + $0x970] sm:$0xff]
    %v506 = vld [vmem:[#allocation3 + $0x978] sm:$0xff]
    %v507 = vld [vmem:[#allocation3 + $0x980] sm:$0xff]
    %v508 = vld [vmem:[#allocation3 + $0x988] sm:$0xff]
    %v509 = vld [vmem:[#allocation3 + $0x990] sm:$0xff]
    %v510 = vld [vmem:[#allocation3 + $0x998] sm:$0xff]
    %v511 = vld [vmem:[#allocation3 + $0x9a0] sm:$0xff]
    %v512 = vld [vmem:[#allocation3 + $0x9a8] sm:$0xff]
    %v513 = vld [vmem:[#allocation3 + $0x9b0] sm:$0xff]
    %v514 = vld [vmem:[#allocation3 + $0x9b8] sm:$0xff]
    %v515 = vld [vmem:[#allocation3 + $0x9c0] sm:$0xff]
    %v516 = vld [vmem:[#allocation3 + $0x9c8] sm:$0xff]
    %v517 = vld [vmem:[#allocation3 + $0x9d0] sm:$0xff]
    %v518 = vld [vmem:[#allocation3 + $0x9d8] sm:$0xff]
    %v519 = vld [vmem:[#allocation3 + $0x9e0] sm:$0xff]
    %v520 = vld [vmem:[#allocation3 + $0x9e8] sm:$0xff]
    %v521 = vld [vmem:[#allocation3 + $0x9f0] sm:$0xff]
    %v522 = vld [vmem:[#allocation3 + $0x9f8] sm:$0xff]
    %v523 = vld [vmem:[#allocation3 + $0xa00] sm:$0xff]
    %v524 = vld [vmem:[#allocation3 + $0xa08] sm:$0xff]
    %v525 = vld [vmem:[#allocation3 + $0xa10] sm:$0xff]
    %v526 = vld [vmem:[#allocation3 + $0xa18] sm:$0xff]
    %v527 = vld [vmem:[#allocation3 + $0xa20] sm:$0xff]
    %v528 = vld [vmem:[#allocation3 + $0xa28] sm:$0xff]
    %v529 = vld [vmem:[#allocation3 + $0xa30] sm:$0xff]
    %v530 = vld [vmem:[#allocation3 + $0xa38] sm:$0xff]
    %v531 = vld [vmem:[#allocation3 + $0xa40] sm:$0xff]
    %v532 = vld [vmem:[#allocation3 + $0xa48] sm:$0xff]
    %v533 = vld [vmem:[#allocation3 + $0xa50] sm:$0xff]
    %v534 = vld [vmem:[#allocation3 + $0xa58] sm:$0xff]
    %v535 = vld [vmem:[#allocation3 + $0xa60] sm:$0xff]
    %v536 = vld [vmem:[#allocation3 + $0xa68] sm:$0xff]
    %v537 = vld [vmem:[#allocation3 + $0xa70] sm:$0xff]
    %v538 = vld [vmem:[#allocation3 + $0xa78] sm:$0xff]
    %v539 = vld [vmem:[#allocation3 + $0xa80] sm:$0xff]
    %v540 = vld [vmem:[#allocation3 + $0xa88] sm:$0xff]
    %v541 = vld [vmem:[#allocation3 + $0xa90] sm:$0xff]
    %v542 = vld [vmem:[#allocation3 + $0xa98] sm:$0xff]
    %v543 = vld [vmem:[#allocation3 + $0xaa0] sm:$0xff]
    %v544 = vld [vmem:[#allocation3 + $0xaa8] sm:$0xff]
    %v545 = vld [vmem:[#allocation3 + $0xab0] sm:$0xff]
    %v546 = vld [vmem:[#allocation3 + $0xab8] sm:$0xff]
    %v547 = vld [vmem:[#allocation3 + $0xac0] sm:$0xff]
    %v548 = vld [vmem:[#allocation3 + $0xac8] sm:$0xff]
    %v549 = vld [vmem:[#allocation3 + $0xad0] sm:$0xff]
    %v550 = vld [vmem:[#allocation3 + $0xad8] sm:$0xff]
    %v551 = vld [vmem:[#allocation3 + $0xae0] sm:$0xff]
    %v552 = vld [vmem:[#allocation3 + $0xae8] sm:$0xff]
    %v553 = vld [vmem:[#allocation3 + $0xaf0] sm:$0xff]
    %v554 = vld [vmem:[#allocation3 + $0xaf8] sm:$0xff]
    %v555 = vld [vmem:[#allocation3 + $0xb00] sm:$0xff]
    %v556 = vld [vmem:[#allocation3 + $0xb08] sm:$0xff]
    %v557 = vld [vmem:[#allocation3 + $0xb10] sm:$0xff]
    %v558 = vld [vmem:[#allocation3 + $0xb18] sm:$0xff]
    %v559 = vld [vmem:[#allocation3 + $0xb20] sm:$0xff]
    %v560 = vld [vmem:[#allocation3 + $0xb28] sm:$0xff]
    %v561 = vld [vmem:[#allocation3 + $0xb30] sm:$0xff]
    %v562 = vld [vmem:[#allocation3 + $0xb38] sm:$0xff]
    %v563 = vld [vmem:[#allocation3 + $0xb40] sm:$0xff]
    %v564 = vld [vmem:[#allocation3 + $0xb48] sm:$0xff]
    %v565 = vld [vmem:[#allocation3 + $0xb50] sm:$0xff]
    %v566 = vld [vmem:[#allocation3 + $0xb58] sm:$0xff]
    %v567 = vld [vmem:[#allocation3 + $0xb60] sm:$0xff]
    %v568 = vld [vmem:[#allocation3 + $0xb68] sm:$0xff]
    %v569 = vld [vmem:[#allocation3 + $0xb70] sm:$0xff]
    %v570 = vld [vmem:[#allocation3 + $0xb78] sm:$0xff]
    %v571 = vld [vmem:[#allocation3 + $0xb80] sm:$0xff]
    %v572 = vld [vmem:[#allocation3 + $0xb88] sm:$0xff]
    %v573 = vld [vmem:[#allocation3 + $0xb90] sm:$0xff]
    %v574 = vld [vmem:[#allocation3 + $0xb98] sm:$0xff]
    %v575 = vld [vmem:[#allocation3 + $0xba0] sm:$0xff]
    %v576 = vld [vmem:[#allocation3 + $0xba8] sm:$0xff]
    %v577 = vld [vmem:[#allocation3 + $0xbb0] sm:$0xff]
    %v578 = vld [vmem:[#allocation3 + $0xbb8] sm:$0xff]
    %v579 = vld [vmem:[#allocation3 + $0xbc0] sm:$0xff]
    %v580 = vld [vmem:[#allocation3 + $0xbc8] sm:$0xff]
    %v581 = vld [vmem:[#allocation3 + $0xbd0] sm:$0xff]
    %v582 = vld [vmem:[#allocation3 + $0xbd8] sm:$0xff]
    %v583 = vld [vmem:[#allocation3 + $0xbe0] sm:$0xff]
    %v584 = vld [vmem:[#allocation3 + $0xbe8] sm:$0xff]
    %v585 = vld [vmem:[#allocation3 + $0xbf0] sm:$0xff]
    %v586 = vld [vmem:[#allocation3 + $0xbf8] sm:$0xff]
    %v587 = vld [vmem:[#allocation2] sm:$0xff]
    %v588 = vld [vmem:[#allocation2 + $0x8] sm:$0xff]
    %v589 = vld [vmem:[#allocation2 + $0x10] sm:$0xff]
    %v590 = vld [vmem:[#allocation2 + $0x18] sm:$0xff]
    %v591 = vld [vmem:[#allocation2 + $0x20] sm:$0xff]
    %v592 = vld [vmem:[#allocation2 + $0x28] sm:$0xff]
    %v593 = vld [vmem:[#allocation2 + $0x30] sm:$0xff]
    %v594 = vld [vmem:[#allocation2 + $0x38] sm:$0xff]
    %v595 = vld [vmem:[#allocation2 + $0x40] sm:$0xff]
    %v596 = vld [vmem:[#allocation2 + $0x48] sm:$0xff]
    %v597 = vld [vmem:[#allocation2 + $0x50] sm:$0xff]
    %v598 = vld [vmem:[#allocation2 + $0x58] sm:$0xff]
    %v599 = vld [vmem:[#allocation2 + $0x60] sm:$0xff]
    %v600 = vld [vmem:[#allocation2 + $0x68] sm:$0xff]
    %v601 = vld [vmem:[#allocation2 + $0x70] sm:$0xff]
    %v602 = vld [vmem:[#allocation2 + $0x78] sm:$0xff]
    %v987 = vunpack.c.l.b16 %v203
    %v988 = vunpack.c.h.b16 %v203
    %v989 = vunpack.c.l.b16 %v204
    %v990 = vunpack.c.h.b16 %v204
    %v991 = vunpack.c.l.b16 %v205
    %v992 = vunpack.c.h.b16 %v205
    %v993 = vunpack.c.l.b16 %v206
    %v994 = vunpack.c.h.b16 %v206
    %v995 = vunpack.c.l.b16 %v207
    %v996 = vunpack.c.h.b16 %v207
    %v997 = vunpack.c.l.b16 %v208
    %v998 = vunpack.c.h.b16 %v208
    %v999 = vunpack.c.l.b16 %v209
    %v1000 = vunpack.c.h.b16 %v209
    %v1001 = vunpack.c.l.b16 %v210
    %v1002 = vunpack.c.h.b16 %v210
    %v1003 = vunpack.c.l.b16 %v211
    %v1004 = vunpack.c.h.b16 %v211
    %v1005 = vunpack.c.l.b16 %v212
    %v1006 = vunpack.c.h.b16 %v212
    %v1007 = vunpack.c.l.b16 %v213
    %v1008 = vunpack.c.h.b16 %v213
    %v1009 = vunpack.c.l.b16 %v214
    %v1010 = vunpack.c.h.b16 %v214
    %v1011 = vunpack.c.l.b16 %v215
    %v1012 = vunpack.c.h.b16 %v215
    %v1013 = vunpack.c.l.b16 %v216
    %v1014 = vunpack.c.h.b16 %v216
    %v1015 = vunpack.c.l.b16 %v217
    %v1016 = vunpack.c.h.b16 %v217
    %v1017 = vunpack.c.l.b16 %v218
    %v1018 = vunpack.c.h.b16 %v218
    %v1019 = vunpack.c.l.b16 %v219
    %v1020 = vunpack.c.h.b16 %v219
    %v1021 = vunpack.c.l.b16 %v220
    %v1022 = vunpack.c.h.b16 %v220
    %v1023 = vunpack.c.l.b16 %v221
    %v1024 = vunpack.c.h.b16 %v221
    %v1025 = vunpack.c.l.b16 %v222
    %v1026 = vunpack.c.h.b16 %v222
    %v1027 = vunpack.c.l.b16 %v223
    %v1028 = vunpack.c.h.b16 %v223
    %v1029 = vunpack.c.l.b16 %v224
    %v1030 = vunpack.c.h.b16 %v224
    %v1031 = vunpack.c.l.b16 %v225
    %v1032 = vunpack.c.h.b16 %v225
    %v1033 = vunpack.c.l.b16 %v226
    %v1034 = vunpack.c.h.b16 %v226
    %v1035 = vunpack.c.l.b16 %v227
    %v1036 = vunpack.c.h.b16 %v227
    %v1037 = vunpack.c.l.b16 %v228
    %v1038 = vunpack.c.h.b16 %v228
    %v1039 = vunpack.c.l.b16 %v229
    %v1040 = vunpack.c.h.b16 %v229
    %v1041 = vunpack.c.l.b16 %v230
    %v1042 = vunpack.c.h.b16 %v230
    %v1043 = vunpack.c.l.b16 %v231
    %v1044 = vunpack.c.h.b16 %v231
    %v1045 = vunpack.c.l.b16 %v232
    %v1046 = vunpack.c.h.b16 %v232
    %v1047 = vunpack.c.l.b16 %v233
    %v1048 = vunpack.c.h.b16 %v233
    %v1049 = vunpack.c.l.b16 %v234
    %v1050 = vunpack.c.h.b16 %v234
    %v1051 = vunpack.c.l.b16 %v235
    %v1052 = vunpack.c.h.b16 %v235
    %v1053 = vunpack.c.l.b16 %v236
    %v1054 = vunpack.c.h.b16 %v236
    %v1055 = vunpack.c.l.b16 %v237
    %v1056 = vunpack.c.h.b16 %v237
    %v1057 = vunpack.c.l.b16 %v238
    %v1058 = vunpack.c.h.b16 %v238
    %v1059 = vunpack.c.l.b16 %v239
    %v1060 = vunpack.c.h.b16 %v239
    %v1061 = vunpack.c.l.b16 %v240
    %v1062 = vunpack.c.h.b16 %v240
    %v1063 = vunpack.c.l.b16 %v241
    %v1064 = vunpack.c.h.b16 %v241
    %v1065 = vunpack.c.l.b16 %v242
    %v1066 = vunpack.c.h.b16 %v242
    %v1067 = vunpack.c.l.b16 %v243
    %v1068 = vunpack.c.h.b16 %v243
    %v1069 = vunpack.c.l.b16 %v244
    %v1070 = vunpack.c.h.b16 %v244
    %v1071 = vunpack.c.l.b16 %v245
    %v1072 = vunpack.c.h.b16 %v245
    %v1073 = vunpack.c.l.b16 %v246
    %v1074 = vunpack.c.h.b16 %v246
    %v1075 = vunpack.c.l.b16 %v247
    %v1076 = vunpack.c.h.b16 %v247
    %v1077 = vunpack.c.l.b16 %v248
    %v1078 = vunpack.c.h.b16 %v248
    %v1079 = vunpack.c.l.b16 %v249
    %v1080 = vunpack.c.h.b16 %v249
    %v1081 = vunpack.c.l.b16 %v250
    %v1082 = vunpack.c.h.b16 %v250
    %v1083 = vunpack.c.l.b16 %v251
    %v1084 = vunpack.c.h.b16 %v251
    %v1085 = vunpack.c.l.b16 %v252
    %v1086 = vunpack.c.h.b16 %v252
    %v1087 = vunpack.c.l.b16 %v253
    %v1088 = vunpack.c.h.b16 %v253
    %v1089 = vunpack.c.l.b16 %v254
    %v1090 = vunpack.c.h.b16 %v254
    %v1091 = vunpack.c.l.b16 %v255
    %v1092 = vunpack.c.h.b16 %v255
    %v1093 = vunpack.c.l.b16 %v256
    %v1094 = vunpack.c.h.b16 %v256
    %v1095 = vunpack.c.l.b16 %v257
    %v1096 = vunpack.c.h.b16 %v257
    %v1097 = vunpack.c.l.b16 %v258
    %v1098 = vunpack.c.h.b16 %v258
    %v1099 = vunpack.c.l.b16 %v259
    %v1100 = vunpack.c.h.b16 %v259
    %v1101 = vunpack.c.l.b16 %v260
    %v1102 = vunpack.c.h.b16 %v260
    %v1103 = vunpack.c.l.b16 %v261
    %v1104 = vunpack.c.h.b16 %v261
    %v1105 = vunpack.c.l.b16 %v262
    %v1106 = vunpack.c.h.b16 %v262
    %v1107 = vunpack.c.l.b16 %v263
    %v1108 = vunpack.c.h.b16 %v263
    %v1109 = vunpack.c.l.b16 %v264
    %v1110 = vunpack.c.h.b16 %v264
    %v1111 = vunpack.c.l.b16 %v265
    %v1112 = vunpack.c.h.b16 %v265
    %v1113 = vunpack.c.l.b16 %v266
    %v1114 = vunpack.c.h.b16 %v266
    %v1115 = vunpack.c.l.b16 %v267
    %v1116 = vunpack.c.h.b16 %v267
    %v1117 = vunpack.c.l.b16 %v268
    %v1118 = vunpack.c.h.b16 %v268
    %v1119 = vunpack.c.l.b16 %v269
    %v1120 = vunpack.c.h.b16 %v269
    %v1121 = vunpack.c.l.b16 %v270
    %v1122 = vunpack.c.h.b16 %v270
    %v1123 = vunpack.c.l.b16 %v271
    %v1124 = vunpack.c.h.b16 %v271
    %v1125 = vunpack.c.l.b16 %v272
    %v1126 = vunpack.c.h.b16 %v272
    %v1127 = vunpack.c.l.b16 %v273
    %v1128 = vunpack.c.h.b16 %v273
    %v1129 = vunpack.c.l.b16 %v274
    %v1130 = vunpack.c.h.b16 %v274
    %v1131 = vunpack.c.l.b16 %v275
    %v1132 = vunpack.c.h.b16 %v275
    %v1133 = vunpack.c.l.b16 %v276
    %v1134 = vunpack.c.h.b16 %v276
    %v1135 = vunpack.c.l.b16 %v277
    %v1136 = vunpack.c.h.b16 %v277
    %v1137 = vunpack.c.l.b16 %v278
    %v1138 = vunpack.c.h.b16 %v278
    %v1139 = vunpack.c.l.b16 %v279
    %v1140 = vunpack.c.h.b16 %v279
    %v1141 = vunpack.c.l.b16 %v280
    %v1142 = vunpack.c.h.b16 %v280
    %v1143 = vunpack.c.l.b16 %v281
    %v1144 = vunpack.c.h.b16 %v281
    %v1145 = vunpack.c.l.b16 %v282
    %v1146 = vunpack.c.h.b16 %v282
    %v1147 = vunpack.c.l.b16 %v283
    %v1148 = vunpack.c.h.b16 %v283
    %v1149 = vunpack.c.l.b16 %v284
    %v1150 = vunpack.c.h.b16 %v284
    %v1151 = vunpack.c.l.b16 %v285
    %v1152 = vunpack.c.h.b16 %v285
    %v1153 = vunpack.c.l.b16 %v286
    %v1154 = vunpack.c.h.b16 %v286
    %v1155 = vunpack.c.l.b16 %v287
    %v1156 = vunpack.c.h.b16 %v287
    %v1157 = vunpack.c.l.b16 %v288
    %v1158 = vunpack.c.h.b16 %v288
    %v1159 = vunpack.c.l.b16 %v289
    %v1160 = vunpack.c.h.b16 %v289
    %v1161 = vunpack.c.l.b16 %v290
    %v1162 = vunpack.c.h.b16 %v290
    %v1163 = vunpack.c.l.b16 %v291
    %v1164 = vunpack.c.h.b16 %v291
    %v1165 = vunpack.c.l.b16 %v292
    %v1166 = vunpack.c.h.b16 %v292
    %v1167 = vunpack.c.l.b16 %v293
    %v1168 = vunpack.c.h.b16 %v293
    %v1169 = vunpack.c.l.b16 %v294
    %v1170 = vunpack.c.h.b16 %v294
    %v1171 = vunpack.c.l.b16 %v295
    %v1172 = vunpack.c.h.b16 %v295
    %v1173 = vunpack.c.l.b16 %v296
    %v1174 = vunpack.c.h.b16 %v296
    %v1175 = vunpack.c.l.b16 %v297
    %v1176 = vunpack.c.h.b16 %v297
    %v1177 = vunpack.c.l.b16 %v298
    %v1178 = vunpack.c.h.b16 %v298
    %v1179 = vunpack.c.l.b16 %v299
    %v1180 = vunpack.c.h.b16 %v299
    %v1181 = vunpack.c.l.b16 %v300
    %v1182 = vunpack.c.h.b16 %v300
    %v1183 = vunpack.c.l.b16 %v301
    %v1184 = vunpack.c.h.b16 %v301
    %v1185 = vunpack.c.l.b16 %v302
    %v1186 = vunpack.c.h.b16 %v302
    %v1187 = vunpack.c.l.b16 %v303
    %v1188 = vunpack.c.h.b16 %v303
    %v1189 = vunpack.c.l.b16 %v304
    %v1190 = vunpack.c.h.b16 %v304
    %v1191 = vunpack.c.l.b16 %v305
    %v1192 = vunpack.c.h.b16 %v305
    %v1193 = vunpack.c.l.b16 %v306
    %v1194 = vunpack.c.h.b16 %v306
    %v1195 = vunpack.c.l.b16 %v307
    %v1196 = vunpack.c.h.b16 %v307
    %v1197 = vunpack.c.l.b16 %v308
    %v1198 = vunpack.c.h.b16 %v308
    %v1199 = vunpack.c.l.b16 %v309
    %v1200 = vunpack.c.h.b16 %v309
    %v1201 = vunpack.c.l.b16 %v310
    %v1202 = vunpack.c.h.b16 %v310
    %v1203 = vunpack.c.l.b16 %v311
    %v1204 = vunpack.c.h.b16 %v311
    %v1205 = vunpack.c.l.b16 %v312
    %v1206 = vunpack.c.h.b16 %v312
    %v1207 = vunpack.c.l.b16 %v313
    %v1208 = vunpack.c.h.b16 %v313
    %v1209 = vunpack.c.l.b16 %v314
    %v1210 = vunpack.c.h.b16 %v314
    %v1211 = vunpack.c.l.b16 %v315
    %v1212 = vunpack.c.h.b16 %v315
    %v1213 = vunpack.c.l.b16 %v316
    %v1214 = vunpack.c.h.b16 %v316
    %v1215 = vunpack.c.l.b16 %v317
    %v1216 = vunpack.c.h.b16 %v317
    %v1217 = vunpack.c.l.b16 %v318
    %v1218 = vunpack.c.h.b16 %v318
    %v1219 = vunpack.c.l.b16 %v319
    %v1220 = vunpack.c.h.b16 %v319
    %v1221 = vunpack.c.l.b16 %v320
    %v1222 = vunpack.c.h.b16 %v320
    %v1223 = vunpack.c.l.b16 %v321
    %v1224 = vunpack.c.h.b16 %v321
    %v1225 = vunpack.c.l.b16 %v322
    %v1226 = vunpack.c.h.b16 %v322
    %v1227 = vunpack.c.l.b16 %v323
    %v1228 = vunpack.c.h.b16 %v323
    %v1229 = vunpack.c.l.b16 %v324
    %v1230 = vunpack.c.h.b16 %v324
    %v1231 = vunpack.c.l.b16 %v325
    %v1232 = vunpack.c.h.b16 %v325
    %v1233 = vunpack.c.l.b16 %v326
    %v1234 = vunpack.c.h.b16 %v326
    %v1235 = vunpack.c.l.b16 %v327
    %v1236 = vunpack.c.h.b16 %v327
    %v1237 = vunpack.c.l.b16 %v328
    %v1238 = vunpack.c.h.b16 %v328
    %v1239 = vunpack.c.l.b16 %v329
    %v1240 = vunpack.c.h.b16 %v329
    %v1241 = vunpack.c.l.b16 %v330
    %v1242 = vunpack.c.h.b16 %v330
    %v1243 = vunpack.c.l.b16 %v331
    %v1244 = vunpack.c.h.b16 %v331
    %v1245 = vunpack.c.l.b16 %v332
    %v1246 = vunpack.c.h.b16 %v332
    %v1247 = vunpack.c.l.b16 %v333
    %v1248 = vunpack.c.h.b16 %v333
    %v1249 = vunpack.c.l.b16 %v334
    %v1250 = vunpack.c.h.b16 %v334
    %v1251 = vunpack.c.l.b16 %v335
    %v1252 = vunpack.c.h.b16 %v335
    %v1253 = vunpack.c.l.b16 %v336
    %v1254 = vunpack.c.h.b16 %v336
    %v1255 = vunpack.c.l.b16 %v337
    %v1256 = vunpack.c.h.b16 %v337
    %v1257 = vunpack.c.l.b16 %v338
    %v1258 = vunpack.c.h.b16 %v338
    %v1259 = vunpack.c.l.b16 %v339
    %v1260 = vunpack.c.h.b16 %v339
    %v1261 = vunpack.c.l.b16 %v340
    %v1262 = vunpack.c.h.b16 %v340
    %v1263 = vunpack.c.l.b16 %v341
    %v1264 = vunpack.c.h.b16 %v341
    %v1265 = vunpack.c.l.b16 %v342
    %v1266 = vunpack.c.h.b16 %v342
    %v1267 = vunpack.c.l.b16 %v343
    %v1268 = vunpack.c.h.b16 %v343
    %v1269 = vunpack.c.l.b16 %v344
    %v1270 = vunpack.c.h.b16 %v344
    %v1271 = vunpack.c.l.b16 %v345
    %v1272 = vunpack.c.h.b16 %v345
    %v1273 = vunpack.c.l.b16 %v346
    %v1274 = vunpack.c.h.b16 %v346
    %v1275 = vunpack.c.l.b16 %v347
    %v1276 = vunpack.c.h.b16 %v347
    %v1277 = vunpack.c.l.b16 %v348
    %v1278 = vunpack.c.h.b16 %v348
    %v1279 = vunpack.c.l.b16 %v349
    %v1280 = vunpack.c.h.b16 %v349
    %v1281 = vunpack.c.l.b16 %v350
    %v1282 = vunpack.c.h.b16 %v350
    %v1283 = vunpack.c.l.b16 %v351
    %v1284 = vunpack.c.h.b16 %v351
    %v1285 = vunpack.c.l.b16 %v352
    %v1286 = vunpack.c.h.b16 %v352
    %v1287 = vunpack.c.l.b16 %v353
    %v1288 = vunpack.c.h.b16 %v353
    %v1289 = vunpack.c.l.b16 %v354
    %v1290 = vunpack.c.h.b16 %v354
    %v1291 = vunpack.c.l.b16 %v355
    %v1292 = vunpack.c.h.b16 %v355
    %v1293 = vunpack.c.l.b16 %v356
    %v1294 = vunpack.c.h.b16 %v356
    %v1295 = vunpack.c.l.b16 %v357
    %v1296 = vunpack.c.h.b16 %v357
    %v1297 = vunpack.c.l.b16 %v358
    %v1298 = vunpack.c.h.b16 %v358
    %v1299 = vunpack.c.l.b16 %v359
    %v1300 = vunpack.c.h.b16 %v359
    %v1301 = vunpack.c.l.b16 %v360
    %v1302 = vunpack.c.h.b16 %v360
    %v1303 = vunpack.c.l.b16 %v361
    %v1304 = vunpack.c.h.b16 %v361
    %v1305 = vunpack.c.l.b16 %v362
    %v1306 = vunpack.c.h.b16 %v362
    %v1307 = vunpack.c.l.b16 %v363
    %v1308 = vunpack.c.h.b16 %v363
    %v1309 = vunpack.c.l.b16 %v364
    %v1310 = vunpack.c.h.b16 %v364
    %v1311 = vunpack.c.l.b16 %v365
    %v1312 = vunpack.c.h.b16 %v365
    %v1313 = vunpack.c.l.b16 %v366
    %v1314 = vunpack.c.h.b16 %v366
    %v1315 = vunpack.c.l.b16 %v367
    %v1316 = vunpack.c.h.b16 %v367
    %v1317 = vunpack.c.l.b16 %v368
    %v1318 = vunpack.c.h.b16 %v368
    %v1319 = vunpack.c.l.b16 %v369
    %v1320 = vunpack.c.h.b16 %v369
    %v1321 = vunpack.c.l.b16 %v370
    %v1322 = vunpack.c.h.b16 %v370
    %v1323 = vunpack.c.l.b16 %v371
    %v1324 = vunpack.c.h.b16 %v371
    %v1325 = vunpack.c.l.b16 %v372
    %v1326 = vunpack.c.h.b16 %v372
    %v1327 = vunpack.c.l.b16 %v373
    %v1328 = vunpack.c.h.b16 %v373
    %v1329 = vunpack.c.l.b16 %v374
    %v1330 = vunpack.c.h.b16 %v374
    %v1331 = vunpack.c.l.b16 %v375
    %v1332 = vunpack.c.h.b16 %v375
    %v1333 = vunpack.c.l.b16 %v376
    %v1334 = vunpack.c.h.b16 %v376
    %v1335 = vunpack.c.l.b16 %v377
    %v1336 = vunpack.c.h.b16 %v377
    %v1337 = vunpack.c.l.b16 %v378
    %v1338 = vunpack.c.h.b16 %v378
    %v1339 = vunpack.c.l.b16 %v379
    %v1340 = vunpack.c.h.b16 %v379
    %v1341 = vunpack.c.l.b16 %v380
    %v1342 = vunpack.c.h.b16 %v380
    %v1343 = vunpack.c.l.b16 %v381
    %v1344 = vunpack.c.h.b16 %v381
    %v1345 = vunpack.c.l.b16 %v382
    %v1346 = vunpack.c.h.b16 %v382
    %v1347 = vunpack.c.l.b16 %v383
    %v1348 = vunpack.c.h.b16 %v383
    %v1349 = vunpack.c.l.b16 %v384
    %v1350 = vunpack.c.h.b16 %v384
    %v1351 = vunpack.c.l.b16 %v385
    %v1352 = vunpack.c.h.b16 %v385
    %v1353 = vunpack.c.l.b16 %v386
    %v1354 = vunpack.c.h.b16 %v386
    %v1355 = vunpack.c.l.b16 %v387
    %v1356 = vunpack.c.h.b16 %v387
    %v1357 = vunpack.c.l.b16 %v388
    %v1358 = vunpack.c.h.b16 %v388
    %v1359 = vunpack.c.l.b16 %v389
    %v1360 = vunpack.c.h.b16 %v389
    %v1361 = vunpack.c.l.b16 %v390
    %v1362 = vunpack.c.h.b16 %v390
    %v1363 = vunpack.c.l.b16 %v391
    %v1364 = vunpack.c.h.b16 %v391
    %v1365 = vunpack.c.l.b16 %v392
    %v1366 = vunpack.c.h.b16 %v392
    %v1367 = vunpack.c.l.b16 %v393
    %v1368 = vunpack.c.h.b16 %v393
    %v1369 = vunpack.c.l.b16 %v394
    %v1370 = vunpack.c.h.b16 %v394
    %v1371 = vunpack.c.l.b16 %v395
    %v1372 = vunpack.c.h.b16 %v395
    %v1373 = vunpack.c.l.b16 %v396
    %v1374 = vunpack.c.h.b16 %v396
    %v1375 = vunpack.c.l.b16 %v397
    %v1376 = vunpack.c.h.b16 %v397
    %v1377 = vunpack.c.l.b16 %v398
    %v1378 = vunpack.c.h.b16 %v398
    %v1379 = vunpack.c.l.b16 %v399
    %v1380 = vunpack.c.h.b16 %v399
    %v1381 = vunpack.c.l.b16 %v400
    %v1382 = vunpack.c.h.b16 %v400
    %v1383 = vunpack.c.l.b16 %v401
    %v1384 = vunpack.c.h.b16 %v401
    %v1385 = vunpack.c.l.b16 %v402
    %v1386 = vunpack.c.h.b16 %v402
    %v1387 = vunpack.c.l.b16 %v403
    %v1388 = vunpack.c.h.b16 %v403
    %v1389 = vunpack.c.l.b16 %v404
    %v1390 = vunpack.c.h.b16 %v404
    %v1391 = vunpack.c.l.b16 %v405
    %v1392 = vunpack.c.h.b16 %v405
    %v1393 = vunpack.c.l.b16 %v406
    %v1394 = vunpack.c.h.b16 %v406
    %v1395 = vunpack.c.l.b16 %v407
    %v1396 = vunpack.c.h.b16 %v407
    %v1397 = vunpack.c.l.b16 %v408
    %v1398 = vunpack.c.h.b16 %v408
    %v1399 = vunpack.c.l.b16 %v409
    %v1400 = vunpack.c.h.b16 %v409
    %v1401 = vunpack.c.l.b16 %v410
    %v1402 = vunpack.c.h.b16 %v410
    %v1403 = vunpack.c.l.b16 %v411
    %v1404 = vunpack.c.h.b16 %v411
    %v1405 = vunpack.c.l.b16 %v412
    %v1406 = vunpack.c.h.b16 %v412
    %v1407 = vunpack.c.l.b16 %v413
    %v1408 = vunpack.c.h.b16 %v413
    %v1409 = vunpack.c.l.b16 %v414
    %v1410 = vunpack.c.h.b16 %v414
    %v1411 = vunpack.c.l.b16 %v415
    %v1412 = vunpack.c.h.b16 %v415
    %v1413 = vunpack.c.l.b16 %v416
    %v1414 = vunpack.c.h.b16 %v416
    %v1415 = vunpack.c.l.b16 %v417
    %v1416 = vunpack.c.h.b16 %v417
    %v1417 = vunpack.c.l.b16 %v418
    %v1418 = vunpack.c.h.b16 %v418
    %v1419 = vunpack.c.l.b16 %v419
    %v1420 = vunpack.c.h.b16 %v419
    %v1421 = vunpack.c.l.b16 %v420
    %v1422 = vunpack.c.h.b16 %v420
    %v1423 = vunpack.c.l.b16 %v421
    %v1424 = vunpack.c.h.b16 %v421
    %v1425 = vunpack.c.l.b16 %v422
    %v1426 = vunpack.c.h.b16 %v422
    %v1427 = vunpack.c.l.b16 %v423
    %v1428 = vunpack.c.h.b16 %v423
    %v1429 = vunpack.c.l.b16 %v424
    %v1430 = vunpack.c.h.b16 %v424
    %v1431 = vunpack.c.l.b16 %v425
    %v1432 = vunpack.c.h.b16 %v425
    %v1433 = vunpack.c.l.b16 %v426
    %v1434 = vunpack.c.h.b16 %v426
    %v1435 = vunpack.c.l.b16 %v427
    %v1436 = vunpack.c.h.b16 %v427
    %v1437 = vunpack.c.l.b16 %v428
    %v1438 = vunpack.c.h.b16 %v428
    %v1439 = vunpack.c.l.b16 %v429
    %v1440 = vunpack.c.h.b16 %v429
    %v1441 = vunpack.c.l.b16 %v430
    %v1442 = vunpack.c.h.b16 %v430
    %v1443 = vunpack.c.l.b16 %v431
    %v1444 = vunpack.c.h.b16 %v431
    %v1445 = vunpack.c.l.b16 %v432
    %v1446 = vunpack.c.h.b16 %v432
    %v1447 = vunpack.c.l.b16 %v433
    %v1448 = vunpack.c.h.b16 %v433
    %v1449 = vunpack.c.l.b16 %v434
    %v1450 = vunpack.c.h.b16 %v434
    %v1451 = vunpack.c.l.b16 %v435
    %v1452 = vunpack.c.h.b16 %v435
    %v1453 = vunpack.c.l.b16 %v436
    %v1454 = vunpack.c.h.b16 %v436
    %v1455 = vunpack.c.l.b16 %v437
    %v1456 = vunpack.c.h.b16 %v437
    %v1457 = vunpack.c.l.b16 %v438
    %v1458 = vunpack.c.h.b16 %v438
    %v1459 = vunpack.c.l.b16 %v439
    %v1460 = vunpack.c.h.b16 %v439
    %v1461 = vunpack.c.l.b16 %v440
    %v1462 = vunpack.c.h.b16 %v440
    %v1463 = vunpack.c.l.b16 %v441
    %v1464 = vunpack.c.h.b16 %v441
    %v1465 = vunpack.c.l.b16 %v442
    %v1466 = vunpack.c.h.b16 %v442
    %v1467 = vunpack.c.l.b16 %v443
    %v1468 = vunpack.c.h.b16 %v443
    %v1469 = vunpack.c.l.b16 %v444
    %v1470 = vunpack.c.h.b16 %v444
    %v1471 = vunpack.c.l.b16 %v445
    %v1472 = vunpack.c.h.b16 %v445
    %v1473 = vunpack.c.l.b16 %v446
    %v1474 = vunpack.c.h.b16 %v446
    %v1475 = vunpack.c.l.b16 %v447
    %v1476 = vunpack.c.h.b16 %v447
    %v1477 = vunpack.c.l.b16 %v448
    %v1478 = vunpack.c.h.b16 %v448
    %v1479 = vunpack.c.l.b16 %v449
    %v1480 = vunpack.c.h.b16 %v449
    %v1481 = vunpack.c.l.b16 %v450
    %v1482 = vunpack.c.h.b16 %v450
    %v1483 = vunpack.c.l.b16 %v451
    %v1484 = vunpack.c.h.b16 %v451
    %v1485 = vunpack.c.l.b16 %v452
    %v1486 = vunpack.c.h.b16 %v452
    %v1487 = vunpack.c.l.b16 %v453
    %v1488 = vunpack.c.h.b16 %v453
    %v1489 = vunpack.c.l.b16 %v454
    %v1490 = vunpack.c.h.b16 %v454
    %v1491 = vunpack.c.l.b16 %v455
    %v1492 = vunpack.c.h.b16 %v455
    %v1493 = vunpack.c.l.b16 %v456
    %v1494 = vunpack.c.h.b16 %v456
    %v1495 = vunpack.c.l.b16 %v457
    %v1496 = vunpack.c.h.b16 %v457
    %v1497 = vunpack.c.l.b16 %v458
    %v1498 = vunpack.c.h.b16 %v458
    %v1499 = vunpack.c.l.b16 %v459
    %v1500 = vunpack.c.h.b16 %v459
    %v1501 = vunpack.c.l.b16 %v460
    %v1502 = vunpack.c.h.b16 %v460
    %v1503 = vunpack.c.l.b16 %v461
    %v1504 = vunpack.c.h.b16 %v461
    %v1505 = vunpack.c.l.b16 %v462
    %v1506 = vunpack.c.h.b16 %v462
    %v1507 = vunpack.c.l.b16 %v463
    %v1508 = vunpack.c.h.b16 %v463
    %v1509 = vunpack.c.l.b16 %v464
    %v1510 = vunpack.c.h.b16 %v464
    %v1511 = vunpack.c.l.b16 %v465
    %v1512 = vunpack.c.h.b16 %v465
    %v1513 = vunpack.c.l.b16 %v466
    %v1514 = vunpack.c.h.b16 %v466
    %v1515 = vunpack.c.l.b16 %v467
    %v1516 = vunpack.c.h.b16 %v467
    %v1517 = vunpack.c.l.b16 %v468
    %v1518 = vunpack.c.h.b16 %v468
    %v1519 = vunpack.c.l.b16 %v469
    %v1520 = vunpack.c.h.b16 %v469
    %v1521 = vunpack.c.l.b16 %v470
    %v1522 = vunpack.c.h.b16 %v470
    %v1523 = vunpack.c.l.b16 %v471
    %v1524 = vunpack.c.h.b16 %v471
    %v1525 = vunpack.c.l.b16 %v472
    %v1526 = vunpack.c.h.b16 %v472
    %v1527 = vunpack.c.l.b16 %v473
    %v1528 = vunpack.c.h.b16 %v473
    %v1529 = vunpack.c.l.b16 %v474
    %v1530 = vunpack.c.h.b16 %v474
    %v1531 = vunpack.c.l.b16 %v475
    %v1532 = vunpack.c.h.b16 %v475
    %v1533 = vunpack.c.l.b16 %v476
    %v1534 = vunpack.c.h.b16 %v476
    %v1535 = vunpack.c.l.b16 %v477
    %v1536 = vunpack.c.h.b16 %v477
    %v1537 = vunpack.c.l.b16 %v478
    %v1538 = vunpack.c.h.b16 %v478
    %v1539 = vunpack.c.l.b16 %v479
    %v1540 = vunpack.c.h.b16 %v479
    %v1541 = vunpack.c.l.b16 %v480
    %v1542 = vunpack.c.h.b16 %v480
    %v1543 = vunpack.c.l.b16 %v481
    %v1544 = vunpack.c.h.b16 %v481
    %v1545 = vunpack.c.l.b16 %v482
    %v1546 = vunpack.c.h.b16 %v482
    %v1547 = vunpack.c.l.b16 %v483
    %v1548 = vunpack.c.h.b16 %v483
    %v1549 = vunpack.c.l.b16 %v484
    %v1550 = vunpack.c.h.b16 %v484
    %v1551 = vunpack.c.l.b16 %v485
    %v1552 = vunpack.c.h.b16 %v485
    %v1553 = vunpack.c.l.b16 %v486
    %v1554 = vunpack.c.h.b16 %v486
    %v1555 = vunpack.c.l.b16 %v487
    %v1556 = vunpack.c.h.b16 %v487
    %v1557 = vunpack.c.l.b16 %v488
    %v1558 = vunpack.c.h.b16 %v488
    %v1559 = vunpack.c.l.b16 %v489
    %v1560 = vunpack.c.h.b16 %v489
    %v1561 = vunpack.c.l.b16 %v490
    %v1562 = vunpack.c.h.b16 %v490
    %v1563 = vunpack.c.l.b16 %v491
    %v1564 = vunpack.c.h.b16 %v491
    %v1565 = vunpack.c.l.b16 %v492
    %v1566 = vunpack.c.h.b16 %v492
    %v1567 = vunpack.c.l.b16 %v493
    %v1568 = vunpack.c.h.b16 %v493
    %v1569 = vunpack.c.l.b16 %v494
    %v1570 = vunpack.c.h.b16 %v494
    %v1571 = vunpack.c.l.b16 %v495
    %v1572 = vunpack.c.h.b16 %v495
    %v1573 = vunpack.c.l.b16 %v496
    %v1574 = vunpack.c.h.b16 %v496
    %v1575 = vunpack.c.l.b16 %v497
    %v1576 = vunpack.c.h.b16 %v497
    %v1577 = vunpack.c.l.b16 %v498
    %v1578 = vunpack.c.h.b16 %v498
    %v1579 = vunpack.c.l.b16 %v499
    %v1580 = vunpack.c.h.b16 %v499
    %v1581 = vunpack.c.l.b16 %v500
    %v1582 = vunpack.c.h.b16 %v500
    %v1583 = vunpack.c.l.b16 %v501
    %v1584 = vunpack.c.h.b16 %v501
    %v1585 = vunpack.c.l.b16 %v502
    %v1586 = vunpack.c.h.b16 %v502
    %v1587 = vunpack.c.l.b16 %v503
    %v1588 = vunpack.c.h.b16 %v503
    %v1589 = vunpack.c.l.b16 %v504
    %v1590 = vunpack.c.h.b16 %v504
    %v1591 = vunpack.c.l.b16 %v505
    %v1592 = vunpack.c.h.b16 %v505
    %v1593 = vunpack.c.l.b16 %v506
    %v1594 = vunpack.c.h.b16 %v506
    %v1595 = vunpack.c.l.b16 %v507
    %v1596 = vunpack.c.h.b16 %v507
    %v1597 = vunpack.c.l.b16 %v508
    %v1598 = vunpack.c.h.b16 %v508
    %v1599 = vunpack.c.l.b16 %v509
    %v1600 = vunpack.c.h.b16 %v509
    %v1601 = vunpack.c.l.b16 %v510
    %v1602 = vunpack.c.h.b16 %v510
    %v1603 = vunpack.c.l.b16 %v511
    %v1604 = vunpack.c.h.b16 %v511
    %v1605 = vunpack.c.l.b16 %v512
    %v1606 = vunpack.c.h.b16 %v512
    %v1607 = vunpack.c.l.b16 %v513
    %v1608 = vunpack.c.h.b16 %v513
    %v1609 = vunpack.c.l.b16 %v514
    %v1610 = vunpack.c.h.b16 %v514
    %v1611 = vunpack.c.l.b16 %v515
    %v1612 = vunpack.c.h.b16 %v515
    %v1613 = vunpack.c.l.b16 %v516
    %v1614 = vunpack.c.h.b16 %v516
    %v1615 = vunpack.c.l.b16 %v517
    %v1616 = vunpack.c.h.b16 %v517
    %v1617 = vunpack.c.l.b16 %v518
    %v1618 = vunpack.c.h.b16 %v518
    %v1619 = vunpack.c.l.b16 %v519
    %v1620 = vunpack.c.h.b16 %v519
    %v1621 = vunpack.c.l.b16 %v520
    %v1622 = vunpack.c.h.b16 %v520
    %v1623 = vunpack.c.l.b16 %v521
    %v1624 = vunpack.c.h.b16 %v521
    %v1625 = vunpack.c.l.b16 %v522
    %v1626 = vunpack.c.h.b16 %v522
    %v1627 = vunpack.c.l.b16 %v523
    %v1628 = vunpack.c.h.b16 %v523
    %v1629 = vunpack.c.l.b16 %v524
    %v1630 = vunpack.c.h.b16 %v524
    %v1631 = vunpack.c.l.b16 %v525
    %v1632 = vunpack.c.h.b16 %v525
    %v1633 = vunpack.c.l.b16 %v526
    %v1634 = vunpack.c.h.b16 %v526
    %v1635 = vunpack.c.l.b16 %v527
    %v1636 = vunpack.c.h.b16 %v527
    %v1637 = vunpack.c.l.b16 %v528
    %v1638 = vunpack.c.h.b16 %v528
    %v1639 = vunpack.c.l.b16 %v529
    %v1640 = vunpack.c.h.b16 %v529
    %v1641 = vunpack.c.l.b16 %v530
    %v1642 = vunpack.c.h.b16 %v530
    %v1643 = vunpack.c.l.b16 %v531
    %v1644 = vunpack.c.h.b16 %v531
    %v1645 = vunpack.c.l.b16 %v532
    %v1646 = vunpack.c.h.b16 %v532
    %v1647 = vunpack.c.l.b16 %v533
    %v1648 = vunpack.c.h.b16 %v533
    %v1649 = vunpack.c.l.b16 %v534
    %v1650 = vunpack.c.h.b16 %v534
    %v1651 = vunpack.c.l.b16 %v535
    %v1652 = vunpack.c.h.b16 %v535
    %v1653 = vunpack.c.l.b16 %v536
    %v1654 = vunpack.c.h.b16 %v536
    %v1655 = vunpack.c.l.b16 %v537
    %v1656 = vunpack.c.h.b16 %v537
    %v1657 = vunpack.c.l.b16 %v538
    %v1658 = vunpack.c.h.b16 %v538
    %v1659 = vunpack.c.l.b16 %v539
    %v1660 = vunpack.c.h.b16 %v539
    %v1661 = vunpack.c.l.b16 %v540
    %v1662 = vunpack.c.h.b16 %v540
    %v1663 = vunpack.c.l.b16 %v541
    %v1664 = vunpack.c.h.b16 %v541
    %v1665 = vunpack.c.l.b16 %v542
    %v1666 = vunpack.c.h.b16 %v542
    %v1667 = vunpack.c.l.b16 %v543
    %v1668 = vunpack.c.h.b16 %v543
    %v1669 = vunpack.c.l.b16 %v544
    %v1670 = vunpack.c.h.b16 %v544
    %v1671 = vunpack.c.l.b16 %v545
    %v1672 = vunpack.c.h.b16 %v545
    %v1673 = vunpack.c.l.b16 %v546
    %v1674 = vunpack.c.h.b16 %v546
    %v1675 = vunpack.c.l.b16 %v547
    %v1676 = vunpack.c.h.b16 %v547
    %v1677 = vunpack.c.l.b16 %v548
    %v1678 = vunpack.c.h.b16 %v548
    %v1679 = vunpack.c.l.b16 %v549
    %v1680 = vunpack.c.h.b16 %v549
    %v1681 = vunpack.c.l.b16 %v550
    %v1682 = vunpack.c.h.b16 %v550
    %v1683 = vunpack.c.l.b16 %v551
    %v1684 = vunpack.c.h.b16 %v551
    %v1685 = vunpack.c.l.b16 %v552
    %v1686 = vunpack.c.h.b16 %v552
    %v1687 = vunpack.c.l.b16 %v553
    %v1688 = vunpack.c.h.b16 %v553
    %v1689 = vunpack.c.l.b16 %v554
    %v1690 = vunpack.c.h.b16 %v554
    %v1691 = vunpack.c.l.b16 %v555
    %v1692 = vunpack.c.h.b16 %v555
    %v1693 = vunpack.c.l.b16 %v556
    %v1694 = vunpack.c.h.b16 %v556
    %v1695 = vunpack.c.l.b16 %v557
    %v1696 = vunpack.c.h.b16 %v557
    %v1697 = vunpack.c.l.b16 %v558
    %v1698 = vunpack.c.h.b16 %v558
    %v1699 = vunpack.c.l.b16 %v559
    %v1700 = vunpack.c.h.b16 %v559
    %v1701 = vunpack.c.l.b16 %v560
    %v1702 = vunpack.c.h.b16 %v560
    %v1703 = vunpack.c.l.b16 %v561
    %v1704 = vunpack.c.h.b16 %v561
    %v1705 = vunpack.c.l.b16 %v562
    %v1706 = vunpack.c.h.b16 %v562
    %v1707 = vunpack.c.l.b16 %v563
    %v1708 = vunpack.c.h.b16 %v563
    %v1709 = vunpack.c.l.b16 %v564
    %v1710 = vunpack.c.h.b16 %v564
    %v1711 = vunpack.c.l.b16 %v565
    %v1712 = vunpack.c.h.b16 %v565
    %v1713 = vunpack.c.l.b16 %v566
    %v1714 = vunpack.c.h.b16 %v566
    %v1715 = vunpack.c.l.b16 %v567
    %v1716 = vunpack.c.h.b16 %v567
    %v1717 = vunpack.c.l.b16 %v568
    %v1718 = vunpack.c.h.b16 %v568
    %v1719 = vunpack.c.l.b16 %v569
    %v1720 = vunpack.c.h.b16 %v569
    %v1721 = vunpack.c.l.b16 %v570
    %v1722 = vunpack.c.h.b16 %v570
    %v1723 = vunpack.c.l.b16 %v571
    %v1724 = vunpack.c.h.b16 %v571
    %v1725 = vunpack.c.l.b16 %v572
    %v1726 = vunpack.c.h.b16 %v572
    %v1727 = vunpack.c.l.b16 %v573
    %v1728 = vunpack.c.h.b16 %v573
    %v1729 = vunpack.c.l.b16 %v574
    %v1730 = vunpack.c.h.b16 %v574
    %v1731 = vunpack.c.l.b16 %v575
    %v1732 = vunpack.c.h.b16 %v575
    %v1733 = vunpack.c.l.b16 %v576
    %v1734 = vunpack.c.h.b16 %v576
    %v1735 = vunpack.c.l.b16 %v577
    %v1736 = vunpack.c.h.b16 %v577
    %v1737 = vunpack.c.l.b16 %v578
    %v1738 = vunpack.c.h.b16 %v578
    %v1739 = vunpack.c.l.b16 %v579
    %v1740 = vunpack.c.h.b16 %v579
    %v1741 = vunpack.c.l.b16 %v580
    %v1742 = vunpack.c.h.b16 %v580
    %v1743 = vunpack.c.l.b16 %v581
    %v1744 = vunpack.c.h.b16 %v581
    %v1745 = vunpack.c.l.b16 %v582
    %v1746 = vunpack.c.h.b16 %v582
    %v1747 = vunpack.c.l.b16 %v583
    %v1748 = vunpack.c.h.b16 %v583
    %v1749 = vunpack.c.l.b16 %v584
    %v1750 = vunpack.c.h.b16 %v584
    %v1751 = vunpack.c.l.b16 %v585
    %v1752 = vunpack.c.h.b16 %v585
    %v1753 = vunpack.c.l.b16 %v586
    %v1754 = vunpack.c.h.b16 %v586
    %v1755 = vpack.c.b16 %v995, %v987
    %v1756 = vpack.c.b16 %v996, %v988
    %v1757 = vpack.c.b16 %v997, %v989
    %v1758 = vpack.c.b16 %v998, %v990
    %v1759 = vpack.c.b16 %v999, %v991
    %v1760 = vpack.c.b16 %v1000, %v992
    %v1761 = vpack.c.b16 %v1001, %v993
    %v1762 = vpack.c.b16 %v1002, %v994
    %v1763 = vpack.c.b16 %v1011, %v1003
    %v1764 = vpack.c.b16 %v1012, %v1004
    %v1765 = vpack.c.b16 %v1013, %v1005
    %v1766 = vpack.c.b16 %v1014, %v1006
    %v1767 = vpack.c.b16 %v1015, %v1007
    %v1768 = vpack.c.b16 %v1016, %v1008
    %v1769 = vpack.c.b16 %v1017, %v1009
    %v1770 = vpack.c.b16 %v1018, %v1010
    %v1771 = vpack.c.b16 %v1027, %v1019
    %v1772 = vpack.c.b16 %v1028, %v1020
    %v1773 = vpack.c.b16 %v1029, %v1021
    %v1774 = vpack.c.b16 %v1030, %v1022
    %v1775 = vpack.c.b16 %v1031, %v1023
    %v1776 = vpack.c.b16 %v1032, %v1024
    %v1777 = vpack.c.b16 %v1033, %v1025
    %v1778 = vpack.c.b16 %v1034, %v1026
    %v1779 = vpack.c.b16 %v1043, %v1035
    %v1780 = vpack.c.b16 %v1044, %v1036
    %v1781 = vpack.c.b16 %v1045, %v1037
    %v1782 = vpack.c.b16 %v1046, %v1038
    %v1783 = vpack.c.b16 %v1047, %v1039
    %v1784 = vpack.c.b16 %v1048, %v1040
    %v1785 = vpack.c.b16 %v1049, %v1041
    %v1786 = vpack.c.b16 %v1050, %v1042
    %v1787 = vpack.c.b16 %v1059, %v1051
    %v1788 = vpack.c.b16 %v1060, %v1052
    %v1789 = vpack.c.b16 %v1061, %v1053
    %v1790 = vpack.c.b16 %v1062, %v1054
    %v1791 = vpack.c.b16 %v1063, %v1055
    %v1792 = vpack.c.b16 %v1064, %v1056
    %v1793 = vpack.c.b16 %v1065, %v1057
    %v1794 = vpack.c.b16 %v1066, %v1058
    %v1795 = vpack.c.b16 %v1075, %v1067
    %v1796 = vpack.c.b16 %v1076, %v1068
    %v1797 = vpack.c.b16 %v1077, %v1069
    %v1798 = vpack.c.b16 %v1078, %v1070
    %v1799 = vpack.c.b16 %v1079, %v1071
    %v1800 = vpack.c.b16 %v1080, %v1072
    %v1801 = vpack.c.b16 %v1081, %v1073
    %v1802 = vpack.c.b16 %v1082, %v1074
    %v1803 = vpack.c.b16 %v1091, %v1083
    %v1804 = vpack.c.b16 %v1092, %v1084
    %v1805 = vpack.c.b16 %v1093, %v1085
    %v1806 = vpack.c.b16 %v1094, %v1086
    %v1807 = vpack.c.b16 %v1095, %v1087
    %v1808 = vpack.c.b16 %v1096, %v1088
    %v1809 = vpack.c.b16 %v1097, %v1089
    %v1810 = vpack.c.b16 %v1098, %v1090
    %v1811 = vpack.c.b16 %v1107, %v1099
    %v1812 = vpack.c.b16 %v1108, %v1100
    %v1813 = vpack.c.b16 %v1109, %v1101
    %v1814 = vpack.c.b16 %v1110, %v1102
    %v1815 = vpack.c.b16 %v1111, %v1103
    %v1816 = vpack.c.b16 %v1112, %v1104
    %v1817 = vpack.c.b16 %v1113, %v1105
    %v1818 = vpack.c.b16 %v1114, %v1106
    %v1819 = vpack.c.b16 %v1123, %v1115
    %v1820 = vpack.c.b16 %v1124, %v1116
    %v1821 = vpack.c.b16 %v1125, %v1117
    %v1822 = vpack.c.b16 %v1126, %v1118
    %v1823 = vpack.c.b16 %v1127, %v1119
    %v1824 = vpack.c.b16 %v1128, %v1120
    %v1825 = vpack.c.b16 %v1129, %v1121
    %v1826 = vpack.c.b16 %v1130, %v1122
    %v1827 = vpack.c.b16 %v1139, %v1131
    %v1828 = vpack.c.b16 %v1140, %v1132
    %v1829 = vpack.c.b16 %v1141, %v1133
    %v1830 = vpack.c.b16 %v1142, %v1134
    %v1831 = vpack.c.b16 %v1143, %v1135
    %v1832 = vpack.c.b16 %v1144, %v1136
    %v1833 = vpack.c.b16 %v1145, %v1137
    %v1834 = vpack.c.b16 %v1146, %v1138
    %v1835 = vpack.c.b16 %v1155, %v1147
    %v1836 = vpack.c.b16 %v1156, %v1148
    %v1837 = vpack.c.b16 %v1157, %v1149
    %v1838 = vpack.c.b16 %v1158, %v1150
    %v1839 = vpack.c.b16 %v1159, %v1151
    %v1840 = vpack.c.b16 %v1160, %v1152
    %v1841 = vpack.c.b16 %v1161, %v1153
    %v1842 = vpack.c.b16 %v1162, %v1154
    %v1843 = vpack.c.b16 %v1171, %v1163
    %v1844 = vpack.c.b16 %v1172, %v1164
    %v1845 = vpack.c.b16 %v1173, %v1165
    %v1846 = vpack.c.b16 %v1174, %v1166
    %v1847 = vpack.c.b16 %v1175, %v1167
    %v1848 = vpack.c.b16 %v1176, %v1168
    %v1849 = vpack.c.b16 %v1177, %v1169
    %v1850 = vpack.c.b16 %v1178, %v1170
    %v1851 = vpack.c.b16 %v1187, %v1179
    %v1852 = vpack.c.b16 %v1188, %v1180
    %v1853 = vpack.c.b16 %v1189, %v1181
    %v1854 = vpack.c.b16 %v1190, %v1182
    %v1855 = vpack.c.b16 %v1191, %v1183
    %v1856 = vpack.c.b16 %v1192, %v1184
    %v1857 = vpack.c.b16 %v1193, %v1185
    %v1858 = vpack.c.b16 %v1194, %v1186
    %v1859 = vpack.c.b16 %v1203, %v1195
    %v1860 = vpack.c.b16 %v1204, %v1196
    %v1861 = vpack.c.b16 %v1205, %v1197
    %v1862 = vpack.c.b16 %v1206, %v1198
    %v1863 = vpack.c.b16 %v1207, %v1199
    %v1864 = vpack.c.b16 %v1208, %v1200
    %v1865 = vpack.c.b16 %v1209, %v1201
    %v1866 = vpack.c.b16 %v1210, %v1202
    %v1867 = vpack.c.b16 %v1219, %v1211
    %v1868 = vpack.c.b16 %v1220, %v1212
    %v1869 = vpack.c.b16 %v1221, %v1213
    %v1870 = vpack.c.b16 %v1222, %v1214
    %v1871 = vpack.c.b16 %v1223, %v1215
    %v1872 = vpack.c.b16 %v1224, %v1216
    %v1873 = vpack.c.b16 %v1225, %v1217
    %v1874 = vpack.c.b16 %v1226, %v1218
    %v1875 = vpack.c.b16 %v1235, %v1227
    %v1876 = vpack.c.b16 %v1236, %v1228
    %v1877 = vpack.c.b16 %v1237, %v1229
    %v1878 = vpack.c.b16 %v1238, %v1230
    %v1879 = vpack.c.b16 %v1239, %v1231
    %v1880 = vpack.c.b16 %v1240, %v1232
    %v1881 = vpack.c.b16 %v1241, %v1233
    %v1882 = vpack.c.b16 %v1242, %v1234
    %v1883 = vpack.c.b16 %v1251, %v1243
    %v1884 = vpack.c.b16 %v1252, %v1244
    %v1885 = vpack.c.b16 %v1253, %v1245
    %v1886 = vpack.c.b16 %v1254, %v1246
    %v1887 = vpack.c.b16 %v1255, %v1247
    %v1888 = vpack.c.b16 %v1256, %v1248
    %v1889 = vpack.c.b16 %v1257, %v1249
    %v1890 = vpack.c.b16 %v1258, %v1250
    %v1891 = vpack.c.b16 %v1267, %v1259
    %v1892 = vpack.c.b16 %v1268, %v1260
    %v1893 = vpack.c.b16 %v1269, %v1261
    %v1894 = vpack.c.b16 %v1270, %v1262
    %v1895 = vpack.c.b16 %v1271, %v1263
    %v1896 = vpack.c.b16 %v1272, %v1264
    %v1897 = vpack.c.b16 %v1273, %v1265
    %v1898 = vpack.c.b16 %v1274, %v1266
    %v1899 = vpack.c.b16 %v1283, %v1275
    %v1900 = vpack.c.b16 %v1284, %v1276
    %v1901 = vpack.c.b16 %v1285, %v1277
    %v1902 = vpack.c.b16 %v1286, %v1278
    %v1903 = vpack.c.b16 %v1287, %v1279
    %v1904 = vpack.c.b16 %v1288, %v1280
    %v1905 = vpack.c.b16 %v1289, %v1281
    %v1906 = vpack.c.b16 %v1290, %v1282
    %v1907 = vpack.c.b16 %v1299, %v1291
    %v1908 = vpack.c.b16 %v1300, %v1292
    %v1909 = vpack.c.b16 %v1301, %v1293
    %v1910 = vpack.c.b16 %v1302, %v1294
    %v1911 = vpack.c.b16 %v1303, %v1295
    %v1912 = vpack.c.b16 %v1304, %v1296
    %v1913 = vpack.c.b16 %v1305, %v1297
    %v1914 = vpack.c.b16 %v1306, %v1298
    %v1915 = vpack.c.b16 %v1315, %v1307
    %v1916 = vpack.c.b16 %v1316, %v1308
    %v1917 = vpack.c.b16 %v1317, %v1309
    %v1918 = vpack.c.b16 %v1318, %v1310
    %v1919 = vpack.c.b16 %v1319, %v1311
    %v1920 = vpack.c.b16 %v1320, %v1312
    %v1921 = vpack.c.b16 %v1321, %v1313
    %v1922 = vpack.c.b16 %v1322, %v1314
    %v1923 = vpack.c.b16 %v1331, %v1323
    %v1924 = vpack.c.b16 %v1332, %v1324
    %v1925 = vpack.c.b16 %v1333, %v1325
    %v1926 = vpack.c.b16 %v1334, %v1326
    %v1927 = vpack.c.b16 %v1335, %v1327
    %v1928 = vpack.c.b16 %v1336, %v1328
    %v1929 = vpack.c.b16 %v1337, %v1329
    %v1930 = vpack.c.b16 %v1338, %v1330
    %v1931 = vpack.c.b16 %v1347, %v1339
    %v1932 = vpack.c.b16 %v1348, %v1340
    %v1933 = vpack.c.b16 %v1349, %v1341
    %v1934 = vpack.c.b16 %v1350, %v1342
    %v1935 = vpack.c.b16 %v1351, %v1343
    %v1936 = vpack.c.b16 %v1352, %v1344
    %v1937 = vpack.c.b16 %v1353, %v1345
    %v1938 = vpack.c.b16 %v1354, %v1346
    %v1939 = vpack.c.b16 %v1363, %v1355
    %v1940 = vpack.c.b16 %v1364, %v1356
    %v1941 = vpack.c.b16 %v1365, %v1357
    %v1942 = vpack.c.b16 %v1366, %v1358
    %v1943 = vpack.c.b16 %v1367, %v1359
    %v1944 = vpack.c.b16 %v1368, %v1360
    %v1945 = vpack.c.b16 %v1369, %v1361
    %v1946 = vpack.c.b16 %v1370, %v1362
    %v1947 = vpack.c.b16 %v1379, %v1371
    %v1948 = vpack.c.b16 %v1380, %v1372
    %v1949 = vpack.c.b16 %v1381, %v1373
    %v1950 = vpack.c.b16 %v1382, %v1374
    %v1951 = vpack.c.b16 %v1383, %v1375
    %v1952 = vpack.c.b16 %v1384, %v1376
    %v1953 = vpack.c.b16 %v1385, %v1377
    %v1954 = vpack.c.b16 %v1386, %v1378
    %v1955 = vpack.c.b16 %v1395, %v1387
    %v1956 = vpack.c.b16 %v1396, %v1388
    %v1957 = vpack.c.b16 %v1397, %v1389
    %v1958 = vpack.c.b16 %v1398, %v1390
    %v1959 = vpack.c.b16 %v1399, %v1391
    %v1960 = vpack.c.b16 %v1400, %v1392
    %v1961 = vpack.c.b16 %v1401, %v1393
    %v1962 = vpack.c.b16 %v1402, %v1394
    %v1963 = vpack.c.b16 %v1411, %v1403
    %v1964 = vpack.c.b16 %v1412, %v1404
    %v1965 = vpack.c.b16 %v1413, %v1405
    %v1966 = vpack.c.b16 %v1414, %v1406
    %v1967 = vpack.c.b16 %v1415, %v1407
    %v1968 = vpack.c.b16 %v1416, %v1408
    %v1969 = vpack.c.b16 %v1417, %v1409
    %v1970 = vpack.c.b16 %v1418, %v1410
    %v1971 = vpack.c.b16 %v1427, %v1419
    %v1972 = vpack.c.b16 %v1428, %v1420
    %v1973 = vpack.c.b16 %v1429, %v1421
    %v1974 = vpack.c.b16 %v1430, %v1422
    %v1975 = vpack.c.b16 %v1431, %v1423
    %v1976 = vpack.c.b16 %v1432, %v1424
    %v1977 = vpack.c.b16 %v1433, %v1425
    %v1978 = vpack.c.b16 %v1434, %v1426
    %v1979 = vpack.c.b16 %v1443, %v1435
    %v1980 = vpack.c.b16 %v1444, %v1436
    %v1981 = vpack.c.b16 %v1445, %v1437
    %v1982 = vpack.c.b16 %v1446, %v1438
    %v1983 = vpack.c.b16 %v1447, %v1439
    %v1984 = vpack.c.b16 %v1448, %v1440
    %v1985 = vpack.c.b16 %v1449, %v1441
    %v1986 = vpack.c.b16 %v1450, %v1442
    %v1987 = vpack.c.b16 %v1459, %v1451
    %v1988 = vpack.c.b16 %v1460, %v1452
    %v1989 = vpack.c.b16 %v1461, %v1453
    %v1990 = vpack.c.b16 %v1462, %v1454
    %v1991 = vpack.c.b16 %v1463, %v1455
    %v1992 = vpack.c.b16 %v1464, %v1456
    %v1993 = vpack.c.b16 %v1465, %v1457
    %v1994 = vpack.c.b16 %v1466, %v1458
    %v1995 = vpack.c.b16 %v1475, %v1467
    %v1996 = vpack.c.b16 %v1476, %v1468
    %v1997 = vpack.c.b16 %v1477, %v1469
    %v1998 = vpack.c.b16 %v1478, %v1470
    %v1999 = vpack.c.b16 %v1479, %v1471
    %v2000 = vpack.c.b16 %v1480, %v1472
    %v2001 = vpack.c.b16 %v1481, %v1473
    %v2002 = vpack.c.b16 %v1482, %v1474
    %v2003 = vpack.c.b16 %v1491, %v1483
    %v2004 = vpack.c.b16 %v1492, %v1484
    %v2005 = vpack.c.b16 %v1493, %v1485
    %v2006 = vpack.c.b16 %v1494, %v1486
    %v2007 = vpack.c.b16 %v1495, %v1487
    %v2008 = vpack.c.b16 %v1496, %v1488
    %v2009 = vpack.c.b16 %v1497, %v1489
    %v2010 = vpack.c.b16 %v1498, %v1490
    %v2011 = vpack.c.b16 %v1507, %v1499
    %v2012 = vpack.c.b16 %v1508, %v1500
    %v2013 = vpack.c.b16 %v1509, %v1501
    %v2014 = vpack.c.b16 %v1510, %v1502
    %v2015 = vpack.c.b16 %v1511, %v1503
    %v2016 = vpack.c.b16 %v1512, %v1504
    %v2017 = vpack.c.b16 %v1513, %v1505
    %v2018 = vpack.c.b16 %v1514, %v1506
    %v2019 = vpack.c.b16 %v1523, %v1515
    %v2020 = vpack.c.b16 %v1524, %v1516
    %v2021 = vpack.c.b16 %v1525, %v1517
    %v2022 = vpack.c.b16 %v1526, %v1518
    %v2023 = vpack.c.b16 %v1527, %v1519
    %v2024 = vpack.c.b16 %v1528, %v1520
    %v2025 = vpack.c.b16 %v1529, %v1521
    %v2026 = vpack.c.b16 %v1530, %v1522
    %v2027 = vpack.c.b16 %v1539, %v1531
    %v2028 = vpack.c.b16 %v1540, %v1532
    %v2029 = vpack.c.b16 %v1541, %v1533
    %v2030 = vpack.c.b16 %v1542, %v1534
    %v2031 = vpack.c.b16 %v1543, %v1535
    %v2032 = vpack.c.b16 %v1544, %v1536
    %v2033 = vpack.c.b16 %v1545, %v1537
    %v2034 = vpack.c.b16 %v1546, %v1538
    %v2035 = vpack.c.b16 %v1555, %v1547
    %v2036 = vpack.c.b16 %v1556, %v1548
    %v2037 = vpack.c.b16 %v1557, %v1549
    %v2038 = vpack.c.b16 %v1558, %v1550
    %v2039 = vpack.c.b16 %v1559, %v1551
    %v2040 = vpack.c.b16 %v1560, %v1552
    %v2041 = vpack.c.b16 %v1561, %v1553
    %v2042 = vpack.c.b16 %v1562, %v1554
    %v2043 = vpack.c.b16 %v1571, %v1563
    %v2044 = vpack.c.b16 %v1572, %v1564
    %v2045 = vpack.c.b16 %v1573, %v1565
    %v2046 = vpack.c.b16 %v1574, %v1566
    %v2047 = vpack.c.b16 %v1575, %v1567
    %v2048 = vpack.c.b16 %v1576, %v1568
    %v2049 = vpack.c.b16 %v1577, %v1569
    %v2050 = vpack.c.b16 %v1578, %v1570
    %v2051 = vpack.c.b16 %v1587, %v1579
    %v2052 = vpack.c.b16 %v1588, %v1580
    %v2053 = vpack.c.b16 %v1589, %v1581
    %v2054 = vpack.c.b16 %v1590, %v1582
    %v2055 = vpack.c.b16 %v1591, %v1583
    %v2056 = vpack.c.b16 %v1592, %v1584
    %v2057 = vpack.c.b16 %v1593, %v1585
    %v2058 = vpack.c.b16 %v1594, %v1586
    %v2059 = vpack.c.b16 %v1603, %v1595
    %v2060 = vpack.c.b16 %v1604, %v1596
    %v2061 = vpack.c.b16 %v1605, %v1597
    %v2062 = vpack.c.b16 %v1606, %v1598
    %v2063 = vpack.c.b16 %v1607, %v1599
    %v2064 = vpack.c.b16 %v1608, %v1600
    %v2065 = vpack.c.b16 %v1609, %v1601
    %v2066 = vpack.c.b16 %v1610, %v1602
    %v2067 = vpack.c.b16 %v1619, %v1611
    %v2068 = vpack.c.b16 %v1620, %v1612
    %v2069 = vpack.c.b16 %v1621, %v1613
    %v2070 = vpack.c.b16 %v1622, %v1614
    %v2071 = vpack.c.b16 %v1623, %v1615
    %v2072 = vpack.c.b16 %v1624, %v1616
    %v2073 = vpack.c.b16 %v1625, %v1617
    %v2074 = vpack.c.b16 %v1626, %v1618
    %v2075 = vpack.c.b16 %v1635, %v1627
    %v2076 = vpack.c.b16 %v1636, %v1628
    %v2077 = vpack.c.b16 %v1637, %v1629
    %v2078 = vpack.c.b16 %v1638, %v1630
    %v2079 = vpack.c.b16 %v1639, %v1631
    %v2080 = vpack.c.b16 %v1640, %v1632
    %v2081 = vpack.c.b16 %v1641, %v1633
    %v2082 = vpack.c.b16 %v1642, %v1634
    %v2083 = vpack.c.b16 %v1651, %v1643
    %v2084 = vpack.c.b16 %v1652, %v1644
    %v2085 = vpack.c.b16 %v1653, %v1645
    %v2086 = vpack.c.b16 %v1654, %v1646
    %v2087 = vpack.c.b16 %v1655, %v1647
    %v2088 = vpack.c.b16 %v1656, %v1648
    %v2089 = vpack.c.b16 %v1657, %v1649
    %v2090 = vpack.c.b16 %v1658, %v1650
    %v2091 = vpack.c.b16 %v1667, %v1659
    %v2092 = vpack.c.b16 %v1668, %v1660
    %v2093 = vpack.c.b16 %v1669, %v1661
    %v2094 = vpack.c.b16 %v1670, %v1662
    %v2095 = vpack.c.b16 %v1671, %v1663
    %v2096 = vpack.c.b16 %v1672, %v1664
    %v2097 = vpack.c.b16 %v1673, %v1665
    %v2098 = vpack.c.b16 %v1674, %v1666
    %v2099 = vpack.c.b16 %v1683, %v1675
    %v2100 = vpack.c.b16 %v1684, %v1676
    %v2101 = vpack.c.b16 %v1685, %v1677
    %v2102 = vpack.c.b16 %v1686, %v1678
    %v2103 = vpack.c.b16 %v1687, %v1679
    %v2104 = vpack.c.b16 %v1688, %v1680
    %v2105 = vpack.c.b16 %v1689, %v1681
    %v2106 = vpack.c.b16 %v1690, %v1682
    %v2107 = vpack.c.b16 %v1699, %v1691
    %v2108 = vpack.c.b16 %v1700, %v1692
    %v2109 = vpack.c.b16 %v1701, %v1693
    %v2110 = vpack.c.b16 %v1702, %v1694
    %v2111 = vpack.c.b16 %v1703, %v1695
    %v2112 = vpack.c.b16 %v1704, %v1696
    %v2113 = vpack.c.b16 %v1705, %v1697
    %v2114 = vpack.c.b16 %v1706, %v1698
    %v2115 = vpack.c.b16 %v1715, %v1707
    %v2116 = vpack.c.b16 %v1716, %v1708
    %v2117 = vpack.c.b16 %v1717, %v1709
    %v2118 = vpack.c.b16 %v1718, %v1710
    %v2119 = vpack.c.b16 %v1719, %v1711
    %v2120 = vpack.c.b16 %v1720, %v1712
    %v2121 = vpack.c.b16 %v1721, %v1713
    %v2122 = vpack.c.b16 %v1722, %v1714
    %v2123 = vpack.c.b16 %v1731, %v1723
    %v2124 = vpack.c.b16 %v1732, %v1724
    %v2125 = vpack.c.b16 %v1733, %v1725
    %v2126 = vpack.c.b16 %v1734, %v1726
    %v2127 = vpack.c.b16 %v1735, %v1727
    %v2128 = vpack.c.b16 %v1736, %v1728
    %v2129 = vpack.c.b16 %v1737, %v1729
    %v2130 = vpack.c.b16 %v1738, %v1730
    %v2131 = vpack.c.b16 %v1747, %v1739
    %v2132 = vpack.c.b16 %v1748, %v1740
    %v2133 = vpack.c.b16 %v1749, %v1741
    %v2134 = vpack.c.b16 %v1750, %v1742
    %v2135 = vpack.c.b16 %v1751, %v1743
    %v2136 = vpack.c.b16 %v1752, %v1744
    %v2137 = vpack.c.b16 %v1753, %v1745
    %v2138 = vpack.c.b16 %v1754, %v1746
    %2523 = vmatpush.bf16.msra.mxu0 %v1811
    %2524 = vmatpush.bf16.msra.mxu0 %v1803
    %2525 = vmatpush.bf16.msra.mxu0 %v1795
    %2526 = vmatpush.bf16.msra.mxu0 %v1787
    %2527 = vmatpush.bf16.msra.mxu0 %v1779
    %2528 = vmatpush.bf16.msra.mxu0 %v1771
    %2529 = vmatpush.bf16.msra.mxu0 %v1763
    %2530 = vmatpush.bf16.msra.mxu0 %v1755
    %2531 = vmatmul.bf16.gmra.mxu0 %v197
    %v2532 = vpop.f32.mrf.mxu0
    %v2533 = vadd.f32 0.0, %v2532
    %v2534 = vpop.f32.mrf.mxu0
    %v2535 = vadd.f32 0.0, %v2534
    %2536 = vdwg.mxu0
    %2537 = vmatpush.bf16.msra.mxu0 %v1875
    %2538 = vmatpush.bf16.msra.mxu0 %v1867
    %2539 = vmatpush.bf16.msra.mxu0 %v1859
    %2540 = vmatpush.bf16.msra.mxu0 %v1851
    %2541 = vmatpush.bf16.msra.mxu0 %v1843
    %2542 = vmatpush.bf16.msra.mxu0 %v1835
    %2543 = vmatpush.bf16.msra.mxu0 %v1827
    %2544 = vmatpush.bf16.msra.mxu0 %v1819
    %2545 = vmatmul.bf16.gmra.mxu0 %v198
    %v2546 = vpop.f32.mrf.mxu0
    %v2547 = vadd.f32 %v2533, %v2546
    %v2548 = vpop.f32.mrf.mxu0
    %v2549 = vadd.f32 %v2535, %v2548
    %2550 = vdwg.mxu0
    %2551 = vmatpush.bf16.msra.mxu0 %v1939
    %2552 = vmatpush.bf16.msra.mxu0 %v1931
    %2553 = vmatpush.bf16.msra.mxu0 %v1923
    %2554 = vmatpush.bf16.msra.mxu0 %v1915
    %2555 = vmatpush.bf16.msra.mxu0 %v1907
    %2556 = vmatpush.bf16.msra.mxu0 %v1899
    %2557 = vmatpush.bf16.msra.mxu0 %v1891
    %2558 = vmatpush.bf16.msra.mxu0 %v1883
    %2559 = vmatmul.bf16.gmra.mxu0 %v199
    %v2560 = vpop.f32.mrf.mxu0
    %v2561 = vadd.f32 %v2547, %v2560
    %v2562 = vpop.f32.mrf.mxu0
    %v2563 = vadd.f32 %v2549, %v2562
    %2564 = vdwg.mxu0
    %2565 = vmatpush.bf16.msra.mxu0 %v2003
    %2566 = vmatpush.bf16.msra.mxu0 %v1995
    %2567 = vmatpush.bf16.msra.mxu0 %v1987
    %2568 = vmatpush.bf16.msra.mxu0 %v1979
    %2569 = vmatpush.bf16.msra.mxu0 %v1971
    %2570 = vmatpush.bf16.msra.mxu0 %v1963
    %2571 = vmatpush.bf16.msra.mxu0 %v1955
    %2572 = vmatpush.bf16.msra.mxu0 %v1947
    %2573 = vmatmul.bf16.gmra.mxu0 %v200
    %v2574 = vpop.f32.mrf.mxu0
    %v2575 = vadd.f32 %v2561, %v2574
    %v2576 = vpop.f32.mrf.mxu0
    %v2577 = vadd.f32 %v2563, %v2576
    %2578 = vdwg.mxu0
    %2579 = vmatpush.bf16.msra.mxu0 %v2067
    %2580 = vmatpush.bf16.msra.mxu0 %v2059
    %2581 = vmatpush.bf16.msra.mxu0 %v2051
    %2582 = vmatpush.bf16.msra.mxu0 %v2043
    %2583 = vmatpush.bf16.msra.mxu0 %v2035
    %2584 = vmatpush.bf16.msra.mxu0 %v2027
    %2585 = vmatpush.bf16.msra.mxu0 %v2019
    %2586 = vmatpush.bf16.msra.mxu0 %v2011
    %2587 = vmatmul.bf16.gmra.mxu0 %v201
    %v2588 = vpop.f32.mrf.mxu0
    %v2589 = vadd.f32 %v2575, %v2588
    %v2590 = vpop.f32.mrf.mxu0
    %v2591 = vadd.f32 %v2577, %v2590
    %2592 = vdwg.mxu0
    %2593 = vmatpush.bf16.msra.mxu0 %v2131
    %2594 = vmatpush.bf16.msra.mxu0 %v2123
    %2595 = vmatpush.bf16.msra.mxu0 %v2115
    %2596 = vmatpush.bf16.msra.mxu0 %v2107
    %2597 = vmatpush.bf16.msra.mxu0 %v2099
    %2598 = vmatpush.bf16.msra.mxu0 %v2091
    %2599 = vmatpush.bf16.msra.mxu0 %v2083
    %2600 = vmatpush.bf16.msra.mxu0 %v2075
    %2601 = vmatmul.bf16.gmra.mxu0 %v202
    %v2602 = vpop.f32.mrf.mxu0
    %v2603 = vadd.f32 %v2589, %v2602
    %v2604 = vpop.f32.mrf.mxu0
    %v2605 = vadd.f32 %v2591, %v2604
    %2606 = vdwg.mxu0
    %2607 = vmatpush.bf16.msra.mxu0 %v1812
    %2608 = vmatpush.bf16.msra.mxu0 %v1804
    %2609 = vmatpush.bf16.msra.mxu0 %v1796
    %2610 = vmatpush.bf16.msra.mxu0 %v1788
    %2611 = vmatpush.bf16.msra.mxu0 %v1780
    %2612 = vmatpush.bf16.msra.mxu0 %v1772
    %2613 = vmatpush.bf16.msra.mxu0 %v1764
    %2614 = vmatpush.bf16.msra.mxu0 %v1756
    %2615 = vmatmul.bf16.gmra.mxu0 %v197
    %v2616 = vpop.f32.mrf.mxu0
    %v2617 = vadd.f32 0.0, %v2616
    %v2618 = vpop.f32.mrf.mxu0
    %v2619 = vadd.f32 0.0, %v2618
    %2620 = vdwg.mxu0
    %2621 = vmatpush.bf16.msra.mxu0 %v1876
    %2622 = vmatpush.bf16.msra.mxu0 %v1868
    %2623 = vmatpush.bf16.msra.mxu0 %v1860
    %2624 = vmatpush.bf16.msra.mxu0 %v1852
    %2625 = vmatpush.bf16.msra.mxu0 %v1844
    %2626 = vmatpush.bf16.msra.mxu0 %v1836
    %2627 = vmatpush.bf16.msra.mxu0 %v1828
    %2628 = vmatpush.bf16.msra.mxu0 %v1820
    %2629 = vmatmul.bf16.gmra.mxu0 %v198
    %v2630 = vpop.f32.mrf.mxu0
    %v2631 = vadd.f32 %v2617, %v2630
    %v2632 = vpop.f32.mrf.mxu0
    %v2633 = vadd.f32 %v2619, %v2632
    %2634 = vdwg.mxu0
    %2635 = vmatpush.bf16.msra.mxu0 %v1940
    %2636 = vmatpush.bf16.msra.mxu0 %v1932
    %2637 = vmatpush.bf16.msra.mxu0 %v1924
    %2638 = vmatpush.bf16.msra.mxu0 %v1916
    %2639 = vmatpush.bf16.msra.mxu0 %v1908
    %2640 = vmatpush.bf16.msra.mxu0 %v1900
    %2641 = vmatpush.bf16.msra.mxu0 %v1892
    %2642 = vmatpush.bf16.msra.mxu0 %v1884
    %2643 = vmatmul.bf16.gmra.mxu0 %v199
    %v2644 = vpop.f32.mrf.mxu0
    %v2645 = vadd.f32 %v2631, %v2644
    %v2646 = vpop.f32.mrf.mxu0
    %v2647 = vadd.f32 %v2633, %v2646
    %2648 = vdwg.mxu0
    %2649 = vmatpush.bf16.msra.mxu0 %v2004
    %2650 = vmatpush.bf16.msra.mxu0 %v1996
    %2651 = vmatpush.bf16.msra.mxu0 %v1988
    %2652 = vmatpush.bf16.msra.mxu0 %v1980
    %2653 = vmatpush.bf16.msra.mxu0 %v1972
    %2654 = vmatpush.bf16.msra.mxu0 %v1964
    %2655 = vmatpush.bf16.msra.mxu0 %v1956
    %2656 = vmatpush.bf16.msra.mxu0 %v1948
    %2657 = vmatmul.bf16.gmra.mxu0 %v200
    %v2658 = vpop.f32.mrf.mxu0
    %v2659 = vadd.f32 %v2645, %v2658
    %v2660 = vpop.f32.mrf.mxu0
    %v2661 = vadd.f32 %v2647, %v2660
    %2662 = vdwg.mxu0
    %2663 = vmatpush.bf16.msra.mxu0 %v2068
    %2664 = vmatpush.bf16.msra.mxu0 %v2060
    %2665 = vmatpush.bf16.msra.mxu0 %v2052
    %2666 = vmatpush.bf16.msra.mxu0 %v2044
    %2667 = vmatpush.bf16.msra.mxu0 %v2036
    %2668 = vmatpush.bf16.msra.mxu0 %v2028
    %2669 = vmatpush.bf16.msra.mxu0 %v2020
    %2670 = vmatpush.bf16.msra.mxu0 %v2012
    %2671 = vmatmul.bf16.gmra.mxu0 %v201
    %v2672 = vpop.f32.mrf.mxu0
    %v2673 = vadd.f32 %v2659, %v2672
    %v2674 = vpop.f32.mrf.mxu0
    %v2675 = vadd.f32 %v2661, %v2674
    %2676 = vdwg.mxu0
    %2677 = vmatpush.bf16.msra.mxu0 %v2132
    %2678 = vmatpush.bf16.msra.mxu0 %v2124
    %2679 = vmatpush.bf16.msra.mxu0 %v2116
    %2680 = vmatpush.bf16.msra.mxu0 %v2108
    %2681 = vmatpush.bf16.msra.mxu0 %v2100
    %2682 = vmatpush.bf16.msra.mxu0 %v2092
    %2683 = vmatpush.bf16.msra.mxu0 %v2084
    %2684 = vmatpush.bf16.msra.mxu0 %v2076
    %2685 = vmatmul.bf16.gmra.mxu0 %v202
    %v2686 = vpop.f32.mrf.mxu0
    %v2687 = vadd.f32 %v2673, %v2686
    %v2688 = vpop.f32.mrf.mxu0
    %v2689 = vadd.f32 %v2675, %v2688
    %2690 = vdwg.mxu0
    %2691 = vmatpush.bf16.msra.mxu0 %v1813
    %2692 = vmatpush.bf16.msra.mxu0 %v1805
    %2693 = vmatpush.bf16.msra.mxu0 %v1797
    %2694 = vmatpush.bf16.msra.mxu0 %v1789
    %2695 = vmatpush.bf16.msra.mxu0 %v1781
    %2696 = vmatpush.bf16.msra.mxu0 %v1773
    %2697 = vmatpush.bf16.msra.mxu0 %v1765
    %2698 = vmatpush.bf16.msra.mxu0 %v1757
    %2699 = vmatmul.bf16.gmra.mxu0 %v197
    %v2700 = vpop.f32.mrf.mxu0
    %v2701 = vadd.f32 0.0, %v2700
    %v2702 = vpop.f32.mrf.mxu0
    %v2703 = vadd.f32 0.0, %v2702
    %2704 = vdwg.mxu0
    %2705 = vmatpush.bf16.msra.mxu0 %v1877
    %2706 = vmatpush.bf16.msra.mxu0 %v1869
    %2707 = vmatpush.bf16.msra.mxu0 %v1861
    %2708 = vmatpush.bf16.msra.mxu0 %v1853
    %2709 = vmatpush.bf16.msra.mxu0 %v1845
    %2710 = vmatpush.bf16.msra.mxu0 %v1837
    %2711 = vmatpush.bf16.msra.mxu0 %v1829
    %2712 = vmatpush.bf16.msra.mxu0 %v1821
    %2713 = vmatmul.bf16.gmra.mxu0 %v198
    %v2714 = vpop.f32.mrf.mxu0
    %v2715 = vadd.f32 %v2701, %v2714
    %v2716 = vpop.f32.mrf.mxu0
    %v2717 = vadd.f32 %v2703, %v2716
    %2718 = vdwg.mxu0
    %2719 = vmatpush.bf16.msra.mxu0 %v1941
    %2720 = vmatpush.bf16.msra.mxu0 %v1933
    %2721 = vmatpush.bf16.msra.mxu0 %v1925
    %2722 = vmatpush.bf16.msra.mxu0 %v1917
    %2723 = vmatpush.bf16.msra.mxu0 %v1909
    %2724 = vmatpush.bf16.msra.mxu0 %v1901
    %2725 = vmatpush.bf16.msra.mxu0 %v1893
    %2726 = vmatpush.bf16.msra.mxu0 %v1885
    %2727 = vmatmul.bf16.gmra.mxu0 %v199
    %v2728 = vpop.f32.mrf.mxu0
    %v2729 = vadd.f32 %v2715, %v2728
    %v2730 = vpop.f32.mrf.mxu0
    %v2731 = vadd.f32 %v2717, %v2730
    %2732 = vdwg.mxu0
    %2733 = vmatpush.bf16.msra.mxu0 %v2005
    %2734 = vmatpush.bf16.msra.mxu0 %v1997
    %2735 = vmatpush.bf16.msra.mxu0 %v1989
    %2736 = vmatpush.bf16.msra.mxu0 %v1981
    %2737 = vmatpush.bf16.msra.mxu0 %v1973
    %2738 = vmatpush.bf16.msra.mxu0 %v1965
    %2739 = vmatpush.bf16.msra.mxu0 %v1957
    %2740 = vmatpush.bf16.msra.mxu0 %v1949
    %2741 = vmatmul.bf16.gmra.mxu0 %v200
    %v2742 = vpop.f32.mrf.mxu0
    %v2743 = vadd.f32 %v2729, %v2742
    %v2744 = vpop.f32.mrf.mxu0
    %v2745 = vadd.f32 %v2731, %v2744
    %2746 = vdwg.mxu0
    %2747 = vmatpush.bf16.msra.mxu0 %v2069
    %2748 = vmatpush.bf16.msra.mxu0 %v2061
    %2749 = vmatpush.bf16.msra.mxu0 %v2053
    %2750 = vmatpush.bf16.msra.mxu0 %v2045
    %2751 = vmatpush.bf16.msra.mxu0 %v2037
    %2752 = vmatpush.bf16.msra.mxu0 %v2029
    %2753 = vmatpush.bf16.msra.mxu0 %v2021
    %2754 = vmatpush.bf16.msra.mxu0 %v2013
    %2755 = vmatmul.bf16.gmra.mxu0 %v201
    %v2756 = vpop.f32.mrf.mxu0
    %v2757 = vadd.f32 %v2743, %v2756
    %v2758 = vpop.f32.mrf.mxu0
    %v2759 = vadd.f32 %v2745, %v2758
    %2760 = vdwg.mxu0
    %2761 = vmatpush.bf16.msra.mxu0 %v2133
    %2762 = vmatpush.bf16.msra.mxu0 %v2125
    %2763 = vmatpush.bf16.msra.mxu0 %v2117
    %2764 = vmatpush.bf16.msra.mxu0 %v2109
    %2765 = vmatpush.bf16.msra.mxu0 %v2101
    %2766 = vmatpush.bf16.msra.mxu0 %v2093
    %2767 = vmatpush.bf16.msra.mxu0 %v2085
    %2768 = vmatpush.bf16.msra.mxu0 %v2077
    %2769 = vmatmul.bf16.gmra.mxu0 %v202
    %v2770 = vpop.f32.mrf.mxu0
    %v2771 = vadd.f32 %v2757, %v2770
    %v2772 = vpop.f32.mrf.mxu0
    %v2773 = vadd.f32 %v2759, %v2772
    %2774 = vdwg.mxu0
    %2775 = vmatpush.bf16.msra.mxu0 %v1814
    %2776 = vmatpush.bf16.msra.mxu0 %v1806
    %2777 = vmatpush.bf16.msra.mxu0 %v1798
    %2778 = vmatpush.bf16.msra.mxu0 %v1790
    %2779 = vmatpush.bf16.msra.mxu0 %v1782
    %2780 = vmatpush.bf16.msra.mxu0 %v1774
    %2781 = vmatpush.bf16.msra.mxu0 %v1766
    %2782 = vmatpush.bf16.msra.mxu0 %v1758
    %2783 = vmatmul.bf16.gmra.mxu0 %v197
    %v2784 = vpop.f32.mrf.mxu0
    %v2785 = vadd.f32 0.0, %v2784
    %v2786 = vpop.f32.mrf.mxu0
    %v2787 = vadd.f32 0.0, %v2786
    %2788 = vdwg.mxu0
    %2789 = vmatpush.bf16.msra.mxu0 %v1878
    %2790 = vmatpush.bf16.msra.mxu0 %v1870
    %2791 = vmatpush.bf16.msra.mxu0 %v1862
    %2792 = vmatpush.bf16.msra.mxu0 %v1854
    %2793 = vmatpush.bf16.msra.mxu0 %v1846
    %2794 = vmatpush.bf16.msra.mxu0 %v1838
    %2795 = vmatpush.bf16.msra.mxu0 %v1830
    %2796 = vmatpush.bf16.msra.mxu0 %v1822
    %2797 = vmatmul.bf16.gmra.mxu0 %v198
    %v2798 = vpop.f32.mrf.mxu0
    %v2799 = vadd.f32 %v2785, %v2798
    %v2800 = vpop.f32.mrf.mxu0
    %v2801 = vadd.f32 %v2787, %v2800
    %2802 = vdwg.mxu0
    %2803 = vmatpush.bf16.msra.mxu0 %v1942
    %2804 = vmatpush.bf16.msra.mxu0 %v1934
    %2805 = vmatpush.bf16.msra.mxu0 %v1926
    %2806 = vmatpush.bf16.msra.mxu0 %v1918
    %2807 = vmatpush.bf16.msra.mxu0 %v1910
    %2808 = vmatpush.bf16.msra.mxu0 %v1902
    %2809 = vmatpush.bf16.msra.mxu0 %v1894
    %2810 = vmatpush.bf16.msra.mxu0 %v1886
    %2811 = vmatmul.bf16.gmra.mxu0 %v199
    %v2812 = vpop.f32.mrf.mxu0
    %v2813 = vadd.f32 %v2799, %v2812
    %v2814 = vpop.f32.mrf.mxu0
    %v2815 = vadd.f32 %v2801, %v2814
    %2816 = vdwg.mxu0
    %2817 = vmatpush.bf16.msra.mxu0 %v2006
    %2818 = vmatpush.bf16.msra.mxu0 %v1998
    %2819 = vmatpush.bf16.msra.mxu0 %v1990
    %2820 = vmatpush.bf16.msra.mxu0 %v1982
    %2821 = vmatpush.bf16.msra.mxu0 %v1974
    %2822 = vmatpush.bf16.msra.mxu0 %v1966
    %2823 = vmatpush.bf16.msra.mxu0 %v1958
    %2824 = vmatpush.bf16.msra.mxu0 %v1950
    %2825 = vmatmul.bf16.gmra.mxu0 %v200
    %v2826 = vpop.f32.mrf.mxu0
    %v2827 = vadd.f32 %v2813, %v2826
    %v2828 = vpop.f32.mrf.mxu0
    %v2829 = vadd.f32 %v2815, %v2828
    %2830 = vdwg.mxu0
    %2831 = vmatpush.bf16.msra.mxu0 %v2070
    %2832 = vmatpush.bf16.msra.mxu0 %v2062
    %2833 = vmatpush.bf16.msra.mxu0 %v2054
    %2834 = vmatpush.bf16.msra.mxu0 %v2046
    %2835 = vmatpush.bf16.msra.mxu0 %v2038
    %2836 = vmatpush.bf16.msra.mxu0 %v2030
    %2837 = vmatpush.bf16.msra.mxu0 %v2022
    %2838 = vmatpush.bf16.msra.mxu0 %v2014
    %2839 = vmatmul.bf16.gmra.mxu0 %v201
    %v2840 = vpop.f32.mrf.mxu0
    %v2841 = vadd.f32 %v2827, %v2840
    %v2842 = vpop.f32.mrf.mxu0
    %v2843 = vadd.f32 %v2829, %v2842
    %2844 = vdwg.mxu0
    %2845 = vmatpush.bf16.msra.mxu0 %v2134
    %2846 = vmatpush.bf16.msra.mxu0 %v2126
    %2847 = vmatpush.bf16.msra.mxu0 %v2118
    %2848 = vmatpush.bf16.msra.mxu0 %v2110
    %2849 = vmatpush.bf16.msra.mxu0 %v2102
    %2850 = vmatpush.bf16.msra.mxu0 %v2094
    %2851 = vmatpush.bf16.msra.mxu0 %v2086
    %2852 = vmatpush.bf16.msra.mxu0 %v2078
    %2853 = vmatmul.bf16.gmra.mxu0 %v202
    %v2854 = vpop.f32.mrf.mxu0
    %v2855 = vadd.f32 %v2841, %v2854
    %v2856 = vpop.f32.mrf.mxu0
    %v2857 = vadd.f32 %v2843, %v2856
    %2858 = vdwg.mxu0
    %2859 = vmatpush.bf16.msra.mxu0 %v1815
    %2860 = vmatpush.bf16.msra.mxu0 %v1807
    %2861 = vmatpush.bf16.msra.mxu0 %v1799
    %2862 = vmatpush.bf16.msra.mxu0 %v1791
    %2863 = vmatpush.bf16.msra.mxu0 %v1783
    %2864 = vmatpush.bf16.msra.mxu0 %v1775
    %2865 = vmatpush.bf16.msra.mxu0 %v1767
    %2866 = vmatpush.bf16.msra.mxu0 %v1759
    %2867 = vmatmul.bf16.gmra.mxu0 %v197
    %v2868 = vpop.f32.mrf.mxu0
    %v2869 = vadd.f32 0.0, %v2868
    %v2870 = vpop.f32.mrf.mxu0
    %v2871 = vadd.f32 0.0, %v2870
    %2872 = vdwg.mxu0
    %2873 = vmatpush.bf16.msra.mxu0 %v1879
    %2874 = vmatpush.bf16.msra.mxu0 %v1871
    %2875 = vmatpush.bf16.msra.mxu0 %v1863
    %2876 = vmatpush.bf16.msra.mxu0 %v1855
    %2877 = vmatpush.bf16.msra.mxu0 %v1847
    %2878 = vmatpush.bf16.msra.mxu0 %v1839
    %2879 = vmatpush.bf16.msra.mxu0 %v1831
    %2880 = vmatpush.bf16.msra.mxu0 %v1823
    %2881 = vmatmul.bf16.gmra.mxu0 %v198
    %v2882 = vpop.f32.mrf.mxu0
    %v2883 = vadd.f32 %v2869, %v2882
    %v2884 = vpop.f32.mrf.mxu0
    %v2885 = vadd.f32 %v2871, %v2884
    %2886 = vdwg.mxu0
    %2887 = vmatpush.bf16.msra.mxu0 %v1943
    %2888 = vmatpush.bf16.msra.mxu0 %v1935
    %2889 = vmatpush.bf16.msra.mxu0 %v1927
    %2890 = vmatpush.bf16.msra.mxu0 %v1919
    %2891 = vmatpush.bf16.msra.mxu0 %v1911
    %2892 = vmatpush.bf16.msra.mxu0 %v1903
    %2893 = vmatpush.bf16.msra.mxu0 %v1895
    %2894 = vmatpush.bf16.msra.mxu0 %v1887
    %2895 = vmatmul.bf16.gmra.mxu0 %v199
    %v2896 = vpop.f32.mrf.mxu0
    %v2897 = vadd.f32 %v2883, %v2896
    %v2898 = vpop.f32.mrf.mxu0
    %v2899 = vadd.f32 %v2885, %v2898
    %2900 = vdwg.mxu0
    %2901 = vmatpush.bf16.msra.mxu0 %v2007
    %2902 = vmatpush.bf16.msra.mxu0 %v1999
    %2903 = vmatpush.bf16.msra.mxu0 %v1991
    %2904 = vmatpush.bf16.msra.mxu0 %v1983
    %2905 = vmatpush.bf16.msra.mxu0 %v1975
    %2906 = vmatpush.bf16.msra.mxu0 %v1967
    %2907 = vmatpush.bf16.msra.mxu0 %v1959
    %2908 = vmatpush.bf16.msra.mxu0 %v1951
    %2909 = vmatmul.bf16.gmra.mxu0 %v200
    %v2910 = vpop.f32.mrf.mxu0
    %v2911 = vadd.f32 %v2897, %v2910
    %v2912 = vpop.f32.mrf.mxu0
    %v2913 = vadd.f32 %v2899, %v2912
    %2914 = vdwg.mxu0
    %2915 = vmatpush.bf16.msra.mxu0 %v2071
    %2916 = vmatpush.bf16.msra.mxu0 %v2063
    %2917 = vmatpush.bf16.msra.mxu0 %v2055
    %2918 = vmatpush.bf16.msra.mxu0 %v2047
    %2919 = vmatpush.bf16.msra.mxu0 %v2039
    %2920 = vmatpush.bf16.msra.mxu0 %v2031
    %2921 = vmatpush.bf16.msra.mxu0 %v2023
    %2922 = vmatpush.bf16.msra.mxu0 %v2015
    %2923 = vmatmul.bf16.gmra.mxu0 %v201
    %v2924 = vpop.f32.mrf.mxu0
    %v2925 = vadd.f32 %v2911, %v2924
    %v2926 = vpop.f32.mrf.mxu0
    %v2927 = vadd.f32 %v2913, %v2926
    %2928 = vdwg.mxu0
    %2929 = vmatpush.bf16.msra.mxu0 %v2135
    %2930 = vmatpush.bf16.msra.mxu0 %v2127
    %2931 = vmatpush.bf16.msra.mxu0 %v2119
    %2932 = vmatpush.bf16.msra.mxu0 %v2111
    %2933 = vmatpush.bf16.msra.mxu0 %v2103
    %2934 = vmatpush.bf16.msra.mxu0 %v2095
    %2935 = vmatpush.bf16.msra.mxu0 %v2087
    %2936 = vmatpush.bf16.msra.mxu0 %v2079
    %2937 = vmatmul.bf16.gmra.mxu0 %v202
    %v2938 = vpop.f32.mrf.mxu0
    %v2939 = vadd.f32 %v2925, %v2938
    %v2940 = vpop.f32.mrf.mxu0
    %v2941 = vadd.f32 %v2927, %v2940
    %2942 = vdwg.mxu0
    %2943 = vmatpush.bf16.msra.mxu0 %v1816
    %2944 = vmatpush.bf16.msra.mxu0 %v1808
    %2945 = vmatpush.bf16.msra.mxu0 %v1800
    %2946 = vmatpush.bf16.msra.mxu0 %v1792
    %2947 = vmatpush.bf16.msra.mxu0 %v1784
    %2948 = vmatpush.bf16.msra.mxu0 %v1776
    %2949 = vmatpush.bf16.msra.mxu0 %v1768
    %2950 = vmatpush.bf16.msra.mxu0 %v1760
    %2951 = vmatmul.bf16.gmra.mxu0 %v197
    %v2952 = vpop.f32.mrf.mxu0
    %v2953 = vadd.f32 0.0, %v2952
    %v2954 = vpop.f32.mrf.mxu0
    %v2955 = vadd.f32 0.0, %v2954
    %2956 = vdwg.mxu0
    %2957 = vmatpush.bf16.msra.mxu0 %v1880
    %2958 = vmatpush.bf16.msra.mxu0 %v1872
    %2959 = vmatpush.bf16.msra.mxu0 %v1864
    %2960 = vmatpush.bf16.msra.mxu0 %v1856
    %2961 = vmatpush.bf16.msra.mxu0 %v1848
    %2962 = vmatpush.bf16.msra.mxu0 %v1840
    %2963 = vmatpush.bf16.msra.mxu0 %v1832
    %2964 = vmatpush.bf16.msra.mxu0 %v1824
    %2965 = vmatmul.bf16.gmra.mxu0 %v198
    %v2966 = vpop.f32.mrf.mxu0
    %v2967 = vadd.f32 %v2953, %v2966
    %v2968 = vpop.f32.mrf.mxu0
    %v2969 = vadd.f32 %v2955, %v2968
    %2970 = vdwg.mxu0
    %2971 = vmatpush.bf16.msra.mxu0 %v1944
    %2972 = vmatpush.bf16.msra.mxu0 %v1936
    %2973 = vmatpush.bf16.msra.mxu0 %v1928
    %2974 = vmatpush.bf16.msra.mxu0 %v1920
    %2975 = vmatpush.bf16.msra.mxu0 %v1912
    %2976 = vmatpush.bf16.msra.mxu0 %v1904
    %2977 = vmatpush.bf16.msra.mxu0 %v1896
    %2978 = vmatpush.bf16.msra.mxu0 %v1888
    %2979 = vmatmul.bf16.gmra.mxu0 %v199
    %v2980 = vpop.f32.mrf.mxu0
    %v2981 = vadd.f32 %v2967, %v2980
    %v2982 = vpop.f32.mrf.mxu0
    %v2983 = vadd.f32 %v2969, %v2982
    %2984 = vdwg.mxu0
    %2985 = vmatpush.bf16.msra.mxu0 %v2008
    %2986 = vmatpush.bf16.msra.mxu0 %v2000
    %2987 = vmatpush.bf16.msra.mxu0 %v1992
    %2988 = vmatpush.bf16.msra.mxu0 %v1984
    %2989 = vmatpush.bf16.msra.mxu0 %v1976
    %2990 = vmatpush.bf16.msra.mxu0 %v1968
    %2991 = vmatpush.bf16.msra.mxu0 %v1960
    %2992 = vmatpush.bf16.msra.mxu0 %v1952
    %2993 = vmatmul.bf16.gmra.mxu0 %v200
    %v2994 = vpop.f32.mrf.mxu0
    %v2995 = vadd.f32 %v2981, %v2994
    %v2996 = vpop.f32.mrf.mxu0
    %v2997 = vadd.f32 %v2983, %v2996
    %2998 = vdwg.mxu0
    %2999 = vmatpush.bf16.msra.mxu0 %v2072
    %3000 = vmatpush.bf16.msra.mxu0 %v2064
    %3001 = vmatpush.bf16.msra.mxu0 %v2056
    %3002 = vmatpush.bf16.msra.mxu0 %v2048
    %3003 = vmatpush.bf16.msra.mxu0 %v2040
    %3004 = vmatpush.bf16.msra.mxu0 %v2032
    %3005 = vmatpush.bf16.msra.mxu0 %v2024
    %3006 = vmatpush.bf16.msra.mxu0 %v2016
    %3007 = vmatmul.bf16.gmra.mxu0 %v201
    %v3008 = vpop.f32.mrf.mxu0
    %v3009 = vadd.f32 %v2995, %v3008
    %v3010 = vpop.f32.mrf.mxu0
    %v3011 = vadd.f32 %v2997, %v3010
    %3012 = vdwg.mxu0
    %3013 = vmatpush.bf16.msra.mxu0 %v2136
    %3014 = vmatpush.bf16.msra.mxu0 %v2128
    %3015 = vmatpush.bf16.msra.mxu0 %v2120
    %3016 = vmatpush.bf16.msra.mxu0 %v2112
    %3017 = vmatpush.bf16.msra.mxu0 %v2104
    %3018 = vmatpush.bf16.msra.mxu0 %v2096
    %3019 = vmatpush.bf16.msra.mxu0 %v2088
    %3020 = vmatpush.bf16.msra.mxu0 %v2080
    %3021 = vmatmul.bf16.gmra.mxu0 %v202
    %v3022 = vpop.f32.mrf.mxu0
    %v3023 = vadd.f32 %v3009, %v3022
    %v3024 = vpop.f32.mrf.mxu0
    %v3025 = vadd.f32 %v3011, %v3024
    %3026 = vdwg.mxu0
    %3027 = vmatpush.bf16.msra.mxu0 %v1817
    %3028 = vmatpush.bf16.msra.mxu0 %v1809
    %3029 = vmatpush.bf16.msra.mxu0 %v1801
    %3030 = vmatpush.bf16.msra.mxu0 %v1793
    %3031 = vmatpush.bf16.msra.mxu0 %v1785
    %3032 = vmatpush.bf16.msra.mxu0 %v1777
    %3033 = vmatpush.bf16.msra.mxu0 %v1769
    %3034 = vmatpush.bf16.msra.mxu0 %v1761
    %3035 = vmatmul.bf16.gmra.mxu0 %v197
    %v3036 = vpop.f32.mrf.mxu0
    %v3037 = vadd.f32 0.0, %v3036
    %v3038 = vpop.f32.mrf.mxu0
    %v3039 = vadd.f32 0.0, %v3038
    %3040 = vdwg.mxu0
    %3041 = vmatpush.bf16.msra.mxu0 %v1881
    %3042 = vmatpush.bf16.msra.mxu0 %v1873
    %3043 = vmatpush.bf16.msra.mxu0 %v1865
    %3044 = vmatpush.bf16.msra.mxu0 %v1857
    %3045 = vmatpush.bf16.msra.mxu0 %v1849
    %3046 = vmatpush.bf16.msra.mxu0 %v1841
    %3047 = vmatpush.bf16.msra.mxu0 %v1833
    %3048 = vmatpush.bf16.msra.mxu0 %v1825
    %3049 = vmatmul.bf16.gmra.mxu0 %v198
    %v3050 = vpop.f32.mrf.mxu0
    %v3051 = vadd.f32 %v3037, %v3050
    %v3052 = vpop.f32.mrf.mxu0
    %v3053 = vadd.f32 %v3039, %v3052
    %3054 = vdwg.mxu0
    %3055 = vmatpush.bf16.msra.mxu0 %v1945
    %3056 = vmatpush.bf16.msra.mxu0 %v1937
    %3057 = vmatpush.bf16.msra.mxu0 %v1929
    %3058 = vmatpush.bf16.msra.mxu0 %v1921
    %3059 = vmatpush.bf16.msra.mxu0 %v1913
    %3060 = vmatpush.bf16.msra.mxu0 %v1905
    %3061 = vmatpush.bf16.msra.mxu0 %v1897
    %3062 = vmatpush.bf16.msra.mxu0 %v1889
    %3063 = vmatmul.bf16.gmra.mxu0 %v199
    %v3064 = vpop.f32.mrf.mxu0
    %v3065 = vadd.f32 %v3051, %v3064
    %v3066 = vpop.f32.mrf.mxu0
    %v3067 = vadd.f32 %v3053, %v3066
    %3068 = vdwg.mxu0
    %3069 = vmatpush.bf16.msra.mxu0 %v2009
    %3070 = vmatpush.bf16.msra.mxu0 %v2001
    %3071 = vmatpush.bf16.msra.mxu0 %v1993
    %3072 = vmatpush.bf16.msra.mxu0 %v1985
    %3073 = vmatpush.bf16.msra.mxu0 %v1977
    %3074 = vmatpush.bf16.msra.mxu0 %v1969
    %3075 = vmatpush.bf16.msra.mxu0 %v1961
    %3076 = vmatpush.bf16.msra.mxu0 %v1953
    %3077 = vmatmul.bf16.gmra.mxu0 %v200
    %v3078 = vpop.f32.mrf.mxu0
    %v3079 = vadd.f32 %v3065, %v3078
    %v3080 = vpop.f32.mrf.mxu0
    %v3081 = vadd.f32 %v3067, %v3080
    %3082 = vdwg.mxu0
    %3083 = vmatpush.bf16.msra.mxu0 %v2073
    %3084 = vmatpush.bf16.msra.mxu0 %v2065
    %3085 = vmatpush.bf16.msra.mxu0 %v2057
    %3086 = vmatpush.bf16.msra.mxu0 %v2049
    %3087 = vmatpush.bf16.msra.mxu0 %v2041
    %3088 = vmatpush.bf16.msra.mxu0 %v2033
    %3089 = vmatpush.bf16.msra.mxu0 %v2025
    %3090 = vmatpush.bf16.msra.mxu0 %v2017
    %3091 = vmatmul.bf16.gmra.mxu0 %v201
    %v3092 = vpop.f32.mrf.mxu0
    %v3093 = vadd.f32 %v3079, %v3092
    %v3094 = vpop.f32.mrf.mxu0
    %v3095 = vadd.f32 %v3081, %v3094
    %3096 = vdwg.mxu0
    %3097 = vmatpush.bf16.msra.mxu0 %v2137
    %3098 = vmatpush.bf16.msra.mxu0 %v2129
    %3099 = vmatpush.bf16.msra.mxu0 %v2121
    %3100 = vmatpush.bf16.msra.mxu0 %v2113
    %3101 = vmatpush.bf16.msra.mxu0 %v2105
    %3102 = vmatpush.bf16.msra.mxu0 %v2097
    %3103 = vmatpush.bf16.msra.mxu0 %v2089
    %3104 = vmatpush.bf16.msra.mxu0 %v2081
    %3105 = vmatmul.bf16.gmra.mxu0 %v202
    %v3106 = vpop.f32.mrf.mxu0
    %v3107 = vadd.f32 %v3093, %v3106
    %v3108 = vpop.f32.mrf.mxu0
    %v3109 = vadd.f32 %v3095, %v3108
    %3110 = vdwg.mxu0
    %3111 = vmatpush.bf16.msra.mxu0 %v1818
    %3112 = vmatpush.bf16.msra.mxu0 %v1810
    %3113 = vmatpush.bf16.msra.mxu0 %v1802
    %3114 = vmatpush.bf16.msra.mxu0 %v1794
    %3115 = vmatpush.bf16.msra.mxu0 %v1786
    %3116 = vmatpush.bf16.msra.mxu0 %v1778
    %3117 = vmatpush.bf16.msra.mxu0 %v1770
    %3118 = vmatpush.bf16.msra.mxu0 %v1762
    %3119 = vmatmul.bf16.gmra.mxu0 %v197
    %v3120 = vpop.f32.mrf.mxu0
    %v3121 = vadd.f32 0.0, %v3120
    %v3122 = vpop.f32.mrf.mxu0
    %v3123 = vadd.f32 0.0, %v3122
    %3124 = vdwg.mxu0
    %3125 = vmatpush.bf16.msra.mxu0 %v1882
    %3126 = vmatpush.bf16.msra.mxu0 %v1874
    %3127 = vmatpush.bf16.msra.mxu0 %v1866
    %3128 = vmatpush.bf16.msra.mxu0 %v1858
    %3129 = vmatpush.bf16.msra.mxu0 %v1850
    %3130 = vmatpush.bf16.msra.mxu0 %v1842
    %3131 = vmatpush.bf16.msra.mxu0 %v1834
    %3132 = vmatpush.bf16.msra.mxu0 %v1826
    %3133 = vmatmul.bf16.gmra.mxu0 %v198
    %v3134 = vpop.f32.mrf.mxu0
    %v3135 = vadd.f32 %v3121, %v3134
    %v3136 = vpop.f32.mrf.mxu0
    %v3137 = vadd.f32 %v3123, %v3136
    %3138 = vdwg.mxu0
    %3139 = vmatpush.bf16.msra.mxu0 %v1946
    %3140 = vmatpush.bf16.msra.mxu0 %v1938
    %3141 = vmatpush.bf16.msra.mxu0 %v1930
    %3142 = vmatpush.bf16.msra.mxu0 %v1922
    %3143 = vmatpush.bf16.msra.mxu0 %v1914
    %3144 = vmatpush.bf16.msra.mxu0 %v1906
    %3145 = vmatpush.bf16.msra.mxu0 %v1898
    %3146 = vmatpush.bf16.msra.mxu0 %v1890
    %3147 = vmatmul.bf16.gmra.mxu0 %v199
    %v3148 = vpop.f32.mrf.mxu0
    %v3149 = vadd.f32 %v3135, %v3148
    %v3150 = vpop.f32.mrf.mxu0
    %v3151 = vadd.f32 %v3137, %v3150
    %3152 = vdwg.mxu0
    %3153 = vmatpush.bf16.msra.mxu0 %v2010
    %3154 = vmatpush.bf16.msra.mxu0 %v2002
    %3155 = vmatpush.bf16.msra.mxu0 %v1994
    %3156 = vmatpush.bf16.msra.mxu0 %v1986
    %3157 = vmatpush.bf16.msra.mxu0 %v1978
    %3158 = vmatpush.bf16.msra.mxu0 %v1970
    %3159 = vmatpush.bf16.msra.mxu0 %v1962
    %3160 = vmatpush.bf16.msra.mxu0 %v1954
    %3161 = vmatmul.bf16.gmra.mxu0 %v200
    %v3162 = vpop.f32.mrf.mxu0
    %v3163 = vadd.f32 %v3149, %v3162
    %v3164 = vpop.f32.mrf.mxu0
    %v3165 = vadd.f32 %v3151, %v3164
    %3166 = vdwg.mxu0
    %3167 = vmatpush.bf16.msra.mxu0 %v2074
    %3168 = vmatpush.bf16.msra.mxu0 %v2066
    %3169 = vmatpush.bf16.msra.mxu0 %v2058
    %3170 = vmatpush.bf16.msra.mxu0 %v2050
    %3171 = vmatpush.bf16.msra.mxu0 %v2042
    %3172 = vmatpush.bf16.msra.mxu0 %v2034
    %3173 = vmatpush.bf16.msra.mxu0 %v2026
    %3174 = vmatpush.bf16.msra.mxu0 %v2018
    %3175 = vmatmul.bf16.gmra.mxu0 %v201
    %v3176 = vpop.f32.mrf.mxu0
    %v3177 = vadd.f32 %v3163, %v3176
    %v3178 = vpop.f32.mrf.mxu0
    %v3179 = vadd.f32 %v3165, %v3178
    %3180 = vdwg.mxu0
    %3181 = vmatpush.bf16.msra.mxu0 %v2138
    %3182 = vmatpush.bf16.msra.mxu0 %v2130
    %3183 = vmatpush.bf16.msra.mxu0 %v2122
    %3184 = vmatpush.bf16.msra.mxu0 %v2114
    %3185 = vmatpush.bf16.msra.mxu0 %v2106
    %3186 = vmatpush.bf16.msra.mxu0 %v2098
    %3187 = vmatpush.bf16.msra.mxu0 %v2090
    %3188 = vmatpush.bf16.msra.mxu0 %v2082
    %3189 = vmatmul.bf16.gmra.mxu0 %v202
    %v3190 = vpop.f32.mrf.mxu0
    %v3191 = vadd.f32 %v3177, %v3190
    %v3192 = vpop.f32.mrf.mxu0
    %v3193 = vadd.f32 %v3179, %v3192
    %3194 = vdwg.mxu0
    %v3195 = vadd.f32 %v587, %v2603
    %v3196 = vadd.f32 %v588, %v2687
    %v3197 = vadd.f32 %v589, %v2771
    %v3198 = vadd.f32 %v590, %v2855
    %v3199 = vadd.f32 %v591, %v2939
    %v3200 = vadd.f32 %v592, %v3023
    %v3201 = vadd.f32 %v593, %v3107
    %v3202 = vadd.f32 %v594, %v3191
    %v3203 = vadd.f32 %v595, %v2605
    %v3204 = vadd.f32 %v596, %v2689
    %v3205 = vadd.f32 %v597, %v2773
    %v3206 = vadd.f32 %v598, %v2857
    %v3207 = vadd.f32 %v599, %v2941
    %v3208 = vadd.f32 %v600, %v3025
    %v3209 = vadd.f32 %v601, %v3109
    %v3210 = vadd.f32 %v602, %v3193
    %3211 = vst [vmem:[#allocation2] sm:$0xff] %v3195
    %3212 = vst [vmem:[#allocation2 + $0x8] sm:$0xff] %v3196
    %3213 = vst [vmem:[#allocation2 + $0x10] sm:$0xff] %v3197
    %3214 = vst [vmem:[#allocation2 + $0x18] sm:$0xff] %v3198
    %3215 = vst [vmem:[#allocation2 + $0x20] sm:$0xff] %v3199
    %3216 = vst [vmem:[#allocation2 + $0x28] sm:$0xff] %v3200
    %3217 = vst [vmem:[#allocation2 + $0x30] sm:$0xff] %v3201
    %3218 = vst [vmem:[#allocation2 + $0x38] sm:$0xff] %v3202
    %3219 = vst [vmem:[#allocation2 + $0x40] sm:$0xff] %v3203
    %3220 = vst [vmem:[#allocation2 + $0x48] sm:$0xff] %v3204
    %3221 = vst [vmem:[#allocation2 + $0x50] sm:$0xff] %v3205
    %3222 = vst [vmem:[#allocation2 + $0x58] sm:$0xff] %v3206
    %3223 = vst [vmem:[#allocation2 + $0x60] sm:$0xff] %v3207
    %3224 = vst [vmem:[#allocation2 + $0x68] sm:$0xff] %v3208
    %3225 = vst [vmem:[#allocation2 + $0x70] sm:$0xff] %v3209
    %3226 = vst [vmem:[#allocation2 + $0x78] sm:$0xff] %v3210
    // Predicated region
    $region82: #{fcnn_forward.1} parent=1 // pred_check
      %p3227 = pneg %p165
    $region83: #{fcnn_forward.1} parent=1 // pred_check_branch
      %3229 = sbr.rel (%p3227) target = $region85
    $region84: #{fcnn_forward.1} parent=1 // pred_region
      %v3230 = vld [vmem:[#allocation2] sm:$0xff]
      %v3231 = vld [vmem:[#allocation2 + $0x8] sm:$0xff]
      %v3232 = vld [vmem:[#allocation2 + $0x10] sm:$0xff]
      %v3233 = vld [vmem:[#allocation2 + $0x18] sm:$0xff]
      %v3234 = vld [vmem:[#allocation2 + $0x20] sm:$0xff]
      %v3235 = vld [vmem:[#allocation2 + $0x28] sm:$0xff]
      %v3236 = vld [vmem:[#allocation2 + $0x30] sm:$0xff]
      %v3237 = vld [vmem:[#allocation2 + $0x38] sm:$0xff]
      %v3238 = vld [vmem:[#allocation2 + $0x40] sm:$0xff]
      %v3239 = vld [vmem:[#allocation2 + $0x48] sm:$0xff]
      %v3240 = vld [vmem:[#allocation2 + $0x50] sm:$0xff]
      %v3241 = vld [vmem:[#allocation2 + $0x58] sm:$0xff]
      %v3242 = vld [vmem:[#allocation2 + $0x60] sm:$0xff]
      %v3243 = vld [vmem:[#allocation2 + $0x68] sm:$0xff]
      %v3244 = vld [vmem:[#allocation2 + $0x70] sm:$0xff]
      %v3245 = vld [vmem:[#allocation2 + $0x78] sm:$0xff]
      %v3246 = vld [vmem:[#allocation5] sm:$0xff]
      %v3248 = vperm.slane %v3246, 0
      %v3249 = vperm.slane %v3246, 1
      %v3250 = vperm.slane %v3246, 2
      %v3251 = vperm.slane %v3246, 3
      %v3252 = vperm.slane %v3246, 4
      %v3253 = vperm.slane %v3246, 5
      %v3254 = vperm.slane %v3246, 6
      %v3255 = vperm.slane %v3246, 7
      %v3264 = vmul.f32 %v3230, %v3248
      %v3265 = vmul.f32 %v3231, %v3249
      %v3266 = vmul.f32 %v3232, %v3250
      %v3267 = vmul.f32 %v3233, %v3251
      %v3268 = vmul.f32 %v3234, %v3252
      %v3269 = vmul.f32 %v3235, %v3253
      %v3270 = vmul.f32 %v3236, %v3254
      %v3271 = vmul.f32 %v3237, %v3255
      %v3272 = vmul.f32 %v3238, %v3248
      %v3273 = vmul.f32 %v3239, %v3249
      %v3274 = vmul.f32 %v3240, %v3250
      %v3275 = vmul.f32 %v3241, %v3251
      %v3276 = vmul.f32 %v3242, %v3252
      %v3277 = vmul.f32 %v3243, %v3253
      %v3278 = vmul.f32 %v3244, %v3254
      %v3279 = vmul.f32 %v3245, %v3255
      %v3280 = vld [vmem:[#allocation7] sm:$0xff]
      %v3282 = vperm.slane %v3280, 0
      %v3283 = vperm.slane %v3280, 1
      %v3284 = vperm.slane %v3280, 2
      %v3285 = vperm.slane %v3280, 3
      %v3286 = vperm.slane %v3280, 4
      %v3287 = vperm.slane %v3280, 5
      %v3288 = vperm.slane %v3280, 6
      %v3289 = vperm.slane %v3280, 7
      %v3298 = vadd.f32 %v3264, %v3282
      %v3299 = vadd.f32 %v3265, %v3283
      %v3300 = vadd.f32 %v3266, %v3284
      %v3301 = vadd.f32 %v3267, %v3285
      %v3302 = vadd.f32 %v3268, %v3286
      %v3303 = vadd.f32 %v3269, %v3287
      %v3304 = vadd.f32 %v3270, %v3288
      %v3305 = vadd.f32 %v3271, %v3289
      %v3306 = vadd.f32 %v3272, %v3282
      %v3307 = vadd.f32 %v3273, %v3283
      %v3308 = vadd.f32 %v3274, %v3284
      %v3309 = vadd.f32 %v3275, %v3285
      %v3310 = vadd.f32 %v3276, %v3286
      %v3311 = vadd.f32 %v3277, %v3287
      %v3312 = vadd.f32 %v3278, %v3288
      %v3313 = vadd.f32 %v3279, %v3289
      %v3314 = vmax.f32 %v3298, 0.0
      %v3315 = vmax.f32 %v3299, 0.0
      %v3316 = vmax.f32 %v3300, 0.0
      %v3317 = vmax.f32 %v3301, 0.0
      %v3318 = vmax.f32 %v3302, 0.0
      %v3319 = vmax.f32 %v3303, 0.0
      %v3320 = vmax.f32 %v3304, 0.0
      %v3321 = vmax.f32 %v3305, 0.0
      %v3322 = vmax.f32 %v3306, 0.0
      %v3323 = vmax.f32 %v3307, 0.0
      %v3324 = vmax.f32 %v3308, 0.0
      %v3325 = vmax.f32 %v3309, 0.0
      %v3326 = vmax.f32 %v3310, 0.0
      %v3327 = vmax.f32 %v3311, 0.0
      %v3328 = vmax.f32 %v3312, 0.0
      %v3329 = vmax.f32 %v3313, 0.0
      %v3330 = vpack.c.bf16 %v3322, %v3314
      %v3331 = vpack.c.bf16 %v3323, %v3315
      %v3332 = vpack.c.bf16 %v3324, %v3316
      %v3333 = vpack.c.bf16 %v3325, %v3317
      %v3334 = vpack.c.bf16 %v3326, %v3318
      %v3335 = vpack.c.bf16 %v3327, %v3319
      %v3336 = vpack.c.bf16 %v3328, %v3320
      %v3337 = vpack.c.bf16 %v3329, %v3321
      %v3338 = vld [vmem:[#allocation8] sm:$0xff]
      %v3339 = vld [vmem:[#allocation8 + $0x8] sm:$0xff]
      %v3340 = vld [vmem:[#allocation8 + $0x10] sm:$0xff]
      %v3341 = vld [vmem:[#allocation8 + $0x18] sm:$0xff]
      %v3342 = vld [vmem:[#allocation8 + $0x20] sm:$0xff]
      %v3343 = vld [vmem:[#allocation8 + $0x28] sm:$0xff]
      %v3344 = vld [vmem:[#allocation8 + $0x30] sm:$0xff]
      %v3345 = vld [vmem:[#allocation8 + $0x38] sm:$0xff]
      %v3346 = vld [vmem:[#allocation8 + $0x40] sm:$0xff]
      %v3347 = vld [vmem:[#allocation8 + $0x48] sm:$0xff]
      %v3348 = vld [vmem:[#allocation8 + $0x50] sm:$0xff]
      %v3349 = vld [vmem:[#allocation8 + $0x58] sm:$0xff]
      %v3350 = vld [vmem:[#allocation8 + $0x60] sm:$0xff]
      %v3351 = vld [vmem:[#allocation8 + $0x68] sm:$0xff]
      %v3352 = vld [vmem:[#allocation8 + $0x70] sm:$0xff]
      %v3353 = vld [vmem:[#allocation8 + $0x78] sm:$0xff]
      %v3354 = vld [vmem:[#allocation8 + $0x80] sm:$0xff]
      %v3355 = vld [vmem:[#allocation8 + $0x88] sm:$0xff]
      %v3356 = vld [vmem:[#allocation8 + $0x90] sm:$0xff]
      %v3357 = vld [vmem:[#allocation8 + $0x98] sm:$0xff]
      %v3358 = vld [vmem:[#allocation8 + $0xa0] sm:$0xff]
      %v3359 = vld [vmem:[#allocation8 + $0xa8] sm:$0xff]
      %v3360 = vld [vmem:[#allocation8 + $0xb0] sm:$0xff]
      %v3361 = vld [vmem:[#allocation8 + $0xb8] sm:$0xff]
      %v3362 = vld [vmem:[#allocation8 + $0xc0] sm:$0xff]
      %v3363 = vld [vmem:[#allocation8 + $0xc8] sm:$0xff]
      %v3364 = vld [vmem:[#allocation8 + $0xd0] sm:$0xff]
      %v3365 = vld [vmem:[#allocation8 + $0xd8] sm:$0xff]
      %v3366 = vld [vmem:[#allocation8 + $0xe0] sm:$0xff]
      %v3367 = vld [vmem:[#allocation8 + $0xe8] sm:$0xff]
      %v3368 = vld [vmem:[#allocation8 + $0xf0] sm:$0xff]
      %v3369 = vld [vmem:[#allocation8 + $0xf8] sm:$0xff]
      %v3370 = vld [vmem:[#allocation8 + $0x100] sm:$0xff]
      %v3371 = vld [vmem:[#allocation8 + $0x108] sm:$0xff]
      %v3372 = vld [vmem:[#allocation8 + $0x110] sm:$0xff]
      %v3373 = vld [vmem:[#allocation8 + $0x118] sm:$0xff]
      %v3374 = vld [vmem:[#allocation8 + $0x120] sm:$0xff]
      %v3375 = vld [vmem:[#allocation8 + $0x128] sm:$0xff]
      %v3376 = vld [vmem:[#allocation8 + $0x130] sm:$0xff]
      %v3377 = vld [vmem:[#allocation8 + $0x138] sm:$0xff]
      %v3378 = vld [vmem:[#allocation8 + $0x140] sm:$0xff]
      %v3379 = vld [vmem:[#allocation8 + $0x148] sm:$0xff]
      %v3380 = vld [vmem:[#allocation8 + $0x150] sm:$0xff]
      %v3381 = vld [vmem:[#allocation8 + $0x158] sm:$0xff]
      %v3382 = vld [vmem:[#allocation8 + $0x160] sm:$0xff]
      %v3383 = vld [vmem:[#allocation8 + $0x168] sm:$0xff]
      %v3384 = vld [vmem:[#allocation8 + $0x170] sm:$0xff]
      %v3385 = vld [vmem:[#allocation8 + $0x178] sm:$0xff]
      %v3386 = vld [vmem:[#allocation8 + $0x180] sm:$0xff]
      %v3387 = vld [vmem:[#allocation8 + $0x188] sm:$0xff]
      %v3388 = vld [vmem:[#allocation8 + $0x190] sm:$0xff]
      %v3389 = vld [vmem:[#allocation8 + $0x198] sm:$0xff]
      %v3390 = vld [vmem:[#allocation8 + $0x1a0] sm:$0xff]
      %v3391 = vld [vmem:[#allocation8 + $0x1a8] sm:$0xff]
      %v3392 = vld [vmem:[#allocation8 + $0x1b0] sm:$0xff]
      %v3393 = vld [vmem:[#allocation8 + $0x1b8] sm:$0xff]
      %v3394 = vld [vmem:[#allocation8 + $0x1c0] sm:$0xff]
      %v3395 = vld [vmem:[#allocation8 + $0x1c8] sm:$0xff]
      %v3396 = vld [vmem:[#allocation8 + $0x1d0] sm:$0xff]
      %v3397 = vld [vmem:[#allocation8 + $0x1d8] sm:$0xff]
      %v3398 = vld [vmem:[#allocation8 + $0x1e0] sm:$0xff]
      %v3399 = vld [vmem:[#allocation8 + $0x1e8] sm:$0xff]
      %v3400 = vld [vmem:[#allocation8 + $0x1f0] sm:$0xff]
      %v3401 = vld [vmem:[#allocation8 + $0x1f8] sm:$0xff]
      %v3402 = vld [vmem:[#allocation8 + $0x200] sm:$0xff]
      %v3403 = vld [vmem:[#allocation8 + $0x208] sm:$0xff]
      %v3404 = vld [vmem:[#allocation8 + $0x210] sm:$0xff]
      %v3405 = vld [vmem:[#allocation8 + $0x218] sm:$0xff]
      %v3406 = vld [vmem:[#allocation8 + $0x220] sm:$0xff]
      %v3407 = vld [vmem:[#allocation8 + $0x228] sm:$0xff]
      %v3408 = vld [vmem:[#allocation8 + $0x230] sm:$0xff]
      %v3409 = vld [vmem:[#allocation8 + $0x238] sm:$0xff]
      %v3410 = vld [vmem:[#allocation8 + $0x240] sm:$0xff]
      %v3411 = vld [vmem:[#allocation8 + $0x248] sm:$0xff]
      %v3412 = vld [vmem:[#allocation8 + $0x250] sm:$0xff]
      %v3413 = vld [vmem:[#allocation8 + $0x258] sm:$0xff]
      %v3414 = vld [vmem:[#allocation8 + $0x260] sm:$0xff]
      %v3415 = vld [vmem:[#allocation8 + $0x268] sm:$0xff]
      %v3416 = vld [vmem:[#allocation8 + $0x270] sm:$0xff]
      %v3417 = vld [vmem:[#allocation8 + $0x278] sm:$0xff]
      %v3418 = vld [vmem:[#allocation8 + $0x280] sm:$0xff]
      %v3419 = vld [vmem:[#allocation8 + $0x288] sm:$0xff]
      %v3420 = vld [vmem:[#allocation8 + $0x290] sm:$0xff]
      %v3421 = vld [vmem:[#allocation8 + $0x298] sm:$0xff]
      %v3422 = vld [vmem:[#allocation8 + $0x2a0] sm:$0xff]
      %v3423 = vld [vmem:[#allocation8 + $0x2a8] sm:$0xff]
      %v3424 = vld [vmem:[#allocation8 + $0x2b0] sm:$0xff]
      %v3425 = vld [vmem:[#allocation8 + $0x2b8] sm:$0xff]
      %v3426 = vld [vmem:[#allocation8 + $0x2c0] sm:$0xff]
      %v3427 = vld [vmem:[#allocation8 + $0x2c8] sm:$0xff]
      %v3428 = vld [vmem:[#allocation8 + $0x2d0] sm:$0xff]
      %v3429 = vld [vmem:[#allocation8 + $0x2d8] sm:$0xff]
      %v3430 = vld [vmem:[#allocation8 + $0x2e0] sm:$0xff]
      %v3431 = vld [vmem:[#allocation8 + $0x2e8] sm:$0xff]
      %v3432 = vld [vmem:[#allocation8 + $0x2f0] sm:$0xff]
      %v3433 = vld [vmem:[#allocation8 + $0x2f8] sm:$0xff]
      %v3434 = vld [vmem:[#allocation8 + $0x300] sm:$0xff]
      %v3435 = vld [vmem:[#allocation8 + $0x308] sm:$0xff]
      %v3436 = vld [vmem:[#allocation8 + $0x310] sm:$0xff]
      %v3437 = vld [vmem:[#allocation8 + $0x318] sm:$0xff]
      %v3438 = vld [vmem:[#allocation8 + $0x320] sm:$0xff]
      %v3439 = vld [vmem:[#allocation8 + $0x328] sm:$0xff]
      %v3440 = vld [vmem:[#allocation8 + $0x330] sm:$0xff]
      %v3441 = vld [vmem:[#allocation8 + $0x338] sm:$0xff]
      %v3442 = vld [vmem:[#allocation8 + $0x340] sm:$0xff]
      %v3443 = vld [vmem:[#allocation8 + $0x348] sm:$0xff]
      %v3444 = vld [vmem:[#allocation8 + $0x350] sm:$0xff]
      %v3445 = vld [vmem:[#allocation8 + $0x358] sm:$0xff]
      %v3446 = vld [vmem:[#allocation8 + $0x360] sm:$0xff]
      %v3447 = vld [vmem:[#allocation8 + $0x368] sm:$0xff]
      %v3448 = vld [vmem:[#allocation8 + $0x370] sm:$0xff]
      %v3449 = vld [vmem:[#allocation8 + $0x378] sm:$0xff]
      %v3450 = vld [vmem:[#allocation8 + $0x380] sm:$0xff]
      %v3451 = vld [vmem:[#allocation8 + $0x388] sm:$0xff]
      %v3452 = vld [vmem:[#allocation8 + $0x390] sm:$0xff]
      %v3453 = vld [vmem:[#allocation8 + $0x398] sm:$0xff]
      %v3454 = vld [vmem:[#allocation8 + $0x3a0] sm:$0xff]
      %v3455 = vld [vmem:[#allocation8 + $0x3a8] sm:$0xff]
      %v3456 = vld [vmem:[#allocation8 + $0x3b0] sm:$0xff]
      %v3457 = vld [vmem:[#allocation8 + $0x3b8] sm:$0xff]
      %v3458 = vld [vmem:[#allocation8 + $0x3c0] sm:$0xff]
      %v3459 = vld [vmem:[#allocation8 + $0x3c8] sm:$0xff]
      %v3460 = vld [vmem:[#allocation8 + $0x3d0] sm:$0xff]
      %v3461 = vld [vmem:[#allocation8 + $0x3d8] sm:$0xff]
      %v3462 = vld [vmem:[#allocation8 + $0x3e0] sm:$0xff]
      %v3463 = vld [vmem:[#allocation8 + $0x3e8] sm:$0xff]
      %v3464 = vld [vmem:[#allocation8 + $0x3f0] sm:$0xff]
      %v3465 = vld [vmem:[#allocation8 + $0x3f8] sm:$0xff]
      %v3466 = vld [vmem:[#allocation8 + $0x400] sm:$0xff]
      %v3467 = vld [vmem:[#allocation8 + $0x408] sm:$0xff]
      %v3468 = vld [vmem:[#allocation8 + $0x410] sm:$0xff]
      %v3469 = vld [vmem:[#allocation8 + $0x418] sm:$0xff]
      %v3470 = vld [vmem:[#allocation8 + $0x420] sm:$0xff]
      %v3471 = vld [vmem:[#allocation8 + $0x428] sm:$0xff]
      %v3472 = vld [vmem:[#allocation8 + $0x430] sm:$0xff]
      %v3473 = vld [vmem:[#allocation8 + $0x438] sm:$0xff]
      %v3474 = vld [vmem:[#allocation8 + $0x440] sm:$0xff]
      %v3475 = vld [vmem:[#allocation8 + $0x448] sm:$0xff]
      %v3476 = vld [vmem:[#allocation8 + $0x450] sm:$0xff]
      %v3477 = vld [vmem:[#allocation8 + $0x458] sm:$0xff]
      %v3478 = vld [vmem:[#allocation8 + $0x460] sm:$0xff]
      %v3479 = vld [vmem:[#allocation8 + $0x468] sm:$0xff]
      %v3480 = vld [vmem:[#allocation8 + $0x470] sm:$0xff]
      %v3481 = vld [vmem:[#allocation8 + $0x478] sm:$0xff]
      %v3482 = vld [vmem:[#allocation8 + $0x480] sm:$0xff]
      %v3483 = vld [vmem:[#allocation8 + $0x488] sm:$0xff]
      %v3484 = vld [vmem:[#allocation8 + $0x490] sm:$0xff]
      %v3485 = vld [vmem:[#allocation8 + $0x498] sm:$0xff]
      %v3486 = vld [vmem:[#allocation8 + $0x4a0] sm:$0xff]
      %v3487 = vld [vmem:[#allocation8 + $0x4a8] sm:$0xff]
      %v3488 = vld [vmem:[#allocation8 + $0x4b0] sm:$0xff]
      %v3489 = vld [vmem:[#allocation8 + $0x4b8] sm:$0xff]
      %v3490 = vld [vmem:[#allocation8 + $0x4c0] sm:$0xff]
      %v3491 = vld [vmem:[#allocation8 + $0x4c8] sm:$0xff]
      %v3492 = vld [vmem:[#allocation8 + $0x4d0] sm:$0xff]
      %v3493 = vld [vmem:[#allocation8 + $0x4d8] sm:$0xff]
      %v3494 = vld [vmem:[#allocation8 + $0x4e0] sm:$0xff]
      %v3495 = vld [vmem:[#allocation8 + $0x4e8] sm:$0xff]
      %v3496 = vld [vmem:[#allocation8 + $0x4f0] sm:$0xff]
      %v3497 = vld [vmem:[#allocation8 + $0x4f8] sm:$0xff]
      %v3498 = vld [vmem:[#allocation8 + $0x500] sm:$0xff]
      %v3499 = vld [vmem:[#allocation8 + $0x508] sm:$0xff]
      %v3500 = vld [vmem:[#allocation8 + $0x510] sm:$0xff]
      %v3501 = vld [vmem:[#allocation8 + $0x518] sm:$0xff]
      %v3502 = vld [vmem:[#allocation8 + $0x520] sm:$0xff]
      %v3503 = vld [vmem:[#allocation8 + $0x528] sm:$0xff]
      %v3504 = vld [vmem:[#allocation8 + $0x530] sm:$0xff]
      %v3505 = vld [vmem:[#allocation8 + $0x538] sm:$0xff]
      %v3506 = vld [vmem:[#allocation8 + $0x540] sm:$0xff]
      %v3507 = vld [vmem:[#allocation8 + $0x548] sm:$0xff]
      %v3508 = vld [vmem:[#allocation8 + $0x550] sm:$0xff]
      %v3509 = vld [vmem:[#allocation8 + $0x558] sm:$0xff]
      %v3510 = vld [vmem:[#allocation8 + $0x560] sm:$0xff]
      %v3511 = vld [vmem:[#allocation8 + $0x568] sm:$0xff]
      %v3512 = vld [vmem:[#allocation8 + $0x570] sm:$0xff]
      %v3513 = vld [vmem:[#allocation8 + $0x578] sm:$0xff]
      %v3514 = vld [vmem:[#allocation8 + $0x580] sm:$0xff]
      %v3515 = vld [vmem:[#allocation8 + $0x588] sm:$0xff]
      %v3516 = vld [vmem:[#allocation8 + $0x590] sm:$0xff]
      %v3517 = vld [vmem:[#allocation8 + $0x598] sm:$0xff]
      %v3518 = vld [vmem:[#allocation8 + $0x5a0] sm:$0xff]
      %v3519 = vld [vmem:[#allocation8 + $0x5a8] sm:$0xff]
      %v3520 = vld [vmem:[#allocation8 + $0x5b0] sm:$0xff]
      %v3521 = vld [vmem:[#allocation8 + $0x5b8] sm:$0xff]
      %v3522 = vld [vmem:[#allocation8 + $0x5c0] sm:$0xff]
      %v3523 = vld [vmem:[#allocation8 + $0x5c8] sm:$0xff]
      %v3524 = vld [vmem:[#allocation8 + $0x5d0] sm:$0xff]
      %v3525 = vld [vmem:[#allocation8 + $0x5d8] sm:$0xff]
      %v3526 = vld [vmem:[#allocation8 + $0x5e0] sm:$0xff]
      %v3527 = vld [vmem:[#allocation8 + $0x5e8] sm:$0xff]
      %v3528 = vld [vmem:[#allocation8 + $0x5f0] sm:$0xff]
      %v3529 = vld [vmem:[#allocation8 + $0x5f8] sm:$0xff]
      %v3530 = vld [vmem:[#allocation8 + $0x600] sm:$0xff]
      %v3531 = vld [vmem:[#allocation8 + $0x608] sm:$0xff]
      %v3532 = vld [vmem:[#allocation8 + $0x610] sm:$0xff]
      %v3533 = vld [vmem:[#allocation8 + $0x618] sm:$0xff]
      %v3534 = vld [vmem:[#allocation8 + $0x620] sm:$0xff]
      %v3535 = vld [vmem:[#allocation8 + $0x628] sm:$0xff]
      %v3536 = vld [vmem:[#allocation8 + $0x630] sm:$0xff]
      %v3537 = vld [vmem:[#allocation8 + $0x638] sm:$0xff]
      %v3538 = vld [vmem:[#allocation8 + $0x640] sm:$0xff]
      %v3539 = vld [vmem:[#allocation8 + $0x648] sm:$0xff]
      %v3540 = vld [vmem:[#allocation8 + $0x650] sm:$0xff]
      %v3541 = vld [vmem:[#allocation8 + $0x658] sm:$0xff]
      %v3542 = vld [vmem:[#allocation8 + $0x660] sm:$0xff]
      %v3543 = vld [vmem:[#allocation8 + $0x668] sm:$0xff]
      %v3544 = vld [vmem:[#allocation8 + $0x670] sm:$0xff]
      %v3545 = vld [vmem:[#allocation8 + $0x678] sm:$0xff]
      %v3546 = vld [vmem:[#allocation8 + $0x680] sm:$0xff]
      %v3547 = vld [vmem:[#allocation8 + $0x688] sm:$0xff]
      %v3548 = vld [vmem:[#allocation8 + $0x690] sm:$0xff]
      %v3549 = vld [vmem:[#allocation8 + $0x698] sm:$0xff]
      %v3550 = vld [vmem:[#allocation8 + $0x6a0] sm:$0xff]
      %v3551 = vld [vmem:[#allocation8 + $0x6a8] sm:$0xff]
      %v3552 = vld [vmem:[#allocation8 + $0x6b0] sm:$0xff]
      %v3553 = vld [vmem:[#allocation8 + $0x6b8] sm:$0xff]
      %v3554 = vld [vmem:[#allocation8 + $0x6c0] sm:$0xff]
      %v3555 = vld [vmem:[#allocation8 + $0x6c8] sm:$0xff]
      %v3556 = vld [vmem:[#allocation8 + $0x6d0] sm:$0xff]
      %v3557 = vld [vmem:[#allocation8 + $0x6d8] sm:$0xff]
      %v3558 = vld [vmem:[#allocation8 + $0x6e0] sm:$0xff]
      %v3559 = vld [vmem:[#allocation8 + $0x6e8] sm:$0xff]
      %v3560 = vld [vmem:[#allocation8 + $0x6f0] sm:$0xff]
      %v3561 = vld [vmem:[#allocation8 + $0x6f8] sm:$0xff]
      %v3562 = vld [vmem:[#allocation8 + $0x700] sm:$0xff]
      %v3563 = vld [vmem:[#allocation8 + $0x708] sm:$0xff]
      %v3564 = vld [vmem:[#allocation8 + $0x710] sm:$0xff]
      %v3565 = vld [vmem:[#allocation8 + $0x718] sm:$0xff]
      %v3566 = vld [vmem:[#allocation8 + $0x720] sm:$0xff]
      %v3567 = vld [vmem:[#allocation8 + $0x728] sm:$0xff]
      %v3568 = vld [vmem:[#allocation8 + $0x730] sm:$0xff]
      %v3569 = vld [vmem:[#allocation8 + $0x738] sm:$0xff]
      %v3570 = vld [vmem:[#allocation8 + $0x740] sm:$0xff]
      %v3571 = vld [vmem:[#allocation8 + $0x748] sm:$0xff]
      %v3572 = vld [vmem:[#allocation8 + $0x750] sm:$0xff]
      %v3573 = vld [vmem:[#allocation8 + $0x758] sm:$0xff]
      %v3574 = vld [vmem:[#allocation8 + $0x760] sm:$0xff]
      %v3575 = vld [vmem:[#allocation8 + $0x768] sm:$0xff]
      %v3576 = vld [vmem:[#allocation8 + $0x770] sm:$0xff]
      %v3577 = vld [vmem:[#allocation8 + $0x778] sm:$0xff]
      %v3578 = vld [vmem:[#allocation8 + $0x780] sm:$0xff]
      %v3579 = vld [vmem:[#allocation8 + $0x788] sm:$0xff]
      %v3580 = vld [vmem:[#allocation8 + $0x790] sm:$0xff]
      %v3581 = vld [vmem:[#allocation8 + $0x798] sm:$0xff]
      %v3582 = vld [vmem:[#allocation8 + $0x7a0] sm:$0xff]
      %v3583 = vld [vmem:[#allocation8 + $0x7a8] sm:$0xff]
      %v3584 = vld [vmem:[#allocation8 + $0x7b0] sm:$0xff]
      %v3585 = vld [vmem:[#allocation8 + $0x7b8] sm:$0xff]
      %v3586 = vld [vmem:[#allocation8 + $0x7c0] sm:$0xff]
      %v3587 = vld [vmem:[#allocation8 + $0x7c8] sm:$0xff]
      %v3588 = vld [vmem:[#allocation8 + $0x7d0] sm:$0xff]
      %v3589 = vld [vmem:[#allocation8 + $0x7d8] sm:$0xff]
      %v3590 = vld [vmem:[#allocation8 + $0x7e0] sm:$0xff]
      %v3591 = vld [vmem:[#allocation8 + $0x7e8] sm:$0xff]
      %v3592 = vld [vmem:[#allocation8 + $0x7f0] sm:$0xff]
      %v3593 = vld [vmem:[#allocation8 + $0x7f8] sm:$0xff]
      %v3594 = vld [vmem:[#allocation10] sm:$0xf]
      %v3596 = vperm.slane %v3594, 0
      %v3597 = vperm.slane %v3594, 1
      %v3598 = vperm.slane %v3594, 2
      %v3599 = vperm.slane %v3594, 3
      %v3860 = vunpack.c.l.b16 %v3338
      %v3861 = vunpack.c.h.b16 %v3338
      %v3862 = vunpack.c.l.b16 %v3339
      %v3863 = vunpack.c.h.b16 %v3339
      %v3864 = vunpack.c.l.b16 %v3340
      %v3865 = vunpack.c.h.b16 %v3340
      %v3866 = vunpack.c.l.b16 %v3341
      %v3867 = vunpack.c.h.b16 %v3341
      %v3868 = vunpack.c.l.b16 %v3342
      %v3869 = vunpack.c.h.b16 %v3342
      %v3870 = vunpack.c.l.b16 %v3343
      %v3871 = vunpack.c.h.b16 %v3343
      %v3872 = vunpack.c.l.b16 %v3344
      %v3873 = vunpack.c.h.b16 %v3344
      %v3874 = vunpack.c.l.b16 %v3345
      %v3875 = vunpack.c.h.b16 %v3345
      %v3876 = vunpack.c.l.b16 %v3346
      %v3877 = vunpack.c.h.b16 %v3346
      %v3878 = vunpack.c.l.b16 %v3347
      %v3879 = vunpack.c.h.b16 %v3347
      %v3880 = vunpack.c.l.b16 %v3348
      %v3881 = vunpack.c.h.b16 %v3348
      %v3882 = vunpack.c.l.b16 %v3349
      %v3883 = vunpack.c.h.b16 %v3349
      %v3884 = vunpack.c.l.b16 %v3350
      %v3885 = vunpack.c.h.b16 %v3350
      %v3886 = vunpack.c.l.b16 %v3351
      %v3887 = vunpack.c.h.b16 %v3351
      %v3888 = vunpack.c.l.b16 %v3352
      %v3889 = vunpack.c.h.b16 %v3352
      %v3890 = vunpack.c.l.b16 %v3353
      %v3891 = vunpack.c.h.b16 %v3353
      %v3892 = vunpack.c.l.b16 %v3354
      %v3893 = vunpack.c.h.b16 %v3354
      %v3894 = vunpack.c.l.b16 %v3355
      %v3895 = vunpack.c.h.b16 %v3355
      %v3896 = vunpack.c.l.b16 %v3356
      %v3897 = vunpack.c.h.b16 %v3356
      %v3898 = vunpack.c.l.b16 %v3357
      %v3899 = vunpack.c.h.b16 %v3357
      %v3900 = vunpack.c.l.b16 %v3358
      %v3901 = vunpack.c.h.b16 %v3358
      %v3902 = vunpack.c.l.b16 %v3359
      %v3903 = vunpack.c.h.b16 %v3359
      %v3904 = vunpack.c.l.b16 %v3360
      %v3905 = vunpack.c.h.b16 %v3360
      %v3906 = vunpack.c.l.b16 %v3361
      %v3907 = vunpack.c.h.b16 %v3361
      %v3908 = vunpack.c.l.b16 %v3362
      %v3909 = vunpack.c.h.b16 %v3362
      %v3910 = vunpack.c.l.b16 %v3363
      %v3911 = vunpack.c.h.b16 %v3363
      %v3912 = vunpack.c.l.b16 %v3364
      %v3913 = vunpack.c.h.b16 %v3364
      %v3914 = vunpack.c.l.b16 %v3365
      %v3915 = vunpack.c.h.b16 %v3365
      %v3916 = vunpack.c.l.b16 %v3366
      %v3917 = vunpack.c.h.b16 %v3366
      %v3918 = vunpack.c.l.b16 %v3367
      %v3919 = vunpack.c.h.b16 %v3367
      %v3920 = vunpack.c.l.b16 %v3368
      %v3921 = vunpack.c.h.b16 %v3368
      %v3922 = vunpack.c.l.b16 %v3369
      %v3923 = vunpack.c.h.b16 %v3369
      %v3924 = vunpack.c.l.b16 %v3370
      %v3925 = vunpack.c.h.b16 %v3370
      %v3926 = vunpack.c.l.b16 %v3371
      %v3927 = vunpack.c.h.b16 %v3371
      %v3928 = vunpack.c.l.b16 %v3372
      %v3929 = vunpack.c.h.b16 %v3372
      %v3930 = vunpack.c.l.b16 %v3373
      %v3931 = vunpack.c.h.b16 %v3373
      %v3932 = vunpack.c.l.b16 %v3374
      %v3933 = vunpack.c.h.b16 %v3374
      %v3934 = vunpack.c.l.b16 %v3375
      %v3935 = vunpack.c.h.b16 %v3375
      %v3936 = vunpack.c.l.b16 %v3376
      %v3937 = vunpack.c.h.b16 %v3376
      %v3938 = vunpack.c.l.b16 %v3377
      %v3939 = vunpack.c.h.b16 %v3377
      %v3940 = vunpack.c.l.b16 %v3378
      %v3941 = vunpack.c.h.b16 %v3378
      %v3942 = vunpack.c.l.b16 %v3379
      %v3943 = vunpack.c.h.b16 %v3379
      %v3944 = vunpack.c.l.b16 %v3380
      %v3945 = vunpack.c.h.b16 %v3380
      %v3946 = vunpack.c.l.b16 %v3381
      %v3947 = vunpack.c.h.b16 %v3381
      %v3948 = vunpack.c.l.b16 %v3382
      %v3949 = vunpack.c.h.b16 %v3382
      %v3950 = vunpack.c.l.b16 %v3383
      %v3951 = vunpack.c.h.b16 %v3383
      %v3952 = vunpack.c.l.b16 %v3384
      %v3953 = vunpack.c.h.b16 %v3384
      %v3954 = vunpack.c.l.b16 %v3385
      %v3955 = vunpack.c.h.b16 %v3385
      %v3956 = vunpack.c.l.b16 %v3386
      %v3957 = vunpack.c.h.b16 %v3386
      %v3958 = vunpack.c.l.b16 %v3387
      %v3959 = vunpack.c.h.b16 %v3387
      %v3960 = vunpack.c.l.b16 %v3388
      %v3961 = vunpack.c.h.b16 %v3388
      %v3962 = vunpack.c.l.b16 %v3389
      %v3963 = vunpack.c.h.b16 %v3389
      %v3964 = vunpack.c.l.b16 %v3390
      %v3965 = vunpack.c.h.b16 %v3390
      %v3966 = vunpack.c.l.b16 %v3391
      %v3967 = vunpack.c.h.b16 %v3391
      %v3968 = vunpack.c.l.b16 %v3392
      %v3969 = vunpack.c.h.b16 %v3392
      %v3970 = vunpack.c.l.b16 %v3393
      %v3971 = vunpack.c.h.b16 %v3393
      %v3972 = vunpack.c.l.b16 %v3394
      %v3973 = vunpack.c.h.b16 %v3394
      %v3974 = vunpack.c.l.b16 %v3395
      %v3975 = vunpack.c.h.b16 %v3395
      %v3976 = vunpack.c.l.b16 %v3396
      %v3977 = vunpack.c.h.b16 %v3396
      %v3978 = vunpack.c.l.b16 %v3397
      %v3979 = vunpack.c.h.b16 %v3397
      %v3980 = vunpack.c.l.b16 %v3398
      %v3981 = vunpack.c.h.b16 %v3398
      %v3982 = vunpack.c.l.b16 %v3399
      %v3983 = vunpack.c.h.b16 %v3399
      %v3984 = vunpack.c.l.b16 %v3400
      %v3985 = vunpack.c.h.b16 %v3400
      %v3986 = vunpack.c.l.b16 %v3401
      %v3987 = vunpack.c.h.b16 %v3401
      %v3988 = vunpack.c.l.b16 %v3402
      %v3989 = vunpack.c.h.b16 %v3402
      %v3990 = vunpack.c.l.b16 %v3403
      %v3991 = vunpack.c.h.b16 %v3403
      %v3992 = vunpack.c.l.b16 %v3404
      %v3993 = vunpack.c.h.b16 %v3404
      %v3994 = vunpack.c.l.b16 %v3405
      %v3995 = vunpack.c.h.b16 %v3405
      %v3996 = vunpack.c.l.b16 %v3406
      %v3997 = vunpack.c.h.b16 %v3406
      %v3998 = vunpack.c.l.b16 %v3407
      %v3999 = vunpack.c.h.b16 %v3407
      %v4000 = vunpack.c.l.b16 %v3408
      %v4001 = vunpack.c.h.b16 %v3408
      %v4002 = vunpack.c.l.b16 %v3409
      %v4003 = vunpack.c.h.b16 %v3409
      %v4004 = vunpack.c.l.b16 %v3410
      %v4005 = vunpack.c.h.b16 %v3410
      %v4006 = vunpack.c.l.b16 %v3411
      %v4007 = vunpack.c.h.b16 %v3411
      %v4008 = vunpack.c.l.b16 %v3412
      %v4009 = vunpack.c.h.b16 %v3412
      %v4010 = vunpack.c.l.b16 %v3413
      %v4011 = vunpack.c.h.b16 %v3413
      %v4012 = vunpack.c.l.b16 %v3414
      %v4013 = vunpack.c.h.b16 %v3414
      %v4014 = vunpack.c.l.b16 %v3415
      %v4015 = vunpack.c.h.b16 %v3415
      %v4016 = vunpack.c.l.b16 %v3416
      %v4017 = vunpack.c.h.b16 %v3416
      %v4018 = vunpack.c.l.b16 %v3417
      %v4019 = vunpack.c.h.b16 %v3417
      %v4020 = vunpack.c.l.b16 %v3418
      %v4021 = vunpack.c.h.b16 %v3418
      %v4022 = vunpack.c.l.b16 %v3419
      %v4023 = vunpack.c.h.b16 %v3419
      %v4024 = vunpack.c.l.b16 %v3420
      %v4025 = vunpack.c.h.b16 %v3420
      %v4026 = vunpack.c.l.b16 %v3421
      %v4027 = vunpack.c.h.b16 %v3421
      %v4028 = vunpack.c.l.b16 %v3422
      %v4029 = vunpack.c.h.b16 %v3422
      %v4030 = vunpack.c.l.b16 %v3423
      %v4031 = vunpack.c.h.b16 %v3423
      %v4032 = vunpack.c.l.b16 %v3424
      %v4033 = vunpack.c.h.b16 %v3424
      %v4034 = vunpack.c.l.b16 %v3425
      %v4035 = vunpack.c.h.b16 %v3425
      %v4036 = vunpack.c.l.b16 %v3426
      %v4037 = vunpack.c.h.b16 %v3426
      %v4038 = vunpack.c.l.b16 %v3427
      %v4039 = vunpack.c.h.b16 %v3427
      %v4040 = vunpack.c.l.b16 %v3428
      %v4041 = vunpack.c.h.b16 %v3428
      %v4042 = vunpack.c.l.b16 %v3429
      %v4043 = vunpack.c.h.b16 %v3429
      %v4044 = vunpack.c.l.b16 %v3430
      %v4045 = vunpack.c.h.b16 %v3430
      %v4046 = vunpack.c.l.b16 %v3431
      %v4047 = vunpack.c.h.b16 %v3431
      %v4048 = vunpack.c.l.b16 %v3432
      %v4049 = vunpack.c.h.b16 %v3432
      %v4050 = vunpack.c.l.b16 %v3433
      %v4051 = vunpack.c.h.b16 %v3433
      %v4052 = vunpack.c.l.b16 %v3434
      %v4053 = vunpack.c.h.b16 %v3434
      %v4054 = vunpack.c.l.b16 %v3435
      %v4055 = vunpack.c.h.b16 %v3435
      %v4056 = vunpack.c.l.b16 %v3436
      %v4057 = vunpack.c.h.b16 %v3436
      %v4058 = vunpack.c.l.b16 %v3437
      %v4059 = vunpack.c.h.b16 %v3437
      %v4060 = vunpack.c.l.b16 %v3438
      %v4061 = vunpack.c.h.b16 %v3438
      %v4062 = vunpack.c.l.b16 %v3439
      %v4063 = vunpack.c.h.b16 %v3439
      %v4064 = vunpack.c.l.b16 %v3440
      %v4065 = vunpack.c.h.b16 %v3440
      %v4066 = vunpack.c.l.b16 %v3441
      %v4067 = vunpack.c.h.b16 %v3441
      %v4068 = vunpack.c.l.b16 %v3442
      %v4069 = vunpack.c.h.b16 %v3442
      %v4070 = vunpack.c.l.b16 %v3443
      %v4071 = vunpack.c.h.b16 %v3443
      %v4072 = vunpack.c.l.b16 %v3444
      %v4073 = vunpack.c.h.b16 %v3444
      %v4074 = vunpack.c.l.b16 %v3445
      %v4075 = vunpack.c.h.b16 %v3445
      %v4076 = vunpack.c.l.b16 %v3446
      %v4077 = vunpack.c.h.b16 %v3446
      %v4078 = vunpack.c.l.b16 %v3447
      %v4079 = vunpack.c.h.b16 %v3447
      %v4080 = vunpack.c.l.b16 %v3448
      %v4081 = vunpack.c.h.b16 %v3448
      %v4082 = vunpack.c.l.b16 %v3449
      %v4083 = vunpack.c.h.b16 %v3449
      %v4084 = vunpack.c.l.b16 %v3450
      %v4085 = vunpack.c.h.b16 %v3450
      %v4086 = vunpack.c.l.b16 %v3451
      %v4087 = vunpack.c.h.b16 %v3451
      %v4088 = vunpack.c.l.b16 %v3452
      %v4089 = vunpack.c.h.b16 %v3452
      %v4090 = vunpack.c.l.b16 %v3453
      %v4091 = vunpack.c.h.b16 %v3453
      %v4092 = vunpack.c.l.b16 %v3454
      %v4093 = vunpack.c.h.b16 %v3454
      %v4094 = vunpack.c.l.b16 %v3455
      %v4095 = vunpack.c.h.b16 %v3455
      %v4096 = vunpack.c.l.b16 %v3456
      %v4097 = vunpack.c.h.b16 %v3456
      %v4098 = vunpack.c.l.b16 %v3457
      %v4099 = vunpack.c.h.b16 %v3457
      %v4100 = vunpack.c.l.b16 %v3458
      %v4101 = vunpack.c.h.b16 %v3458
      %v4102 = vunpack.c.l.b16 %v3459
      %v4103 = vunpack.c.h.b16 %v3459
      %v4104 = vunpack.c.l.b16 %v3460
      %v4105 = vunpack.c.h.b16 %v3460
      %v4106 = vunpack.c.l.b16 %v3461
      %v4107 = vunpack.c.h.b16 %v3461
      %v4108 = vunpack.c.l.b16 %v3462
      %v4109 = vunpack.c.h.b16 %v3462
      %v4110 = vunpack.c.l.b16 %v3463
      %v4111 = vunpack.c.h.b16 %v3463
      %v4112 = vunpack.c.l.b16 %v3464
      %v4113 = vunpack.c.h.b16 %v3464
      %v4114 = vunpack.c.l.b16 %v3465
      %v4115 = vunpack.c.h.b16 %v3465
      %v4116 = vunpack.c.l.b16 %v3466
      %v4117 = vunpack.c.h.b16 %v3466
      %v4118 = vunpack.c.l.b16 %v3467
      %v4119 = vunpack.c.h.b16 %v3467
      %v4120 = vunpack.c.l.b16 %v3468
      %v4121 = vunpack.c.h.b16 %v3468
      %v4122 = vunpack.c.l.b16 %v3469
      %v4123 = vunpack.c.h.b16 %v3469
      %v4124 = vunpack.c.l.b16 %v3470
      %v4125 = vunpack.c.h.b16 %v3470
      %v4126 = vunpack.c.l.b16 %v3471
      %v4127 = vunpack.c.h.b16 %v3471
      %v4128 = vunpack.c.l.b16 %v3472
      %v4129 = vunpack.c.h.b16 %v3472
      %v4130 = vunpack.c.l.b16 %v3473
      %v4131 = vunpack.c.h.b16 %v3473
      %v4132 = vunpack.c.l.b16 %v3474
      %v4133 = vunpack.c.h.b16 %v3474
      %v4134 = vunpack.c.l.b16 %v3475
      %v4135 = vunpack.c.h.b16 %v3475
      %v4136 = vunpack.c.l.b16 %v3476
      %v4137 = vunpack.c.h.b16 %v3476
      %v4138 = vunpack.c.l.b16 %v3477
      %v4139 = vunpack.c.h.b16 %v3477
      %v4140 = vunpack.c.l.b16 %v3478
      %v4141 = vunpack.c.h.b16 %v3478
      %v4142 = vunpack.c.l.b16 %v3479
      %v4143 = vunpack.c.h.b16 %v3479
      %v4144 = vunpack.c.l.b16 %v3480
      %v4145 = vunpack.c.h.b16 %v3480
      %v4146 = vunpack.c.l.b16 %v3481
      %v4147 = vunpack.c.h.b16 %v3481
      %v4148 = vunpack.c.l.b16 %v3482
      %v4149 = vunpack.c.h.b16 %v3482
      %v4150 = vunpack.c.l.b16 %v3483
      %v4151 = vunpack.c.h.b16 %v3483
      %v4152 = vunpack.c.l.b16 %v3484
      %v4153 = vunpack.c.h.b16 %v3484
      %v4154 = vunpack.c.l.b16 %v3485
      %v4155 = vunpack.c.h.b16 %v3485
      %v4156 = vunpack.c.l.b16 %v3486
      %v4157 = vunpack.c.h.b16 %v3486
      %v4158 = vunpack.c.l.b16 %v3487
      %v4159 = vunpack.c.h.b16 %v3487
      %v4160 = vunpack.c.l.b16 %v3488
      %v4161 = vunpack.c.h.b16 %v3488
      %v4162 = vunpack.c.l.b16 %v3489
      %v4163 = vunpack.c.h.b16 %v3489
      %v4164 = vunpack.c.l.b16 %v3490
      %v4165 = vunpack.c.h.b16 %v3490
      %v4166 = vunpack.c.l.b16 %v3491
      %v4167 = vunpack.c.h.b16 %v3491
      %v4168 = vunpack.c.l.b16 %v3492
      %v4169 = vunpack.c.h.b16 %v3492
      %v4170 = vunpack.c.l.b16 %v3493
      %v4171 = vunpack.c.h.b16 %v3493
      %v4172 = vunpack.c.l.b16 %v3494
      %v4173 = vunpack.c.h.b16 %v3494
      %v4174 = vunpack.c.l.b16 %v3495
      %v4175 = vunpack.c.h.b16 %v3495
      %v4176 = vunpack.c.l.b16 %v3496
      %v4177 = vunpack.c.h.b16 %v3496
      %v4178 = vunpack.c.l.b16 %v3497
      %v4179 = vunpack.c.h.b16 %v3497
      %v4180 = vunpack.c.l.b16 %v3498
      %v4181 = vunpack.c.h.b16 %v3498
      %v4182 = vunpack.c.l.b16 %v3499
      %v4183 = vunpack.c.h.b16 %v3499
      %v4184 = vunpack.c.l.b16 %v3500
      %v4185 = vunpack.c.h.b16 %v3500
      %v4186 = vunpack.c.l.b16 %v3501
      %v4187 = vunpack.c.h.b16 %v3501
      %v4188 = vunpack.c.l.b16 %v3502
      %v4189 = vunpack.c.h.b16 %v3502
      %v4190 = vunpack.c.l.b16 %v3503
      %v4191 = vunpack.c.h.b16 %v3503
      %v4192 = vunpack.c.l.b16 %v3504
      %v4193 = vunpack.c.h.b16 %v3504
      %v4194 = vunpack.c.l.b16 %v3505
      %v4195 = vunpack.c.h.b16 %v3505
      %v4196 = vunpack.c.l.b16 %v3506
      %v4197 = vunpack.c.h.b16 %v3506
      %v4198 = vunpack.c.l.b16 %v3507
      %v4199 = vunpack.c.h.b16 %v3507
      %v4200 = vunpack.c.l.b16 %v3508
      %v4201 = vunpack.c.h.b16 %v3508
      %v4202 = vunpack.c.l.b16 %v3509
      %v4203 = vunpack.c.h.b16 %v3509
      %v4204 = vunpack.c.l.b16 %v3510
      %v4205 = vunpack.c.h.b16 %v3510
      %v4206 = vunpack.c.l.b16 %v3511
      %v4207 = vunpack.c.h.b16 %v3511
      %v4208 = vunpack.c.l.b16 %v3512
      %v4209 = vunpack.c.h.b16 %v3512
      %v4210 = vunpack.c.l.b16 %v3513
      %v4211 = vunpack.c.h.b16 %v3513
      %v4212 = vunpack.c.l.b16 %v3514
      %v4213 = vunpack.c.h.b16 %v3514
      %v4214 = vunpack.c.l.b16 %v3515
      %v4215 = vunpack.c.h.b16 %v3515
      %v4216 = vunpack.c.l.b16 %v3516
      %v4217 = vunpack.c.h.b16 %v3516
      %v4218 = vunpack.c.l.b16 %v3517
      %v4219 = vunpack.c.h.b16 %v3517
      %v4220 = vunpack.c.l.b16 %v3518
      %v4221 = vunpack.c.h.b16 %v3518
      %v4222 = vunpack.c.l.b16 %v3519
      %v4223 = vunpack.c.h.b16 %v3519
      %v4224 = vunpack.c.l.b16 %v3520
      %v4225 = vunpack.c.h.b16 %v3520
      %v4226 = vunpack.c.l.b16 %v3521
      %v4227 = vunpack.c.h.b16 %v3521
      %v4228 = vunpack.c.l.b16 %v3522
      %v4229 = vunpack.c.h.b16 %v3522
      %v4230 = vunpack.c.l.b16 %v3523
      %v4231 = vunpack.c.h.b16 %v3523
      %v4232 = vunpack.c.l.b16 %v3524
      %v4233 = vunpack.c.h.b16 %v3524
      %v4234 = vunpack.c.l.b16 %v3525
      %v4235 = vunpack.c.h.b16 %v3525
      %v4236 = vunpack.c.l.b16 %v3526
      %v4237 = vunpack.c.h.b16 %v3526
      %v4238 = vunpack.c.l.b16 %v3527
      %v4239 = vunpack.c.h.b16 %v3527
      %v4240 = vunpack.c.l.b16 %v3528
      %v4241 = vunpack.c.h.b16 %v3528
      %v4242 = vunpack.c.l.b16 %v3529
      %v4243 = vunpack.c.h.b16 %v3529
      %v4244 = vunpack.c.l.b16 %v3530
      %v4245 = vunpack.c.h.b16 %v3530
      %v4246 = vunpack.c.l.b16 %v3531
      %v4247 = vunpack.c.h.b16 %v3531
      %v4248 = vunpack.c.l.b16 %v3532
      %v4249 = vunpack.c.h.b16 %v3532
      %v4250 = vunpack.c.l.b16 %v3533
      %v4251 = vunpack.c.h.b16 %v3533
      %v4252 = vunpack.c.l.b16 %v3534
      %v4253 = vunpack.c.h.b16 %v3534
      %v4254 = vunpack.c.l.b16 %v3535
      %v4255 = vunpack.c.h.b16 %v3535
      %v4256 = vunpack.c.l.b16 %v3536
      %v4257 = vunpack.c.h.b16 %v3536
      %v4258 = vunpack.c.l.b16 %v3537
      %v4259 = vunpack.c.h.b16 %v3537
      %v4260 = vunpack.c.l.b16 %v3538
      %v4261 = vunpack.c.h.b16 %v3538
      %v4262 = vunpack.c.l.b16 %v3539
      %v4263 = vunpack.c.h.b16 %v3539
      %v4264 = vunpack.c.l.b16 %v3540
      %v4265 = vunpack.c.h.b16 %v3540
      %v4266 = vunpack.c.l.b16 %v3541
      %v4267 = vunpack.c.h.b16 %v3541
      %v4268 = vunpack.c.l.b16 %v3542
      %v4269 = vunpack.c.h.b16 %v3542
      %v4270 = vunpack.c.l.b16 %v3543
      %v4271 = vunpack.c.h.b16 %v3543
      %v4272 = vunpack.c.l.b16 %v3544
      %v4273 = vunpack.c.h.b16 %v3544
      %v4274 = vunpack.c.l.b16 %v3545
      %v4275 = vunpack.c.h.b16 %v3545
      %v4276 = vunpack.c.l.b16 %v3546
      %v4277 = vunpack.c.h.b16 %v3546
      %v4278 = vunpack.c.l.b16 %v3547
      %v4279 = vunpack.c.h.b16 %v3547
      %v4280 = vunpack.c.l.b16 %v3548
      %v4281 = vunpack.c.h.b16 %v3548
      %v4282 = vunpack.c.l.b16 %v3549
      %v4283 = vunpack.c.h.b16 %v3549
      %v4284 = vunpack.c.l.b16 %v3550
      %v4285 = vunpack.c.h.b16 %v3550
      %v4286 = vunpack.c.l.b16 %v3551
      %v4287 = vunpack.c.h.b16 %v3551
      %v4288 = vunpack.c.l.b16 %v3552
      %v4289 = vunpack.c.h.b16 %v3552
      %v4290 = vunpack.c.l.b16 %v3553
      %v4291 = vunpack.c.h.b16 %v3553
      %v4292 = vunpack.c.l.b16 %v3554
      %v4293 = vunpack.c.h.b16 %v3554
      %v4294 = vunpack.c.l.b16 %v3555
      %v4295 = vunpack.c.h.b16 %v3555
      %v4296 = vunpack.c.l.b16 %v3556
      %v4297 = vunpack.c.h.b16 %v3556
      %v4298 = vunpack.c.l.b16 %v3557
      %v4299 = vunpack.c.h.b16 %v3557
      %v4300 = vunpack.c.l.b16 %v3558
      %v4301 = vunpack.c.h.b16 %v3558
      %v4302 = vunpack.c.l.b16 %v3559
      %v4303 = vunpack.c.h.b16 %v3559
      %v4304 = vunpack.c.l.b16 %v3560
      %v4305 = vunpack.c.h.b16 %v3560
      %v4306 = vunpack.c.l.b16 %v3561
      %v4307 = vunpack.c.h.b16 %v3561
      %v4308 = vunpack.c.l.b16 %v3562
      %v4309 = vunpack.c.h.b16 %v3562
      %v4310 = vunpack.c.l.b16 %v3563
      %v4311 = vunpack.c.h.b16 %v3563
      %v4312 = vunpack.c.l.b16 %v3564
      %v4313 = vunpack.c.h.b16 %v3564
      %v4314 = vunpack.c.l.b16 %v3565
      %v4315 = vunpack.c.h.b16 %v3565
      %v4316 = vunpack.c.l.b16 %v3566
      %v4317 = vunpack.c.h.b16 %v3566
      %v4318 = vunpack.c.l.b16 %v3567
      %v4319 = vunpack.c.h.b16 %v3567
      %v4320 = vunpack.c.l.b16 %v3568
      %v4321 = vunpack.c.h.b16 %v3568
      %v4322 = vunpack.c.l.b16 %v3569
      %v4323 = vunpack.c.h.b16 %v3569
      %v4324 = vunpack.c.l.b16 %v3570
      %v4325 = vunpack.c.h.b16 %v3570
      %v4326 = vunpack.c.l.b16 %v3571
      %v4327 = vunpack.c.h.b16 %v3571
      %v4328 = vunpack.c.l.b16 %v3572
      %v4329 = vunpack.c.h.b16 %v3572
      %v4330 = vunpack.c.l.b16 %v3573
      %v4331 = vunpack.c.h.b16 %v3573
      %v4332 = vunpack.c.l.b16 %v3574
      %v4333 = vunpack.c.h.b16 %v3574
      %v4334 = vunpack.c.l.b16 %v3575
      %v4335 = vunpack.c.h.b16 %v3575
      %v4336 = vunpack.c.l.b16 %v3576
      %v4337 = vunpack.c.h.b16 %v3576
      %v4338 = vunpack.c.l.b16 %v3577
      %v4339 = vunpack.c.h.b16 %v3577
      %v4340 = vunpack.c.l.b16 %v3578
      %v4341 = vunpack.c.h.b16 %v3578
      %v4342 = vunpack.c.l.b16 %v3579
      %v4343 = vunpack.c.h.b16 %v3579
      %v4344 = vunpack.c.l.b16 %v3580
      %v4345 = vunpack.c.h.b16 %v3580
      %v4346 = vunpack.c.l.b16 %v3581
      %v4347 = vunpack.c.h.b16 %v3581
      %v4348 = vunpack.c.l.b16 %v3582
      %v4349 = vunpack.c.h.b16 %v3582
      %v4350 = vunpack.c.l.b16 %v3583
      %v4351 = vunpack.c.h.b16 %v3583
      %v4352 = vunpack.c.l.b16 %v3584
      %v4353 = vunpack.c.h.b16 %v3584
      %v4354 = vunpack.c.l.b16 %v3585
      %v4355 = vunpack.c.h.b16 %v3585
      %v4356 = vunpack.c.l.b16 %v3586
      %v4357 = vunpack.c.h.b16 %v3586
      %v4358 = vunpack.c.l.b16 %v3587
      %v4359 = vunpack.c.h.b16 %v3587
      %v4360 = vunpack.c.l.b16 %v3588
      %v4361 = vunpack.c.h.b16 %v3588
      %v4362 = vunpack.c.l.b16 %v3589
      %v4363 = vunpack.c.h.b16 %v3589
      %v4364 = vunpack.c.l.b16 %v3590
      %v4365 = vunpack.c.h.b16 %v3590
      %v4366 = vunpack.c.l.b16 %v3591
      %v4367 = vunpack.c.h.b16 %v3591
      %v4368 = vunpack.c.l.b16 %v3592
      %v4369 = vunpack.c.h.b16 %v3592
      %v4370 = vunpack.c.l.b16 %v3593
      %v4371 = vunpack.c.h.b16 %v3593
      %v4372 = vpack.c.b16 %v3864, %v3860
      %v4373 = vpack.c.b16 %v3865, %v3861
      %v4374 = vpack.c.b16 %v3866, %v3862
      %v4375 = vpack.c.b16 %v3867, %v3863
      %v4376 = vpack.c.b16 %v3872, %v3868
      %v4377 = vpack.c.b16 %v3873, %v3869
      %v4378 = vpack.c.b16 %v3874, %v3870
      %v4379 = vpack.c.b16 %v3875, %v3871
      %v4380 = vpack.c.b16 %v3880, %v3876
      %v4381 = vpack.c.b16 %v3881, %v3877
      %v4382 = vpack.c.b16 %v3882, %v3878
      %v4383 = vpack.c.b16 %v3883, %v3879
      %v4384 = vpack.c.b16 %v3888, %v3884
      %v4385 = vpack.c.b16 %v3889, %v3885
      %v4386 = vpack.c.b16 %v3890, %v3886
      %v4387 = vpack.c.b16 %v3891, %v3887
      %v4388 = vpack.c.b16 %v3896, %v3892
      %v4389 = vpack.c.b16 %v3897, %v3893
      %v4390 = vpack.c.b16 %v3898, %v3894
      %v4391 = vpack.c.b16 %v3899, %v3895
      %v4392 = vpack.c.b16 %v3904, %v3900
      %v4393 = vpack.c.b16 %v3905, %v3901
      %v4394 = vpack.c.b16 %v3906, %v3902
      %v4395 = vpack.c.b16 %v3907, %v3903
      %v4396 = vpack.c.b16 %v3912, %v3908
      %v4397 = vpack.c.b16 %v3913, %v3909
      %v4398 = vpack.c.b16 %v3914, %v3910
      %v4399 = vpack.c.b16 %v3915, %v3911
      %v4400 = vpack.c.b16 %v3920, %v3916
      %v4401 = vpack.c.b16 %v3921, %v3917
      %v4402 = vpack.c.b16 %v3922, %v3918
      %v4403 = vpack.c.b16 %v3923, %v3919
      %v4404 = vpack.c.b16 %v3928, %v3924
      %v4405 = vpack.c.b16 %v3929, %v3925
      %v4406 = vpack.c.b16 %v3930, %v3926
      %v4407 = vpack.c.b16 %v3931, %v3927
      %v4408 = vpack.c.b16 %v3936, %v3932
      %v4409 = vpack.c.b16 %v3937, %v3933
      %v4410 = vpack.c.b16 %v3938, %v3934
      %v4411 = vpack.c.b16 %v3939, %v3935
      %v4412 = vpack.c.b16 %v3944, %v3940
      %v4413 = vpack.c.b16 %v3945, %v3941
      %v4414 = vpack.c.b16 %v3946, %v3942
      %v4415 = vpack.c.b16 %v3947, %v3943
      %v4416 = vpack.c.b16 %v3952, %v3948
      %v4417 = vpack.c.b16 %v3953, %v3949
      %v4418 = vpack.c.b16 %v3954, %v3950
      %v4419 = vpack.c.b16 %v3955, %v3951
      %v4420 = vpack.c.b16 %v3960, %v3956
      %v4421 = vpack.c.b16 %v3961, %v3957
      %v4422 = vpack.c.b16 %v3962, %v3958
      %v4423 = vpack.c.b16 %v3963, %v3959
      %v4424 = vpack.c.b16 %v3968, %v3964
      %v4425 = vpack.c.b16 %v3969, %v3965
      %v4426 = vpack.c.b16 %v3970, %v3966
      %v4427 = vpack.c.b16 %v3971, %v3967
      %v4428 = vpack.c.b16 %v3976, %v3972
      %v4429 = vpack.c.b16 %v3977, %v3973
      %v4430 = vpack.c.b16 %v3978, %v3974
      %v4431 = vpack.c.b16 %v3979, %v3975
      %v4432 = vpack.c.b16 %v3984, %v3980
      %v4433 = vpack.c.b16 %v3985, %v3981
      %v4434 = vpack.c.b16 %v3986, %v3982
      %v4435 = vpack.c.b16 %v3987, %v3983
      %v4436 = vpack.c.b16 %v3992, %v3988
      %v4437 = vpack.c.b16 %v3993, %v3989
      %v4438 = vpack.c.b16 %v3994, %v3990
      %v4439 = vpack.c.b16 %v3995, %v3991
      %v4440 = vpack.c.b16 %v4000, %v3996
      %v4441 = vpack.c.b16 %v4001, %v3997
      %v4442 = vpack.c.b16 %v4002, %v3998
      %v4443 = vpack.c.b16 %v4003, %v3999
      %v4444 = vpack.c.b16 %v4008, %v4004
      %v4445 = vpack.c.b16 %v4009, %v4005
      %v4446 = vpack.c.b16 %v4010, %v4006
      %v4447 = vpack.c.b16 %v4011, %v4007
      %v4448 = vpack.c.b16 %v4016, %v4012
      %v4449 = vpack.c.b16 %v4017, %v4013
      %v4450 = vpack.c.b16 %v4018, %v4014
      %v4451 = vpack.c.b16 %v4019, %v4015
      %v4452 = vpack.c.b16 %v4024, %v4020
      %v4453 = vpack.c.b16 %v4025, %v4021
      %v4454 = vpack.c.b16 %v4026, %v4022
      %v4455 = vpack.c.b16 %v4027, %v4023
      %v4456 = vpack.c.b16 %v4032, %v4028
      %v4457 = vpack.c.b16 %v4033, %v4029
      %v4458 = vpack.c.b16 %v4034, %v4030
      %v4459 = vpack.c.b16 %v4035, %v4031
      %v4460 = vpack.c.b16 %v4040, %v4036
      %v4461 = vpack.c.b16 %v4041, %v4037
      %v4462 = vpack.c.b16 %v4042, %v4038
      %v4463 = vpack.c.b16 %v4043, %v4039
      %v4464 = vpack.c.b16 %v4048, %v4044
      %v4465 = vpack.c.b16 %v4049, %v4045
      %v4466 = vpack.c.b16 %v4050, %v4046
      %v4467 = vpack.c.b16 %v4051, %v4047
      %v4468 = vpack.c.b16 %v4056, %v4052
      %v4469 = vpack.c.b16 %v4057, %v4053
      %v4470 = vpack.c.b16 %v4058, %v4054
      %v4471 = vpack.c.b16 %v4059, %v4055
      %v4472 = vpack.c.b16 %v4064, %v4060
      %v4473 = vpack.c.b16 %v4065, %v4061
      %v4474 = vpack.c.b16 %v4066, %v4062
      %v4475 = vpack.c.b16 %v4067, %v4063
      %v4476 = vpack.c.b16 %v4072, %v4068
      %v4477 = vpack.c.b16 %v4073, %v4069
      %v4478 = vpack.c.b16 %v4074, %v4070
      %v4479 = vpack.c.b16 %v4075, %v4071
      %v4480 = vpack.c.b16 %v4080, %v4076
      %v4481 = vpack.c.b16 %v4081, %v4077
      %v4482 = vpack.c.b16 %v4082, %v4078
      %v4483 = vpack.c.b16 %v4083, %v4079
      %v4484 = vpack.c.b16 %v4088, %v4084
      %v4485 = vpack.c.b16 %v4089, %v4085
      %v4486 = vpack.c.b16 %v4090, %v4086
      %v4487 = vpack.c.b16 %v4091, %v4087
      %v4488 = vpack.c.b16 %v4096, %v4092
      %v4489 = vpack.c.b16 %v4097, %v4093
      %v4490 = vpack.c.b16 %v4098, %v4094
      %v4491 = vpack.c.b16 %v4099, %v4095
      %v4492 = vpack.c.b16 %v4104, %v4100
      %v4493 = vpack.c.b16 %v4105, %v4101
      %v4494 = vpack.c.b16 %v4106, %v4102
      %v4495 = vpack.c.b16 %v4107, %v4103
      %v4496 = vpack.c.b16 %v4112, %v4108
      %v4497 = vpack.c.b16 %v4113, %v4109
      %v4498 = vpack.c.b16 %v4114, %v4110
      %v4499 = vpack.c.b16 %v4115, %v4111
      %v4500 = vpack.c.b16 %v4120, %v4116
      %v4501 = vpack.c.b16 %v4121, %v4117
      %v4502 = vpack.c.b16 %v4122, %v4118
      %v4503 = vpack.c.b16 %v4123, %v4119
      %v4504 = vpack.c.b16 %v4128, %v4124
      %v4505 = vpack.c.b16 %v4129, %v4125
      %v4506 = vpack.c.b16 %v4130, %v4126
      %v4507 = vpack.c.b16 %v4131, %v4127
      %v4508 = vpack.c.b16 %v4136, %v4132
      %v4509 = vpack.c.b16 %v4137, %v4133
      %v4510 = vpack.c.b16 %v4138, %v4134
      %v4511 = vpack.c.b16 %v4139, %v4135
      %v4512 = vpack.c.b16 %v4144, %v4140
      %v4513 = vpack.c.b16 %v4145, %v4141
      %v4514 = vpack.c.b16 %v4146, %v4142
      %v4515 = vpack.c.b16 %v4147, %v4143
      %v4516 = vpack.c.b16 %v4152, %v4148
      %v4517 = vpack.c.b16 %v4153, %v4149
      %v4518 = vpack.c.b16 %v4154, %v4150
      %v4519 = vpack.c.b16 %v4155, %v4151
      %v4520 = vpack.c.b16 %v4160, %v4156
      %v4521 = vpack.c.b16 %v4161, %v4157
      %v4522 = vpack.c.b16 %v4162, %v4158
      %v4523 = vpack.c.b16 %v4163, %v4159
      %v4524 = vpack.c.b16 %v4168, %v4164
      %v4525 = vpack.c.b16 %v4169, %v4165
      %v4526 = vpack.c.b16 %v4170, %v4166
      %v4527 = vpack.c.b16 %v4171, %v4167
      %v4528 = vpack.c.b16 %v4176, %v4172
      %v4529 = vpack.c.b16 %v4177, %v4173
      %v4530 = vpack.c.b16 %v4178, %v4174
      %v4531 = vpack.c.b16 %v4179, %v4175
      %v4532 = vpack.c.b16 %v4184, %v4180
      %v4533 = vpack.c.b16 %v4185, %v4181
      %v4534 = vpack.c.b16 %v4186, %v4182
      %v4535 = vpack.c.b16 %v4187, %v4183
      %v4536 = vpack.c.b16 %v4192, %v4188
      %v4537 = vpack.c.b16 %v4193, %v4189
      %v4538 = vpack.c.b16 %v4194, %v4190
      %v4539 = vpack.c.b16 %v4195, %v4191
      %v4540 = vpack.c.b16 %v4200, %v4196
      %v4541 = vpack.c.b16 %v4201, %v4197
      %v4542 = vpack.c.b16 %v4202, %v4198
      %v4543 = vpack.c.b16 %v4203, %v4199
      %v4544 = vpack.c.b16 %v4208, %v4204
      %v4545 = vpack.c.b16 %v4209, %v4205
      %v4546 = vpack.c.b16 %v4210, %v4206
      %v4547 = vpack.c.b16 %v4211, %v4207
      %v4548 = vpack.c.b16 %v4216, %v4212
      %v4549 = vpack.c.b16 %v4217, %v4213
      %v4550 = vpack.c.b16 %v4218, %v4214
      %v4551 = vpack.c.b16 %v4219, %v4215
      %v4552 = vpack.c.b16 %v4224, %v4220
      %v4553 = vpack.c.b16 %v4225, %v4221
      %v4554 = vpack.c.b16 %v4226, %v4222
      %v4555 = vpack.c.b16 %v4227, %v4223
      %v4556 = vpack.c.b16 %v4232, %v4228
      %v4557 = vpack.c.b16 %v4233, %v4229
      %v4558 = vpack.c.b16 %v4234, %v4230
      %v4559 = vpack.c.b16 %v4235, %v4231
      %v4560 = vpack.c.b16 %v4240, %v4236
      %v4561 = vpack.c.b16 %v4241, %v4237
      %v4562 = vpack.c.b16 %v4242, %v4238
      %v4563 = vpack.c.b16 %v4243, %v4239
      %v4564 = vpack.c.b16 %v4248, %v4244
      %v4565 = vpack.c.b16 %v4249, %v4245
      %v4566 = vpack.c.b16 %v4250, %v4246
      %v4567 = vpack.c.b16 %v4251, %v4247
      %v4568 = vpack.c.b16 %v4256, %v4252
      %v4569 = vpack.c.b16 %v4257, %v4253
      %v4570 = vpack.c.b16 %v4258, %v4254
      %v4571 = vpack.c.b16 %v4259, %v4255
      %v4572 = vpack.c.b16 %v4264, %v4260
      %v4573 = vpack.c.b16 %v4265, %v4261
      %v4574 = vpack.c.b16 %v4266, %v4262
      %v4575 = vpack.c.b16 %v4267, %v4263
      %v4576 = vpack.c.b16 %v4272, %v4268
      %v4577 = vpack.c.b16 %v4273, %v4269
      %v4578 = vpack.c.b16 %v4274, %v4270
      %v4579 = vpack.c.b16 %v4275, %v4271
      %v4580 = vpack.c.b16 %v4280, %v4276
      %v4581 = vpack.c.b16 %v4281, %v4277
      %v4582 = vpack.c.b16 %v4282, %v4278
      %v4583 = vpack.c.b16 %v4283, %v4279
      %v4584 = vpack.c.b16 %v4288, %v4284
      %v4585 = vpack.c.b16 %v4289, %v4285
      %v4586 = vpack.c.b16 %v4290, %v4286
      %v4587 = vpack.c.b16 %v4291, %v4287
      %v4588 = vpack.c.b16 %v4296, %v4292
      %v4589 = vpack.c.b16 %v4297, %v4293
      %v4590 = vpack.c.b16 %v4298, %v4294
      %v4591 = vpack.c.b16 %v4299, %v4295
      %v4592 = vpack.c.b16 %v4304, %v4300
      %v4593 = vpack.c.b16 %v4305, %v4301
      %v4594 = vpack.c.b16 %v4306, %v4302
      %v4595 = vpack.c.b16 %v4307, %v4303
      %v4596 = vpack.c.b16 %v4312, %v4308
      %v4597 = vpack.c.b16 %v4313, %v4309
      %v4598 = vpack.c.b16 %v4314, %v4310
      %v4599 = vpack.c.b16 %v4315, %v4311
      %v4600 = vpack.c.b16 %v4320, %v4316
      %v4601 = vpack.c.b16 %v4321, %v4317
      %v4602 = vpack.c.b16 %v4322, %v4318
      %v4603 = vpack.c.b16 %v4323, %v4319
      %v4604 = vpack.c.b16 %v4328, %v4324
      %v4605 = vpack.c.b16 %v4329, %v4325
      %v4606 = vpack.c.b16 %v4330, %v4326
      %v4607 = vpack.c.b16 %v4331, %v4327
      %v4608 = vpack.c.b16 %v4336, %v4332
      %v4609 = vpack.c.b16 %v4337, %v4333
      %v4610 = vpack.c.b16 %v4338, %v4334
      %v4611 = vpack.c.b16 %v4339, %v4335
      %v4612 = vpack.c.b16 %v4344, %v4340
      %v4613 = vpack.c.b16 %v4345, %v4341
      %v4614 = vpack.c.b16 %v4346, %v4342
      %v4615 = vpack.c.b16 %v4347, %v4343
      %v4616 = vpack.c.b16 %v4352, %v4348
      %v4617 = vpack.c.b16 %v4353, %v4349
      %v4618 = vpack.c.b16 %v4354, %v4350
      %v4619 = vpack.c.b16 %v4355, %v4351
      %v4620 = vpack.c.b16 %v4360, %v4356
      %v4621 = vpack.c.b16 %v4361, %v4357
      %v4622 = vpack.c.b16 %v4362, %v4358
      %v4623 = vpack.c.b16 %v4363, %v4359
      %v4624 = vpack.c.b16 %v4368, %v4364
      %v4625 = vpack.c.b16 %v4369, %v4365
      %v4626 = vpack.c.b16 %v4370, %v4366
      %v4627 = vpack.c.b16 %v4371, %v4367
      %4884 = vmatpush.bf16.msra.mxu0 %v4400
      %4885 = vmatpush.bf16.msra.mxu0 %v4396
      %4886 = vmatpush.bf16.msra.mxu0 %v4392
      %4887 = vmatpush.bf16.msra.mxu0 %v4388
      %4888 = vmatpush.bf16.msra.mxu0 %v4384
      %4889 = vmatpush.bf16.msra.mxu0 %v4380
      %4890 = vmatpush.bf16.msra.mxu0 %v4376
      %4891 = vmatpush.bf16.msra.mxu0 %v4372
      %4892 = vmatmul.bf16.gmra.mxu0 %v3330
      %v4893 = vpop.f32.mrf.mxu0
      %v4894 = vadd.f32 %v3596, %v4893
      %v4895 = vpop.f32.mrf.mxu0
      %v4896 = vadd.f32 %v3596, %v4895
      %4897 = vdwg.mxu0
      %4898 = vmatpush.bf16.msra.mxu0 %v4432
      %4899 = vmatpush.bf16.msra.mxu0 %v4428
      %4900 = vmatpush.bf16.msra.mxu0 %v4424
      %4901 = vmatpush.bf16.msra.mxu0 %v4420
      %4902 = vmatpush.bf16.msra.mxu0 %v4416
      %4903 = vmatpush.bf16.msra.mxu0 %v4412
      %4904 = vmatpush.bf16.msra.mxu0 %v4408
      %4905 = vmatpush.bf16.msra.mxu0 %v4404
      %4906 = vmatmul.bf16.gmra.mxu0 %v3331
      %v4907 = vpop.f32.mrf.mxu0
      %v4908 = vadd.f32 %v4894, %v4907
      %v4909 = vpop.f32.mrf.mxu0
      %v4910 = vadd.f32 %v4896, %v4909
      %4911 = vdwg.mxu0
      %4912 = vmatpush.bf16.msra.mxu0 %v4464
      %4913 = vmatpush.bf16.msra.mxu0 %v4460
      %4914 = vmatpush.bf16.msra.mxu0 %v4456
      %4915 = vmatpush.bf16.msra.mxu0 %v4452
      %4916 = vmatpush.bf16.msra.mxu0 %v4448
      %4917 = vmatpush.bf16.msra.mxu0 %v4444
      %4918 = vmatpush.bf16.msra.mxu0 %v4440
      %4919 = vmatpush.bf16.msra.mxu0 %v4436
      %4920 = vmatmul.bf16.gmra.mxu0 %v3332
      %v4921 = vpop.f32.mrf.mxu0
      %v4922 = vadd.f32 %v4908, %v4921
      %v4923 = vpop.f32.mrf.mxu0
      %v4924 = vadd.f32 %v4910, %v4923
      %4925 = vdwg.mxu0
      %4926 = vmatpush.bf16.msra.mxu0 %v4496
      %4927 = vmatpush.bf16.msra.mxu0 %v4492
      %4928 = vmatpush.bf16.msra.mxu0 %v4488
      %4929 = vmatpush.bf16.msra.mxu0 %v4484
      %4930 = vmatpush.bf16.msra.mxu0 %v4480
      %4931 = vmatpush.bf16.msra.mxu0 %v4476
      %4932 = vmatpush.bf16.msra.mxu0 %v4472
      %4933 = vmatpush.bf16.msra.mxu0 %v4468
      %4934 = vmatmul.bf16.gmra.mxu0 %v3333
      %v4935 = vpop.f32.mrf.mxu0
      %v4936 = vadd.f32 %v4922, %v4935
      %v4937 = vpop.f32.mrf.mxu0
      %v4938 = vadd.f32 %v4924, %v4937
      %4939 = vdwg.mxu0
      %4940 = vmatpush.bf16.msra.mxu0 %v4528
      %4941 = vmatpush.bf16.msra.mxu0 %v4524
      %4942 = vmatpush.bf16.msra.mxu0 %v4520
      %4943 = vmatpush.bf16.msra.mxu0 %v4516
      %4944 = vmatpush.bf16.msra.mxu0 %v4512
      %4945 = vmatpush.bf16.msra.mxu0 %v4508
      %4946 = vmatpush.bf16.msra.mxu0 %v4504
      %4947 = vmatpush.bf16.msra.mxu0 %v4500
      %4948 = vmatmul.bf16.gmra.mxu0 %v3334
      %v4949 = vpop.f32.mrf.mxu0
      %v4950 = vadd.f32 %v4936, %v4949
      %v4951 = vpop.f32.mrf.mxu0
      %v4952 = vadd.f32 %v4938, %v4951
      %4953 = vdwg.mxu0
      %4954 = vmatpush.bf16.msra.mxu0 %v4560
      %4955 = vmatpush.bf16.msra.mxu0 %v4556
      %4956 = vmatpush.bf16.msra.mxu0 %v4552
      %4957 = vmatpush.bf16.msra.mxu0 %v4548
      %4958 = vmatpush.bf16.msra.mxu0 %v4544
      %4959 = vmatpush.bf16.msra.mxu0 %v4540
      %4960 = vmatpush.bf16.msra.mxu0 %v4536
      %4961 = vmatpush.bf16.msra.mxu0 %v4532
      %4962 = vmatmul.bf16.gmra.mxu0 %v3335
      %v4963 = vpop.f32.mrf.mxu0
      %v4964 = vadd.f32 %v4950, %v4963
      %v4965 = vpop.f32.mrf.mxu0
      %v4966 = vadd.f32 %v4952, %v4965
      %4967 = vdwg.mxu0
      %4968 = vmatpush.bf16.msra.mxu0 %v4592
      %4969 = vmatpush.bf16.msra.mxu0 %v4588
      %4970 = vmatpush.bf16.msra.mxu0 %v4584
      %4971 = vmatpush.bf16.msra.mxu0 %v4580
      %4972 = vmatpush.bf16.msra.mxu0 %v4576
      %4973 = vmatpush.bf16.msra.mxu0 %v4572
      %4974 = vmatpush.bf16.msra.mxu0 %v4568
      %4975 = vmatpush.bf16.msra.mxu0 %v4564
      %4976 = vmatmul.bf16.gmra.mxu0 %v3336
      %v4977 = vpop.f32.mrf.mxu0
      %v4978 = vadd.f32 %v4964, %v4977
      %v4979 = vpop.f32.mrf.mxu0
      %v4980 = vadd.f32 %v4966, %v4979
      %4981 = vdwg.mxu0
      %4982 = vmatpush.bf16.msra.mxu0 %v4624
      %4983 = vmatpush.bf16.msra.mxu0 %v4620
      %4984 = vmatpush.bf16.msra.mxu0 %v4616
      %4985 = vmatpush.bf16.msra.mxu0 %v4612
      %4986 = vmatpush.bf16.msra.mxu0 %v4608
      %4987 = vmatpush.bf16.msra.mxu0 %v4604
      %4988 = vmatpush.bf16.msra.mxu0 %v4600
      %4989 = vmatpush.bf16.msra.mxu0 %v4596
      %4990 = vmatmul.bf16.gmra.mxu0 %v3337
      %v4991 = vpop.f32.mrf.mxu0
      %v4992 = vadd.f32 %v4978, %v4991
      %v4993 = vpop.f32.mrf.mxu0
      %v4994 = vadd.f32 %v4980, %v4993
      %4995 = vdwg.mxu0
      %4996 = vmatpush.bf16.msra.mxu0 %v4401
      %4997 = vmatpush.bf16.msra.mxu0 %v4397
      %4998 = vmatpush.bf16.msra.mxu0 %v4393
      %4999 = vmatpush.bf16.msra.mxu0 %v4389
      %5000 = vmatpush.bf16.msra.mxu0 %v4385
      %5001 = vmatpush.bf16.msra.mxu0 %v4381
      %5002 = vmatpush.bf16.msra.mxu0 %v4377
      %5003 = vmatpush.bf16.msra.mxu0 %v4373
      %5004 = vmatmul.bf16.gmra.mxu0 %v3330
      %v5005 = vpop.f32.mrf.mxu0
      %v5006 = vadd.f32 %v3597, %v5005
      %v5007 = vpop.f32.mrf.mxu0
      %v5008 = vadd.f32 %v3597, %v5007
      %5009 = vdwg.mxu0
      %5010 = vmatpush.bf16.msra.mxu0 %v4433
      %5011 = vmatpush.bf16.msra.mxu0 %v4429
      %5012 = vmatpush.bf16.msra.mxu0 %v4425
      %5013 = vmatpush.bf16.msra.mxu0 %v4421
      %5014 = vmatpush.bf16.msra.mxu0 %v4417
      %5015 = vmatpush.bf16.msra.mxu0 %v4413
      %5016 = vmatpush.bf16.msra.mxu0 %v4409
      %5017 = vmatpush.bf16.msra.mxu0 %v4405
      %5018 = vmatmul.bf16.gmra.mxu0 %v3331
      %v5019 = vpop.f32.mrf.mxu0
      %v5020 = vadd.f32 %v5006, %v5019
      %v5021 = vpop.f32.mrf.mxu0
      %v5022 = vadd.f32 %v5008, %v5021
      %5023 = vdwg.mxu0
      %5024 = vmatpush.bf16.msra.mxu0 %v4465
      %5025 = vmatpush.bf16.msra.mxu0 %v4461
      %5026 = vmatpush.bf16.msra.mxu0 %v4457
      %5027 = vmatpush.bf16.msra.mxu0 %v4453
      %5028 = vmatpush.bf16.msra.mxu0 %v4449
      %5029 = vmatpush.bf16.msra.mxu0 %v4445
      %5030 = vmatpush.bf16.msra.mxu0 %v4441
      %5031 = vmatpush.bf16.msra.mxu0 %v4437
      %5032 = vmatmul.bf16.gmra.mxu0 %v3332
      %v5033 = vpop.f32.mrf.mxu0
      %v5034 = vadd.f32 %v5020, %v5033
      %v5035 = vpop.f32.mrf.mxu0
      %v5036 = vadd.f32 %v5022, %v5035
      %5037 = vdwg.mxu0
      %5038 = vmatpush.bf16.msra.mxu0 %v4497
      %5039 = vmatpush.bf16.msra.mxu0 %v4493
      %5040 = vmatpush.bf16.msra.mxu0 %v4489
      %5041 = vmatpush.bf16.msra.mxu0 %v4485
      %5042 = vmatpush.bf16.msra.mxu0 %v4481
      %5043 = vmatpush.bf16.msra.mxu0 %v4477
      %5044 = vmatpush.bf16.msra.mxu0 %v4473
      %5045 = vmatpush.bf16.msra.mxu0 %v4469
      %5046 = vmatmul.bf16.gmra.mxu0 %v3333
      %v5047 = vpop.f32.mrf.mxu0
      %v5048 = vadd.f32 %v5034, %v5047
      %v5049 = vpop.f32.mrf.mxu0
      %v5050 = vadd.f32 %v5036, %v5049
      %5051 = vdwg.mxu0
      %5052 = vmatpush.bf16.msra.mxu0 %v4529
      %5053 = vmatpush.bf16.msra.mxu0 %v4525
      %5054 = vmatpush.bf16.msra.mxu0 %v4521
      %5055 = vmatpush.bf16.msra.mxu0 %v4517
      %5056 = vmatpush.bf16.msra.mxu0 %v4513
      %5057 = vmatpush.bf16.msra.mxu0 %v4509
      %5058 = vmatpush.bf16.msra.mxu0 %v4505
      %5059 = vmatpush.bf16.msra.mxu0 %v4501
      %5060 = vmatmul.bf16.gmra.mxu0 %v3334
      %v5061 = vpop.f32.mrf.mxu0
      %v5062 = vadd.f32 %v5048, %v5061
      %v5063 = vpop.f32.mrf.mxu0
      %v5064 = vadd.f32 %v5050, %v5063
      %5065 = vdwg.mxu0
      %5066 = vmatpush.bf16.msra.mxu0 %v4561
      %5067 = vmatpush.bf16.msra.mxu0 %v4557
      %5068 = vmatpush.bf16.msra.mxu0 %v4553
      %5069 = vmatpush.bf16.msra.mxu0 %v4549
      %5070 = vmatpush.bf16.msra.mxu0 %v4545
      %5071 = vmatpush.bf16.msra.mxu0 %v4541
      %5072 = vmatpush.bf16.msra.mxu0 %v4537
      %5073 = vmatpush.bf16.msra.mxu0 %v4533
      %5074 = vmatmul.bf16.gmra.mxu0 %v3335
      %v5075 = vpop.f32.mrf.mxu0
      %v5076 = vadd.f32 %v5062, %v5075
      %v5077 = vpop.f32.mrf.mxu0
      %v5078 = vadd.f32 %v5064, %v5077
      %5079 = vdwg.mxu0
      %5080 = vmatpush.bf16.msra.mxu0 %v4593
      %5081 = vmatpush.bf16.msra.mxu0 %v4589
      %5082 = vmatpush.bf16.msra.mxu0 %v4585
      %5083 = vmatpush.bf16.msra.mxu0 %v4581
      %5084 = vmatpush.bf16.msra.mxu0 %v4577
      %5085 = vmatpush.bf16.msra.mxu0 %v4573
      %5086 = vmatpush.bf16.msra.mxu0 %v4569
      %5087 = vmatpush.bf16.msra.mxu0 %v4565
      %5088 = vmatmul.bf16.gmra.mxu0 %v3336
      %v5089 = vpop.f32.mrf.mxu0
      %v5090 = vadd.f32 %v5076, %v5089
      %v5091 = vpop.f32.mrf.mxu0
      %v5092 = vadd.f32 %v5078, %v5091
      %5093 = vdwg.mxu0
      %5094 = vmatpush.bf16.msra.mxu0 %v4625
      %5095 = vmatpush.bf16.msra.mxu0 %v4621
      %5096 = vmatpush.bf16.msra.mxu0 %v4617
      %5097 = vmatpush.bf16.msra.mxu0 %v4613
      %5098 = vmatpush.bf16.msra.mxu0 %v4609
      %5099 = vmatpush.bf16.msra.mxu0 %v4605
      %5100 = vmatpush.bf16.msra.mxu0 %v4601
      %5101 = vmatpush.bf16.msra.mxu0 %v4597
      %5102 = vmatmul.bf16.gmra.mxu0 %v3337
      %v5103 = vpop.f32.mrf.mxu0
      %v5104 = vadd.f32 %v5090, %v5103
      %v5105 = vpop.f32.mrf.mxu0
      %v5106 = vadd.f32 %v5092, %v5105
      %5107 = vdwg.mxu0
      %5108 = vmatpush.bf16.msra.mxu0 %v4402
      %5109 = vmatpush.bf16.msra.mxu0 %v4398
      %5110 = vmatpush.bf16.msra.mxu0 %v4394
      %5111 = vmatpush.bf16.msra.mxu0 %v4390
      %5112 = vmatpush.bf16.msra.mxu0 %v4386
      %5113 = vmatpush.bf16.msra.mxu0 %v4382
      %5114 = vmatpush.bf16.msra.mxu0 %v4378
      %5115 = vmatpush.bf16.msra.mxu0 %v4374
      %5116 = vmatmul.bf16.gmra.mxu0 %v3330
      %v5117 = vpop.f32.mrf.mxu0
      %v5118 = vadd.f32 %v3598, %v5117
      %v5119 = vpop.f32.mrf.mxu0
      %v5120 = vadd.f32 %v3598, %v5119
      %5121 = vdwg.mxu0
      %5122 = vmatpush.bf16.msra.mxu0 %v4434
      %5123 = vmatpush.bf16.msra.mxu0 %v4430
      %5124 = vmatpush.bf16.msra.mxu0 %v4426
      %5125 = vmatpush.bf16.msra.mxu0 %v4422
      %5126 = vmatpush.bf16.msra.mxu0 %v4418
      %5127 = vmatpush.bf16.msra.mxu0 %v4414
      %5128 = vmatpush.bf16.msra.mxu0 %v4410
      %5129 = vmatpush.bf16.msra.mxu0 %v4406
      %5130 = vmatmul.bf16.gmra.mxu0 %v3331
      %v5131 = vpop.f32.mrf.mxu0
      %v5132 = vadd.f32 %v5118, %v5131
      %v5133 = vpop.f32.mrf.mxu0
      %v5134 = vadd.f32 %v5120, %v5133
      %5135 = vdwg.mxu0
      %5136 = vmatpush.bf16.msra.mxu0 %v4466
      %5137 = vmatpush.bf16.msra.mxu0 %v4462
      %5138 = vmatpush.bf16.msra.mxu0 %v4458
      %5139 = vmatpush.bf16.msra.mxu0 %v4454
      %5140 = vmatpush.bf16.msra.mxu0 %v4450
      %5141 = vmatpush.bf16.msra.mxu0 %v4446
      %5142 = vmatpush.bf16.msra.mxu0 %v4442
      %5143 = vmatpush.bf16.msra.mxu0 %v4438
      %5144 = vmatmul.bf16.gmra.mxu0 %v3332
      %v5145 = vpop.f32.mrf.mxu0
      %v5146 = vadd.f32 %v5132, %v5145
      %v5147 = vpop.f32.mrf.mxu0
      %v5148 = vadd.f32 %v5134, %v5147
      %5149 = vdwg.mxu0
      %5150 = vmatpush.bf16.msra.mxu0 %v4498
      %5151 = vmatpush.bf16.msra.mxu0 %v4494
      %5152 = vmatpush.bf16.msra.mxu0 %v4490
      %5153 = vmatpush.bf16.msra.mxu0 %v4486
      %5154 = vmatpush.bf16.msra.mxu0 %v4482
      %5155 = vmatpush.bf16.msra.mxu0 %v4478
      %5156 = vmatpush.bf16.msra.mxu0 %v4474
      %5157 = vmatpush.bf16.msra.mxu0 %v4470
      %5158 = vmatmul.bf16.gmra.mxu0 %v3333
      %v5159 = vpop.f32.mrf.mxu0
      %v5160 = vadd.f32 %v5146, %v5159
      %v5161 = vpop.f32.mrf.mxu0
      %v5162 = vadd.f32 %v5148, %v5161
      %5163 = vdwg.mxu0
      %5164 = vmatpush.bf16.msra.mxu0 %v4530
      %5165 = vmatpush.bf16.msra.mxu0 %v4526
      %5166 = vmatpush.bf16.msra.mxu0 %v4522
      %5167 = vmatpush.bf16.msra.mxu0 %v4518
      %5168 = vmatpush.bf16.msra.mxu0 %v4514
      %5169 = vmatpush.bf16.msra.mxu0 %v4510
      %5170 = vmatpush.bf16.msra.mxu0 %v4506
      %5171 = vmatpush.bf16.msra.mxu0 %v4502
      %5172 = vmatmul.bf16.gmra.mxu0 %v3334
      %v5173 = vpop.f32.mrf.mxu0
      %v5174 = vadd.f32 %v5160, %v5173
      %v5175 = vpop.f32.mrf.mxu0
      %v5176 = vadd.f32 %v5162, %v5175
      %5177 = vdwg.mxu0
      %5178 = vmatpush.bf16.msra.mxu0 %v4562
      %5179 = vmatpush.bf16.msra.mxu0 %v4558
      %5180 = vmatpush.bf16.msra.mxu0 %v4554
      %5181 = vmatpush.bf16.msra.mxu0 %v4550
      %5182 = vmatpush.bf16.msra.mxu0 %v4546
      %5183 = vmatpush.bf16.msra.mxu0 %v4542
      %5184 = vmatpush.bf16.msra.mxu0 %v4538
      %5185 = vmatpush.bf16.msra.mxu0 %v4534
      %5186 = vmatmul.bf16.gmra.mxu0 %v3335
      %v5187 = vpop.f32.mrf.mxu0
      %v5188 = vadd.f32 %v5174, %v5187
      %v5189 = vpop.f32.mrf.mxu0
      %v5190 = vadd.f32 %v5176, %v5189
      %5191 = vdwg.mxu0
      %5192 = vmatpush.bf16.msra.mxu0 %v4594
      %5193 = vmatpush.bf16.msra.mxu0 %v4590
      %5194 = vmatpush.bf16.msra.mxu0 %v4586
      %5195 = vmatpush.bf16.msra.mxu0 %v4582
      %5196 = vmatpush.bf16.msra.mxu0 %v4578
      %5197 = vmatpush.bf16.msra.mxu0 %v4574
      %5198 = vmatpush.bf16.msra.mxu0 %v4570
      %5199 = vmatpush.bf16.msra.mxu0 %v4566
      %5200 = vmatmul.bf16.gmra.mxu0 %v3336
      %v5201 = vpop.f32.mrf.mxu0
      %v5202 = vadd.f32 %v5188, %v5201
      %v5203 = vpop.f32.mrf.mxu0
      %v5204 = vadd.f32 %v5190, %v5203
      %5205 = vdwg.mxu0
      %5206 = vmatpush.bf16.msra.mxu0 %v4626
      %5207 = vmatpush.bf16.msra.mxu0 %v4622
      %5208 = vmatpush.bf16.msra.mxu0 %v4618
      %5209 = vmatpush.bf16.msra.mxu0 %v4614
      %5210 = vmatpush.bf16.msra.mxu0 %v4610
      %5211 = vmatpush.bf16.msra.mxu0 %v4606
      %5212 = vmatpush.bf16.msra.mxu0 %v4602
      %5213 = vmatpush.bf16.msra.mxu0 %v4598
      %5214 = vmatmul.bf16.gmra.mxu0 %v3337
      %v5215 = vpop.f32.mrf.mxu0
      %v5216 = vadd.f32 %v5202, %v5215
      %v5217 = vpop.f32.mrf.mxu0
      %v5218 = vadd.f32 %v5204, %v5217
      %5219 = vdwg.mxu0
      %5220 = vmatpush.bf16.msra.mxu0 %v4403
      %5221 = vmatpush.bf16.msra.mxu0 %v4399
      %5222 = vmatpush.bf16.msra.mxu0 %v4395
      %5223 = vmatpush.bf16.msra.mxu0 %v4391
      %5224 = vmatpush.bf16.msra.mxu0 %v4387
      %5225 = vmatpush.bf16.msra.mxu0 %v4383
      %5226 = vmatpush.bf16.msra.mxu0 %v4379
      %5227 = vmatpush.bf16.msra.mxu0 %v4375
      %5228 = vmatmul.bf16.gmra.mxu0 %v3330
      %v5229 = vpop.f32.mrf.mxu0
      %v5230 = vadd.f32 %v3599, %v5229
      %v5231 = vpop.f32.mrf.mxu0
      %v5232 = vadd.f32 %v3599, %v5231
      %5233 = vdwg.mxu0
      %5234 = vmatpush.bf16.msra.mxu0 %v4435
      %5235 = vmatpush.bf16.msra.mxu0 %v4431
      %5236 = vmatpush.bf16.msra.mxu0 %v4427
      %5237 = vmatpush.bf16.msra.mxu0 %v4423
      %5238 = vmatpush.bf16.msra.mxu0 %v4419
      %5239 = vmatpush.bf16.msra.mxu0 %v4415
      %5240 = vmatpush.bf16.msra.mxu0 %v4411
      %5241 = vmatpush.bf16.msra.mxu0 %v4407
      %5242 = vmatmul.bf16.gmra.mxu0 %v3331
      %v5243 = vpop.f32.mrf.mxu0
      %v5244 = vadd.f32 %v5230, %v5243
      %v5245 = vpop.f32.mrf.mxu0
      %v5246 = vadd.f32 %v5232, %v5245
      %5247 = vdwg.mxu0
      %5248 = vmatpush.bf16.msra.mxu0 %v4467
      %5249 = vmatpush.bf16.msra.mxu0 %v4463
      %5250 = vmatpush.bf16.msra.mxu0 %v4459
      %5251 = vmatpush.bf16.msra.mxu0 %v4455
      %5252 = vmatpush.bf16.msra.mxu0 %v4451
      %5253 = vmatpush.bf16.msra.mxu0 %v4447
      %5254 = vmatpush.bf16.msra.mxu0 %v4443
      %5255 = vmatpush.bf16.msra.mxu0 %v4439
      %5256 = vmatmul.bf16.gmra.mxu0 %v3332
      %v5257 = vpop.f32.mrf.mxu0
      %v5258 = vadd.f32 %v5244, %v5257
      %v5259 = vpop.f32.mrf.mxu0
      %v5260 = vadd.f32 %v5246, %v5259
      %5261 = vdwg.mxu0
      %5262 = vmatpush.bf16.msra.mxu0 %v4499
      %5263 = vmatpush.bf16.msra.mxu0 %v4495
      %5264 = vmatpush.bf16.msra.mxu0 %v4491
      %5265 = vmatpush.bf16.msra.mxu0 %v4487
      %5266 = vmatpush.bf16.msra.mxu0 %v4483
      %5267 = vmatpush.bf16.msra.mxu0 %v4479
      %5268 = vmatpush.bf16.msra.mxu0 %v4475
      %5269 = vmatpush.bf16.msra.mxu0 %v4471
      %5270 = vmatmul.bf16.gmra.mxu0 %v3333
      %v5271 = vpop.f32.mrf.mxu0
      %v5272 = vadd.f32 %v5258, %v5271
      %v5273 = vpop.f32.mrf.mxu0
      %v5274 = vadd.f32 %v5260, %v5273
      %5275 = vdwg.mxu0
      %5276 = vmatpush.bf16.msra.mxu0 %v4531
      %5277 = vmatpush.bf16.msra.mxu0 %v4527
      %5278 = vmatpush.bf16.msra.mxu0 %v4523
      %5279 = vmatpush.bf16.msra.mxu0 %v4519
      %5280 = vmatpush.bf16.msra.mxu0 %v4515
      %5281 = vmatpush.bf16.msra.mxu0 %v4511
      %5282 = vmatpush.bf16.msra.mxu0 %v4507
      %5283 = vmatpush.bf16.msra.mxu0 %v4503
      %5284 = vmatmul.bf16.gmra.mxu0 %v3334
      %v5285 = vpop.f32.mrf.mxu0
      %v5286 = vadd.f32 %v5272, %v5285
      %v5287 = vpop.f32.mrf.mxu0
      %v5288 = vadd.f32 %v5274, %v5287
      %5289 = vdwg.mxu0
      %5290 = vmatpush.bf16.msra.mxu0 %v4563
      %5291 = vmatpush.bf16.msra.mxu0 %v4559
      %5292 = vmatpush.bf16.msra.mxu0 %v4555
      %5293 = vmatpush.bf16.msra.mxu0 %v4551
      %5294 = vmatpush.bf16.msra.mxu0 %v4547
      %5295 = vmatpush.bf16.msra.mxu0 %v4543
      %5296 = vmatpush.bf16.msra.mxu0 %v4539
      %5297 = vmatpush.bf16.msra.mxu0 %v4535
      %5298 = vmatmul.bf16.gmra.mxu0 %v3335
      %v5299 = vpop.f32.mrf.mxu0
      %v5300 = vadd.f32 %v5286, %v5299
      %v5301 = vpop.f32.mrf.mxu0
      %v5302 = vadd.f32 %v5288, %v5301
      %5303 = vdwg.mxu0
      %5304 = vmatpush.bf16.msra.mxu0 %v4595
      %5305 = vmatpush.bf16.msra.mxu0 %v4591
      %5306 = vmatpush.bf16.msra.mxu0 %v4587
      %5307 = vmatpush.bf16.msra.mxu0 %v4583
      %5308 = vmatpush.bf16.msra.mxu0 %v4579
      %5309 = vmatpush.bf16.msra.mxu0 %v4575
      %5310 = vmatpush.bf16.msra.mxu0 %v4571
      %5311 = vmatpush.bf16.msra.mxu0 %v4567
      %5312 = vmatmul.bf16.gmra.mxu0 %v3336
      %v5313 = vpop.f32.mrf.mxu0
      %v5314 = vadd.f32 %v5300, %v5313
      %v5315 = vpop.f32.mrf.mxu0
      %v5316 = vadd.f32 %v5302, %v5315
      %5317 = vdwg.mxu0
      %5318 = vmatpush.bf16.msra.mxu0 %v4627
      %5319 = vmatpush.bf16.msra.mxu0 %v4623
      %5320 = vmatpush.bf16.msra.mxu0 %v4619
      %5321 = vmatpush.bf16.msra.mxu0 %v4615
      %5322 = vmatpush.bf16.msra.mxu0 %v4611
      %5323 = vmatpush.bf16.msra.mxu0 %v4607
      %5324 = vmatpush.bf16.msra.mxu0 %v4603
      %5325 = vmatpush.bf16.msra.mxu0 %v4599
      %5326 = vmatmul.bf16.gmra.mxu0 %v3337
      %v5327 = vpop.f32.mrf.mxu0
      %v5328 = vadd.f32 %v5314, %v5327
      %v5329 = vpop.f32.mrf.mxu0
      %v5330 = vadd.f32 %v5316, %v5329
      %5331 = vdwg.mxu0
      %v5332 = vmax.f32 %v4992, 0.0
      %v5333 = vmax.f32 %v5104, 0.0
      %v5334 = vmax.f32 %v5216, 0.0
      %v5335 = vmax.f32 %v5328, 0.0
      %v5336 = vmax.f32 %v4994, 0.0
      %v5337 = vmax.f32 %v5106, 0.0
      %v5338 = vmax.f32 %v5218, 0.0
      %v5339 = vmax.f32 %v5330, 0.0
      %v5340 = vpack.c.bf16 %v5336, %v5332
      %v5341 = vpack.c.bf16 %v5337, %v5333
      %v5342 = vpack.c.bf16 %v5338, %v5334
      %v5343 = vpack.c.bf16 %v5339, %v5335
      %v5344 = vld [vmem:[#allocation11] sm:$0xf]
      %v5345 = vld [vmem:[#allocation11 + $0x4] sm:$0xf]
      %v5346 = vld [vmem:[#allocation11 + $0x8] sm:$0xf]
      %v5347 = vld [vmem:[#allocation11 + $0xc] sm:$0xf]
      %v5348 = vld [vmem:[#allocation11 + $0x10] sm:$0xf]
      %v5349 = vld [vmem:[#allocation11 + $0x14] sm:$0xf]
      %v5350 = vld [vmem:[#allocation11 + $0x18] sm:$0xf]
      %v5351 = vld [vmem:[#allocation11 + $0x1c] sm:$0xf]
      %v5352 = vld [vmem:[#allocation11 + $0x20] sm:$0xf]
      %v5353 = vld [vmem:[#allocation11 + $0x24] sm:$0xf]
      %v5354 = vld [vmem:[#allocation11 + $0x28] sm:$0xf]
      %v5355 = vld [vmem:[#allocation11 + $0x2c] sm:$0xf]
      %v5356 = vld [vmem:[#allocation11 + $0x30] sm:$0xf]
      %v5357 = vld [vmem:[#allocation11 + $0x34] sm:$0xf]
      %v5358 = vld [vmem:[#allocation11 + $0x38] sm:$0xf]
      %v5359 = vld [vmem:[#allocation11 + $0x3c] sm:$0xf]
      %v5360 = vld [vmem:[#allocation11 + $0x40] sm:$0xf]
      %v5361 = vld [vmem:[#allocation11 + $0x44] sm:$0xf]
      %v5362 = vld [vmem:[#allocation11 + $0x48] sm:$0xf]
      %v5363 = vld [vmem:[#allocation11 + $0x4c] sm:$0xf]
      %v5364 = vld [vmem:[#allocation11 + $0x50] sm:$0xf]
      %v5365 = vld [vmem:[#allocation11 + $0x54] sm:$0xf]
      %v5366 = vld [vmem:[#allocation11 + $0x58] sm:$0xf]
      %v5367 = vld [vmem:[#allocation11 + $0x5c] sm:$0xf]
      %v5368 = vld [vmem:[#allocation11 + $0x60] sm:$0xf]
      %v5369 = vld [vmem:[#allocation11 + $0x64] sm:$0xf]
      %v5370 = vld [vmem:[#allocation11 + $0x68] sm:$0xf]
      %v5371 = vld [vmem:[#allocation11 + $0x6c] sm:$0xf]
      %v5372 = vld [vmem:[#allocation11 + $0x70] sm:$0xf]
      %v5373 = vld [vmem:[#allocation11 + $0x74] sm:$0xf]
      %v5374 = vld [vmem:[#allocation11 + $0x78] sm:$0xf]
      %v5375 = vld [vmem:[#allocation11 + $0x7c] sm:$0xf]
      %v5376 = vld [vmem:[#allocation11 + $0x80] sm:$0xf]
      %v5377 = vld [vmem:[#allocation11 + $0x84] sm:$0xf]
      %v5378 = vld [vmem:[#allocation11 + $0x88] sm:$0xf]
      %v5379 = vld [vmem:[#allocation11 + $0x8c] sm:$0xf]
      %v5380 = vld [vmem:[#allocation11 + $0x90] sm:$0xf]
      %v5381 = vld [vmem:[#allocation11 + $0x94] sm:$0xf]
      %v5382 = vld [vmem:[#allocation11 + $0x98] sm:$0xf]
      %v5383 = vld [vmem:[#allocation11 + $0x9c] sm:$0xf]
      %v5384 = vld [vmem:[#allocation11 + $0xa0] sm:$0xf]
      %v5385 = vld [vmem:[#allocation11 + $0xa4] sm:$0xf]
      %v5386 = vld [vmem:[#allocation11 + $0xa8] sm:$0xf]
      %v5387 = vld [vmem:[#allocation11 + $0xac] sm:$0xf]
      %v5388 = vld [vmem:[#allocation11 + $0xb0] sm:$0xf]
      %v5389 = vld [vmem:[#allocation11 + $0xb4] sm:$0xf]
      %v5390 = vld [vmem:[#allocation11 + $0xb8] sm:$0xf]
      %v5391 = vld [vmem:[#allocation11 + $0xbc] sm:$0xf]
      %v5392 = vld [vmem:[#allocation11 + $0xc0] sm:$0xf]
      %v5393 = vld [vmem:[#allocation11 + $0xc4] sm:$0xf]
      %v5394 = vld [vmem:[#allocation11 + $0xc8] sm:$0xf]
      %v5395 = vld [vmem:[#allocation11 + $0xcc] sm:$0xf]
      %v5396 = vld [vmem:[#allocation11 + $0xd0] sm:$0xf]
      %v5397 = vld [vmem:[#allocation11 + $0xd4] sm:$0xf]
      %v5398 = vld [vmem:[#allocation11 + $0xd8] sm:$0xf]
      %v5399 = vld [vmem:[#allocation11 + $0xdc] sm:$0xf]
      %v5400 = vld [vmem:[#allocation11 + $0xe0] sm:$0xf]
      %v5401 = vld [vmem:[#allocation11 + $0xe4] sm:$0xf]
      %v5402 = vld [vmem:[#allocation11 + $0xe8] sm:$0xf]
      %v5403 = vld [vmem:[#allocation11 + $0xec] sm:$0xf]
      %v5404 = vld [vmem:[#allocation11 + $0xf0] sm:$0xf]
      %v5405 = vld [vmem:[#allocation11 + $0xf4] sm:$0xf]
      %v5406 = vld [vmem:[#allocation11 + $0xf8] sm:$0xf]
      %v5407 = vld [vmem:[#allocation11 + $0xfc] sm:$0xf]
      %v5408 = vld [vmem:[#allocation13] sm:$0x1]
      %v5410 = vperm.slane %v5408, 0
      %v5476 = vunpack.c.l.b16 %v5344
      %v5477 = vunpack.c.l.b16 %v5345
      %v5478 = vunpack.c.l.b16 %v5346
      %v5479 = vunpack.c.l.b16 %v5347
      %v5480 = vunpack.c.l.b16 %v5348
      %v5481 = vunpack.c.l.b16 %v5349
      %v5482 = vunpack.c.l.b16 %v5350
      %v5483 = vunpack.c.l.b16 %v5351
      %v5484 = vunpack.c.l.b16 %v5352
      %v5485 = vunpack.c.l.b16 %v5353
      %v5486 = vunpack.c.l.b16 %v5354
      %v5487 = vunpack.c.l.b16 %v5355
      %v5488 = vunpack.c.l.b16 %v5356
      %v5489 = vunpack.c.l.b16 %v5357
      %v5490 = vunpack.c.l.b16 %v5358
      %v5491 = vunpack.c.l.b16 %v5359
      %v5492 = vunpack.c.l.b16 %v5360
      %v5493 = vunpack.c.l.b16 %v5361
      %v5494 = vunpack.c.l.b16 %v5362
      %v5495 = vunpack.c.l.b16 %v5363
      %v5496 = vunpack.c.l.b16 %v5364
      %v5497 = vunpack.c.l.b16 %v5365
      %v5498 = vunpack.c.l.b16 %v5366
      %v5499 = vunpack.c.l.b16 %v5367
      %v5500 = vunpack.c.l.b16 %v5368
      %v5501 = vunpack.c.l.b16 %v5369
      %v5502 = vunpack.c.l.b16 %v5370
      %v5503 = vunpack.c.l.b16 %v5371
      %v5504 = vunpack.c.l.b16 %v5372
      %v5505 = vunpack.c.l.b16 %v5373
      %v5506 = vunpack.c.l.b16 %v5374
      %v5507 = vunpack.c.l.b16 %v5375
      %v5508 = vunpack.c.l.b16 %v5376
      %v5509 = vunpack.c.l.b16 %v5377
      %v5510 = vunpack.c.l.b16 %v5378
      %v5511 = vunpack.c.l.b16 %v5379
      %v5512 = vunpack.c.l.b16 %v5380
      %v5513 = vunpack.c.l.b16 %v5381
      %v5514 = vunpack.c.l.b16 %v5382
      %v5515 = vunpack.c.l.b16 %v5383
      %v5516 = vunpack.c.l.b16 %v5384
      %v5517 = vunpack.c.l.b16 %v5385
      %v5518 = vunpack.c.l.b16 %v5386
      %v5519 = vunpack.c.l.b16 %v5387
      %v5520 = vunpack.c.l.b16 %v5388
      %v5521 = vunpack.c.l.b16 %v5389
      %v5522 = vunpack.c.l.b16 %v5390
      %v5523 = vunpack.c.l.b16 %v5391
      %v5524 = vunpack.c.l.b16 %v5392
      %v5525 = vunpack.c.l.b16 %v5393
      %v5526 = vunpack.c.l.b16 %v5394
      %v5527 = vunpack.c.l.b16 %v5395
      %v5528 = vunpack.c.l.b16 %v5396
      %v5529 = vunpack.c.l.b16 %v5397
      %v5530 = vunpack.c.l.b16 %v5398
      %v5531 = vunpack.c.l.b16 %v5399
      %v5532 = vunpack.c.l.b16 %v5400
      %v5533 = vunpack.c.l.b16 %v5401
      %v5534 = vunpack.c.l.b16 %v5402
      %v5535 = vunpack.c.l.b16 %v5403
      %v5536 = vunpack.c.l.b16 %v5404
      %v5537 = vunpack.c.l.b16 %v5405
      %v5538 = vunpack.c.l.b16 %v5406
      %v5539 = vunpack.c.l.b16 %v5407
      %v5540 = vpack.c.b16 %v5477, %v5476
      %v5541 = vpack.c.b16 %v5479, %v5478
      %v5542 = vpack.c.b16 %v5481, %v5480
      %v5543 = vpack.c.b16 %v5483, %v5482
      %v5544 = vpack.c.b16 %v5485, %v5484
      %v5545 = vpack.c.b16 %v5487, %v5486
      %v5546 = vpack.c.b16 %v5489, %v5488
      %v5547 = vpack.c.b16 %v5491, %v5490
      %v5548 = vpack.c.b16 %v5493, %v5492
      %v5549 = vpack.c.b16 %v5495, %v5494
      %v5550 = vpack.c.b16 %v5497, %v5496
      %v5551 = vpack.c.b16 %v5499, %v5498
      %v5552 = vpack.c.b16 %v5501, %v5500
      %v5553 = vpack.c.b16 %v5503, %v5502
      %v5554 = vpack.c.b16 %v5505, %v5504
      %v5555 = vpack.c.b16 %v5507, %v5506
      %v5556 = vpack.c.b16 %v5509, %v5508
      %v5557 = vpack.c.b16 %v5511, %v5510
      %v5558 = vpack.c.b16 %v5513, %v5512
      %v5559 = vpack.c.b16 %v5515, %v5514
      %v5560 = vpack.c.b16 %v5517, %v5516
      %v5561 = vpack.c.b16 %v5519, %v5518
      %v5562 = vpack.c.b16 %v5521, %v5520
      %v5563 = vpack.c.b16 %v5523, %v5522
      %v5564 = vpack.c.b16 %v5525, %v5524
      %v5565 = vpack.c.b16 %v5527, %v5526
      %v5566 = vpack.c.b16 %v5529, %v5528
      %v5567 = vpack.c.b16 %v5531, %v5530
      %v5568 = vpack.c.b16 %v5533, %v5532
      %v5569 = vpack.c.b16 %v5535, %v5534
      %v5570 = vpack.c.b16 %v5537, %v5536
      %v5571 = vpack.c.b16 %v5539, %v5538
      %5604 = vmatpush.bf16.msra.mxu0 %v5547
      %5605 = vmatpush.bf16.msra.mxu0 %v5546
      %5606 = vmatpush.bf16.msra.mxu0 %v5545
      %5607 = vmatpush.bf16.msra.mxu0 %v5544
      %5608 = vmatpush.bf16.msra.mxu0 %v5543
      %5609 = vmatpush.bf16.msra.mxu0 %v5542
      %5610 = vmatpush.bf16.msra.mxu0 %v5541
      %5611 = vmatpush.bf16.msra.mxu0 %v5540
      %5612 = vmatmul.bf16.gmra.mxu0 %v5340
      %v5613 = vpop.f32.mrf.mxu0
      %v5614 = vadd.f32 %v5410, %v5613
      %v5615 = vpop.f32.mrf.mxu0
      %v5616 = vadd.f32 %v5410, %v5615
      %5617 = vdwg.mxu0
      %5618 = vmatpush.bf16.msra.mxu0 %v5555
      %5619 = vmatpush.bf16.msra.mxu0 %v5554
      %5620 = vmatpush.bf16.msra.mxu0 %v5553
      %5621 = vmatpush.bf16.msra.mxu0 %v5552
      %5622 = vmatpush.bf16.msra.mxu0 %v5551
      %5623 = vmatpush.bf16.msra.mxu0 %v5550
      %5624 = vmatpush.bf16.msra.mxu0 %v5549
      %5625 = vmatpush.bf16.msra.mxu0 %v5548
      %5626 = vmatmul.bf16.gmra.mxu0 %v5341
      %v5627 = vpop.f32.mrf.mxu0
      %v5628 = vadd.f32 %v5614, %v5627
      %v5629 = vpop.f32.mrf.mxu0
      %v5630 = vadd.f32 %v5616, %v5629
      %5631 = vdwg.mxu0
      %5632 = vmatpush.bf16.msra.mxu0 %v5563
      %5633 = vmatpush.bf16.msra.mxu0 %v5562
      %5634 = vmatpush.bf16.msra.mxu0 %v5561
      %5635 = vmatpush.bf16.msra.mxu0 %v5560
      %5636 = vmatpush.bf16.msra.mxu0 %v5559
      %5637 = vmatpush.bf16.msra.mxu0 %v5558
      %5638 = vmatpush.bf16.msra.mxu0 %v5557
      %5639 = vmatpush.bf16.msra.mxu0 %v5556
      %5640 = vmatmul.bf16.gmra.mxu0 %v5342
      %v5641 = vpop.f32.mrf.mxu0
      %v5642 = vadd.f32 %v5628, %v5641
      %v5643 = vpop.f32.mrf.mxu0
      %v5644 = vadd.f32 %v5630, %v5643
      %5645 = vdwg.mxu0
      %5646 = vmatpush.bf16.msra.mxu0 %v5571
      %5647 = vmatpush.bf16.msra.mxu0 %v5570
      %5648 = vmatpush.bf16.msra.mxu0 %v5569
      %5649 = vmatpush.bf16.msra.mxu0 %v5568
      %5650 = vmatpush.bf16.msra.mxu0 %v5567
      %5651 = vmatpush.bf16.msra.mxu0 %v5566
      %5652 = vmatpush.bf16.msra.mxu0 %v5565
      %5653 = vmatpush.bf16.msra.mxu0 %v5564
      %5654 = vmatmul.bf16.gmra.mxu0 %v5343
      %v5655 = vpop.f32.mrf.mxu0
      %v5656 = vadd.f32 %v5642, %v5655
      %v5657 = vpop.f32.mrf.mxu0
      %v5658 = vadd.f32 %v5644, %v5657
      %5659 = vdwg.mxu0
      %v5660 = vmax.f32 %v5656, 0.0
      %v5661 = vmax.f32 %v5658, 0.0
      %v5662 = vpack.c.bf16 %v5661, %v5660
      %v5663 = vld [vmem:[#allocation14] sm:$0xf]
      %v5664 = vld [vmem:[#allocation14 + $0x4] sm:$0xf]
      %v5665 = vld [vmem:[#allocation14 + $0x8] sm:$0xf]
      %v5666 = vld [vmem:[#allocation14 + $0xc] sm:$0xf]
      %v5667 = vld [vmem:[#allocation14 + $0x10] sm:$0xf]
      %v5668 = vld [vmem:[#allocation14 + $0x14] sm:$0xf]
      %v5669 = vld [vmem:[#allocation14 + $0x18] sm:$0xf]
      %v5670 = vld [vmem:[#allocation14 + $0x1c] sm:$0xf]
      %v5671 = vld [vmem:[#allocation14 + $0x20] sm:$0xf]
      %v5672 = vld [vmem:[#allocation14 + $0x24] sm:$0xf]
      %v5673 = vld [vmem:[#allocation14 + $0x28] sm:$0xf]
      %v5674 = vld [vmem:[#allocation14 + $0x2c] sm:$0xf]
      %v5675 = vld [vmem:[#allocation14 + $0x30] sm:$0xf]
      %v5676 = vld [vmem:[#allocation14 + $0x34] sm:$0xf]
      %v5677 = vld [vmem:[#allocation14 + $0x38] sm:$0xf]
      %v5678 = vld [vmem:[#allocation14 + $0x3c] sm:$0xf]
      %v5679 = vld [vmem:[#allocation16] sm:$0x1]
      %v5681 = vperm.slane %v5679, 0
      %v5699 = vunpack.c.l.b16 %v5663
      %v5700 = vunpack.c.l.b16 %v5664
      %v5701 = vunpack.c.l.b16 %v5665
      %v5702 = vunpack.c.l.b16 %v5666
      %v5703 = vunpack.c.l.b16 %v5667
      %v5704 = vunpack.c.l.b16 %v5668
      %v5705 = vunpack.c.l.b16 %v5669
      %v5706 = vunpack.c.l.b16 %v5670
      %v5707 = vunpack.c.l.b16 %v5671
      %v5708 = vunpack.c.l.b16 %v5672
      %v5709 = vunpack.c.l.b16 %v5673
      %v5710 = vunpack.c.l.b16 %v5674
      %v5711 = vunpack.c.l.b16 %v5675
      %v5712 = vunpack.c.l.b16 %v5676
      %v5713 = vunpack.c.l.b16 %v5677
      %v5714 = vunpack.c.l.b16 %v5678
      %v5715 = vpack.c.b16 %v5700, %v5699
      %v5716 = vpack.c.b16 %v5702, %v5701
      %v5717 = vpack.c.b16 %v5704, %v5703
      %v5718 = vpack.c.b16 %v5706, %v5705
      %v5719 = vpack.c.b16 %v5708, %v5707
      %v5720 = vpack.c.b16 %v5710, %v5709
      %v5721 = vpack.c.b16 %v5712, %v5711
      %v5722 = vpack.c.b16 %v5714, %v5713
      %5731 = vmatpush.bf16.msra.mxu0 %v5722
      %5732 = vmatpush.bf16.msra.mxu0 %v5721
      %5733 = vmatpush.bf16.msra.mxu0 %v5720
      %5734 = vmatpush.bf16.msra.mxu0 %v5719
      %5735 = vmatpush.bf16.msra.mxu0 %v5718
      %5736 = vmatpush.bf16.msra.mxu0 %v5717
      %5737 = vmatpush.bf16.msra.mxu0 %v5716
      %5738 = vmatpush.bf16.msra.mxu0 %v5715
      %5739 = vmatmul.bf16.gmra.mxu0 %v5662
      %v5740 = vpop.f32.mrf.mxu0
      %v5741 = vadd.f32 %v5681, %v5740
      %v5742 = vpop.f32.mrf.mxu0
      %v5743 = vadd.f32 %v5681, %v5742
      %5744 = vdwg.mxu0
      %5745 = vst [vmem:[%s10] sm:$0xff] %v5741
      %5746 = vst [vmem:[%s10 + $0x8] sm:$0xff] %v5743
    $region85: #{fcnn_forward.1} parent=1 // pred_fallthru
      _
    // Predicated region
    $region86: #{fcnn_forward.1} parent=1 // pred_check
      _
    $region87: #{fcnn_forward.1} parent=1 // pred_check_branch
      %5748 = sbr.rel (0) target = $region89
    $region88: #{fcnn_forward.1} parent=1 // pred_region
      _
    $region89: #{fcnn_forward.1} parent=1 // pred_fallthru
      _
    // Predicated region
    $region90: #{fcnn_forward.1} parent=1 // pred_check
      _
    $region91: #{fcnn_forward.1} parent=1 // pred_check_branch
      %5750 = sbr.rel (0) target = $region93
    $region92: #{fcnn_forward.1} parent=1 // pred_region
      _
    $region93: #{fcnn_forward.1} parent=1 // pred_fallthru
      _
    %5751 = vsyncpa [#allocation4], 1
    %5752 = vsyncpa [#allocation6], 1
    %5753 = vsyncpa [#allocation9], 1
    %5754 = vsyncpa [#allocation12], 1
    %5755 = vsyncpa [#allocation15], 1

</llo_original>
